<compile_context>
chip_gen: v5e
topology: v5e:2x2
jax: 0.10.0
libtpu: 0.0.40
codegen_flags: <defaults>
</compile_context>

<pallas_src>
import functools

import jax
import jax.numpy as jnp
from jax.experimental import pallas as pl
from jax.experimental.pallas import tpu as pltpu

HIDDEN = 100          # real hidden size (PyTorch module)
HP = 128              # lane-padded hidden size
NUM_LAYERS = 2


# --------------------------------- kernel ---------------------------------------
def _gru_kernel(x_ref,                      # (T*B, D)      time-major, flattened
                wih0_ref,                   # (D, 3*HP)
                whh0_ref,                   # (HP, 3*HP)
                b0_ref,                     # (1, 3*HP)     b_ih0 + b_hh0 (r,z); b_ih0 (n)
                bhh0n_ref,                  # (1, HP)       b_hh0 (n gate)
                w1big_ref,                  # (2*HP, 3*HP)  [[W_ih1],[W_hh1 r,z | 0]]
                whh1n_ref,                  # (HP, HP)      W_hh1 (n gate)
                b1_ref,                     # (1, 3*HP)     b_ih1 + b_hh1 (r,z); b_ih1 (n)
                bhh1n_ref,                  # (1, HP)       b_hh1 (n gate)
                wfc_ref,                    # (1, HP)
                bfc_ref,                    # (1, 1)
                out_ref,                    # (B, 1)
                gi0_s,                      # VMEM scratch (T*B, 3*HP)
                *, T, B):
    # Prologue: layer-0 input projection for ALL timesteps (single big matmul).
    gi0_s[...] = (jnp.dot(x_ref[...], wih0_ref[...],
                          preferred_element_type=jnp.float32) + b0_ref[...])

    # Hoist small bias rows out of the loop (JAX does not CSE broadcasts).
    bhh0n = bhh0n_ref[...]
    b1 = b1_ref[...]
    bhh1n = bhh1n_ref[...]

    def step(t, carry):
        h0, h1 = carry
        off = pl.multiple_of(t * B, B)
        gi0 = gi0_s[pl.ds(off, B), :]                                    # (B, 3*HP)

        # ---- layer 0: only the hidden projection is on the serial path ----
        gh0 = jnp.dot(h0, whh0_ref[...], preferred_element_type=jnp.float32)
        r0 = jax.nn.sigmoid(gi0[:, 0 * HP:1 * HP] + gh0[:, 0 * HP:1 * HP])
        z0 = jax.nn.sigmoid(gi0[:, 1 * HP:2 * HP] + gh0[:, 1 * HP:2 * HP])
        n0 = jnp.tanh(gi0[:, 2 * HP:3 * HP] + r0 * (gh0[:, 2 * HP:3 * HP] + bhh0n))
        h0n = (1.0 - z0) * n0 + z0 * h0

        # ---- layer 1: fused K=2*HP contraction (r,z need gi+gh; n needs gh apart)
        xin = jnp.concatenate([h0n, h1], axis=1)                         # (B, 2*HP)
        g1 = jnp.dot(xin, w1big_ref[...], preferred_element_type=jnp.float32) + b1
        gh1n = jnp.dot(h1, whh1n_ref[...], preferred_element_type=jnp.float32)
        r1 = jax.nn.sigmoid(g1[:, 0 * HP:1 * HP])
        z1 = jax.nn.sigmoid(g1[:, 1 * HP:2 * HP])
        n1 = jnp.tanh(g1[:, 2 * HP:3 * HP] + r1 * (gh1n + bhh1n))
        h1n = (1.0 - z1) * n1 + z1 * h1
        return h0n, h1n

    h0 = jnp.zeros((B, HP), jnp.float32)
    h1 = jnp.zeros((B, HP), jnp.float32)
    h0, h1 = jax.lax.fori_loop(0, T, step, (h0, h1), unroll=(T <= 32))

    # Final Linear(HIDDEN, 1): VPU multiply + lane reduction (no N=1 MXU pass).
    out_ref[...] = (jnp.sum(h1 * wfc_ref[...], axis=-1, keepdims=True)
                    + bfc_ref[...])


# ------------------------------ parameter packing --------------------------------
def _pad_gate_cols(w_t, h=HIDDEN, hp=HP):
    """(in, 3h) -> (in, 3hp): per-gate zero-pad along columns (gate order r,z,n)."""
    parts = [jnp.pad(w_t[:, g * h:(g + 1) * h], ((0, 0), (0, hp - h)))
             for g in range(3)]
    return jnp.concatenate(parts, axis=1)


def _pad_gate_vec(b, h=HIDDEN, hp=HP):
    """(3h,) -> (3hp,): per-gate zero-pad."""
    parts = [jnp.pad(b[g * h:(g + 1) * h], (0, hp - h)) for g in range(3)]
    return jnp.concatenate(parts, axis=0)


@jax.jit
def gru_regression_forward(x, params):
    """x: (B, T, D) float32  ->  (B, 1) float32. `params` = PyTorch-layout weights."""
    B, T, D = x.shape
    Bp = ((B + 7) // 8) * 8                       # sublane-aligned batch

    # ---- layer 0 ----
    wih0 = _pad_gate_cols(params["weight_ih_l0"].T)                       # (D, 3HP)
    whh0 = jnp.pad(_pad_gate_cols(params["weight_hh_l0"].T),
                   ((0, HP - HIDDEN), (0, 0)))                            # (HP, 3HP)
    bih0p = _pad_gate_vec(params["bias_ih_l0"])
    bhh0p = _pad_gate_vec(params["bias_hh_l0"])
    b0 = (bih0p + bhh0p.at[2 * HP:].set(0.0))[None, :]                    # (1, 3HP)
    bhh0n = bhh0p[2 * HP:][None, :]                                       # (1, HP)

    # ---- layer 1 (fused weights) ----
    wih1 = jnp.pad(_pad_gate_cols(params["weight_ih_l1"].T),
                   ((0, HP - HIDDEN), (0, 0)))                            # (HP, 3HP)
    whh1 = jnp.pad(_pad_gate_cols(params["weight_hh_l1"].T),
                   ((0, HP - HIDDEN), (0, 0)))                            # (HP, 3HP)
    w1big = jnp.concatenate([wih1, whh1.at[:, 2 * HP:].set(0.0)], axis=0) # (2HP, 3HP)
    whh1n = whh1[:, 2 * HP:]                                              # (HP, HP)
    bih1p = _pad_gate_vec(params["bias_ih_l1"])
    bhh1p = _pad_gate_vec(params["bias_hh_l1"])
    b1 = (bih1p + bhh1p.at[2 * HP:].set(0.0))[None, :]                    # (1, 3HP)
    bhh1n = bhh1p[2 * HP:][None, :]                                       # (1, HP)

    # ---- fc ----
    wfc = jnp.pad(params["fc_weight"], ((0, 0), (0, HP - HIDDEN)))        # (1, HP)
    bfc = params["fc_bias"][None, :]                                      # (1, 1)

    # ---- input: batch_first -> time-major flattened (T*Bp, D) ----
    x_p = x if Bp == B else jnp.pad(x, ((0, Bp - B), (0, 0), (0, 0)))
    x_tm = jnp.transpose(x_p, (1, 0, 2)).reshape(T * Bp, D)

    vmem = pl.BlockSpec(memory_space=pltpu.MemorySpace.VMEM)
    out = pl.pallas_call(
        functools.partial(_gru_kernel, T=T, B=Bp),
        out_shape=jax.ShapeDtypeStruct((Bp, 1), jnp.float32),
        in_specs=[vmem] * 11,
        out_specs=vmem,
        scratch_shapes=[pltpu.VMEM((T * Bp, 3 * HP), jnp.float32)],
    )(x_tm, wih0, whh0, b0, bhh0n, w1big, whh1n, b1, bhh1n, wfc, bfc)
    return out[:B]


# ---------------------------- pure-JAX reference --------------------------------
def gru_regression_reference(x, p):
    B, T, D = x.shape
    H = HIDDEN

    def cell(x_t, h, wih, whh, bih, bhh):
        gi = x_t @ wih.T + bih
        gh = h @ whh.T + bhh
        r = jax.nn.sigmoid(gi[:, :H] + gh[:, :H])
        z = jax.nn.sigmoid(gi[:, H:2 * H] + gh[:, H:2 * H])
        n = jnp.tanh(gi[:, 2 * H:] + r * gh[:, 2 * H:])
        return (1.0 - z) * n + z * h

    h0 = jnp.zeros((B, H), jnp.float32)
    h1 = jnp.zeros((B, H), jnp.float32)
    for t in range(T):
        h0 = cell(x[:, t], h0, p["weight_ih_l0"], p["weight_hh_l0"],
                  p["bias_ih_l0"], p["bias_hh_l0"])
        h1 = cell(h0, h1, p["weight_ih_l1"], p["weight_hh_l1"],
                  p["bias_ih_l1"], p["bias_hh_l1"])
    return h1 @ p["fc_weight"].T + p["fc_bias"]


def init_params(key, input_size):
    """Deterministic PyTorch-style init: U(-1/sqrt(H), 1/sqrt(H))."""
    k = 1.0 / jnp.sqrt(jnp.float32(HIDDEN))
    names_shapes = [
        ("weight_ih_l0", (3 * HIDDEN, input_size)),
        ("weight_hh_l0", (3 * HIDDEN, HIDDEN)),
        ("bias_ih_l0", (3 * HIDDEN,)),
        ("bias_hh_l0", (3 * HIDDEN,)),
        ("weight_ih_l1", (3 * HIDDEN, HIDDEN)),
        ("weight_hh_l1", (3 * HIDDEN, HIDDEN)),
        ("bias_ih_l1", (3 * HIDDEN,)),
        ("bias_hh_l1", (3 * HIDDEN,)),
        ("fc_weight", (1, HIDDEN)),
        ("fc_bias", (1,)),
    ]
    keys = jax.random.split(key, len(names_shapes))
    return {n: jax.random.uniform(kk, s, jnp.float32, -k, k)
            for kk, (n, s) in zip(keys, names_shapes)}


if __name__ == "__main__":
    B, T, D = 8, 8, 16
    key = jax.random.PRNGKey(0)
    kx, kp = jax.random.split(key)
    x = jax.random.normal(kx, (B, T, D), jnp.float32)
    params = init_params(kp, D)

    out = gru_regression_forward(x, params)
    out = jax.block_until_ready(out)

    ref = gru_regression_reference(x, params)
    assert out.shape == (B, 1)
    assert jnp.allclose(out, ref, rtol=1e-5, atol=1e-5), (
        f"max abs err {jnp.max(jnp.abs(out - ref))}")

    print("KERNEL_OK")
</pallas_src>

<mosaic_0001>
module attributes {stable_mosaic.version = 11 : i64} {
  func.func @_gru_kernel(%arg0: memref<64x16xf32, #tpu.memory_space<vmem>>, %arg1: memref<16x384xf32, #tpu.memory_space<vmem>>, %arg2: memref<128x384xf32, #tpu.memory_space<vmem>>, %arg3: memref<1x384xf32, #tpu.memory_space<vmem>>, %arg4: memref<1x128xf32, #tpu.memory_space<vmem>>, %arg5: memref<256x384xf32, #tpu.memory_space<vmem>>, %arg6: memref<128x128xf32, #tpu.memory_space<vmem>>, %arg7: memref<1x384xf32, #tpu.memory_space<vmem>>, %arg8: memref<1x128xf32, #tpu.memory_space<vmem>>, %arg9: memref<1x128xf32, #tpu.memory_space<vmem>>, %arg10: memref<1x1xf32, #tpu.memory_space<vmem>>, %arg11: memref<8x1xf32, #tpu.memory_space<vmem>>, %arg12: memref<64x384xf32, #tpu.memory_space<vmem>>) attributes {dimension_semantics = [], scalar_prefetch = 0 : i64, scratch_operands = 1 : i64, tpu.core_type = #tpu.core_type<tc>} {
    %c0 = arith.constant 0 : index
    %c0_0 = arith.constant 0 : index
    %0 = vector.load %arg0[%c0, %c0_0] : memref<64x16xf32, #tpu.memory_space<vmem>>, vector<64x16xf32>
    %c0_1 = arith.constant 0 : index
    %c0_2 = arith.constant 0 : index
    %1 = vector.load %arg1[%c0_1, %c0_2] : memref<16x384xf32, #tpu.memory_space<vmem>>, vector<16x384xf32>
    %cst = arith.constant dense<0.000000e+00> : vector<64x384xf32>
    %2 = tpu.matmul %0, %1, %cst {dimension_numbers = #tpu.dot_dimension_numbers<[1], [0], [0], [1], [0, 0, 1, 1], [], []>} : vector<64x16xf32>, vector<16x384xf32>, vector<64x384xf32> -> vector<64x384xf32>
    %c0_3 = arith.constant 0 : index
    %c0_4 = arith.constant 0 : index
    %3 = vector.load %arg3[%c0_3, %c0_4] : memref<1x384xf32, #tpu.memory_space<vmem>>, vector<1x384xf32>
    %4 = vector.broadcast %3 : vector<1x384xf32> to vector<64x384xf32>
    %5 = arith.addf %2, %4 : vector<64x384xf32>
    %c0_5 = arith.constant 0 : index
    %c0_6 = arith.constant 0 : index
    %6 = vector.load %arg12[%c0_5, %c0_6] : memref<64x384xf32, #tpu.memory_space<vmem>>, vector<64x384xf32>
    tpu.vector_store %arg12[%c0_5, %c0_6], %5 {strides = array<i32>} : memref<64x384xf32, #tpu.memory_space<vmem>>, vector<64x384xf32>,
    %c0_7 = arith.constant 0 : index
    %c0_8 = arith.constant 0 : index
    %7 = vector.load %arg4[%c0_7, %c0_8] : memref<1x128xf32, #tpu.memory_space<vmem>>, vector<1x128xf32>
    %c0_9 = arith.constant 0 : index
    %c0_10 = arith.constant 0 : index
    %8 = vector.load %arg7[%c0_9, %c0_10] : memref<1x384xf32, #tpu.memory_space<vmem>>, vector<1x384xf32>
    %c0_11 = arith.constant 0 : index
    %c0_12 = arith.constant 0 : index
    %9 = vector.load %arg8[%c0_11, %c0_12] : memref<1x128xf32, #tpu.memory_space<vmem>>, vector<1x128xf32>
    %cst_13 = arith.constant 0.000000e+00 : f32
    %10 = vector.broadcast %cst_13 : f32 to vector<8x128xf32>
    %cst_14 = arith.constant 0.000000e+00 : f32
    %11 = vector.broadcast %cst_14 : f32 to vector<8x128xf32>
    %c0_i32 = arith.constant 0 : i32
    %c8_i32 = arith.constant 8 : i32
    %12 = arith.muli %c0_i32, %c8_i32 : i32
    %13 = tpu.assume_multiple %12, 8 : i32
    %14 = arith.index_cast %13 : i32 to index
    %c0_15 = arith.constant 0 : index
    %15 = vector.load %arg12[%14, %c0_15] : memref<64x384xf32, #tpu.memory_space<vmem>>, vector<8x384xf32>
    %c0_16 = arith.constant 0 : index
    %c0_17 = arith.constant 0 : index
    %16 = vector.load %arg2[%c0_16, %c0_17] : memref<128x384xf32, #tpu.memory_space<vmem>>, vector<128x384xf32>
    %cst_18 = arith.constant dense<0.000000e+00> : vector<8x384xf32>
    %17 = tpu.matmul %10, %16, %cst_18 {dimension_numbers = #tpu.dot_dimension_numbers<[1], [0], [0], [1], [0, 0, 1, 1], [], []>} : vector<8x128xf32>, vector<128x384xf32>, vector<8x384xf32> -> vector<8x384xf32>
    %18 = vector.extract_strided_slice %15 {offsets = [0, 0], sizes = [8, 128], strides = [1, 1]} : vector<8x384xf32> to vector<8x128xf32>
    %19 = vector.extract_strided_slice %17 {offsets = [0, 0], sizes = [8, 128], strides = [1, 1]} : vector<8x384xf32> to vector<8x128xf32>
    %20 = arith.addf %18, %19 : vector<8x128xf32>
    %21 = arith.negf %20 : vector<8x128xf32>
    %22 = math.exp %21 : vector<8x128xf32>
    %cst_19 = arith.constant 1.000000e+00 : f32
    %23 = vector.broadcast %cst_19 : f32 to vector<8x128xf32>
    %24 = arith.addf %23, %22 : vector<8x128xf32>
    %25 = arith.divf %23, %24 : vector<8x128xf32>
    %26 = vector.extract_strided_slice %15 {offsets = [0, 128], sizes = [8, 128], strides = [1, 1]} : vector<8x384xf32> to vector<8x128xf32>
    %27 = vector.extract_strided_slice %17 {offsets = [0, 128], sizes = [8, 128], strides = [1, 1]} : vector<8x384xf32> to vector<8x128xf32>
    %28 = arith.addf %26, %27 : vector<8x128xf32>
    %29 = arith.negf %28 : vector<8x128xf32>
    %30 = math.exp %29 : vector<8x128xf32>
    %cst_20 = arith.constant 1.000000e+00 : f32
    %31 = vector.broadcast %cst_20 : f32 to vector<8x128xf32>
    %32 = arith.addf %31, %30 : vector<8x128xf32>
    %33 = arith.divf %31, %32 : vector<8x128xf32>
    %34 = vector.extract_strided_slice %15 {offsets = [0, 256], sizes = [8, 128], strides = [1, 1]} : vector<8x384xf32> to vector<8x128xf32>
    %35 = vector.extract_strided_slice %17 {offsets = [0, 256], sizes = [8, 128], strides = [1, 1]} : vector<8x384xf32> to vector<8x128xf32>
    %36 = vector.broadcast %7 : vector<1x128xf32> to vector<8x128xf32>
    %37 = arith.addf %35, %36 : vector<8x128xf32>
    %38 = arith.mulf %25, %37 : vector<8x128xf32>
    %39 = arith.addf %34, %38 : vector<8x128xf32>
    %40 = math.tanh %39 : vector<8x128xf32>
    %cst_21 = arith.constant 1.000000e+00 : f32
    %41 = vector.broadcast %cst_21 : f32 to vector<8x128xf32>
    %42 = arith.subf %41, %33 : vector<8x128xf32>
    %43 = arith.mulf %42, %40 : vector<8x128xf32>
    %44 = arith.mulf %33, %10 : vector<8x128xf32>
    %45 = arith.addf %43, %44 : vector<8x128xf32>
    %46 = tpu.concatenate %45, %11 in 1 : vector<8x128xf32>, vector<8x128xf32> -> vector<8x256xf32>
    %c0_22 = arith.constant 0 : index
    %c0_23 = arith.constant 0 : index
    %47 = vector.load %arg5[%c0_22, %c0_23] : memref<256x384xf32, #tpu.memory_space<vmem>>, vector<256x384xf32>
    %cst_24 = arith.constant dense<0.000000e+00> : vector<8x384xf32>
    %48 = tpu.matmul %46, %47, %cst_24 {dimension_numbers = #tpu.dot_dimension_numbers<[1], [0], [0], [1], [0, 0, 1, 1], [], []>} : vector<8x256xf32>, vector<256x384xf32>, vector<8x384xf32> -> vector<8x384xf32>
    %49 = vector.broadcast %8 : vector<1x384xf32> to vector<8x384xf32>
    %50 = arith.addf %48, %49 : vector<8x384xf32>
    %c0_25 = arith.constant 0 : index
    %c0_26 = arith.constant 0 : index
    %51 = vector.load %arg6[%c0_25, %c0_26] : memref<128x128xf32, #tpu.memory_space<vmem>>, vector<128x128xf32>
    %cst_27 = arith.constant dense<0.000000e+00> : vector<8x128xf32>
    %52 = tpu.matmul %11, %51, %cst_27 {dimension_numbers = #tpu.dot_dimension_numbers<[1], [0], [0], [1], [0, 0, 1, 1], [], []>} : vector<8x128xf32>, vector<128x128xf32>, vector<8x128xf32> -> vector<8x128xf32>
    %53 = vector.extract_strided_slice %50 {offsets = [0, 0], sizes = [8, 128], strides = [1, 1]} : vector<8x384xf32> to vector<8x128xf32>
    %54 = arith.negf %53 : vector<8x128xf32>
    %55 = math.exp %54 : vector<8x128xf32>
    %cst_28 = arith.constant 1.000000e+00 : f32
    %56 = vector.broadcast %cst_28 : f32 to vector<8x128xf32>
    %57 = arith.addf %56, %55 : vector<8x128xf32>
    %58 = arith.divf %56, %57 : vector<8x128xf32>
    %59 = vector.extract_strided_slice %50 {offsets = [0, 128], sizes = [8, 128], strides = [1, 1]} : vector<8x384xf32> to vector<8x128xf32>
    %60 = arith.negf %59 : vector<8x128xf32>
    %61 = math.exp %60 : vector<8x128xf32>
    %cst_29 = arith.constant 1.000000e+00 : f32
    %62 = vector.broadcast %cst_29 : f32 to vector<8x128xf32>
    %63 = arith.addf %62, %61 : vector<8x128xf32>
    %64 = arith.divf %62, %63 : vector<8x128xf32>
    %65 = vector.extract_strided_slice %50 {offsets = [0, 256], sizes = [8, 128], strides = [1, 1]} : vector<8x384xf32> to vector<8x128xf32>
    %66 = vector.broadcast %9 : vector<1x128xf32> to vector<8x128xf32>
    %67 = arith.addf %52, %66 : vector<8x128xf32>
    %68 = arith.mulf %58, %67 : vector<8x128xf32>
    %69 = arith.addf %65, %68 : vector<8x128xf32>
    %70 = math.tanh %69 : vector<8x128xf32>
    %cst_30 = arith.constant 1.000000e+00 : f32
    %71 = vector.broadcast %cst_30 : f32 to vector<8x128xf32>
    %72 = arith.subf %71, %64 : vector<8x128xf32>
    %73 = arith.mulf %72, %70 : vector<8x128xf32>
    %74 = arith.mulf %64, %11 : vector<8x128xf32>
    %75 = arith.addf %73, %74 : vector<8x128xf32>
    %c1_i32 = arith.constant 1 : i32
    %c8_i32_31 = arith.constant 8 : i32
    %76 = arith.muli %c1_i32, %c8_i32_31 : i32
    %77 = tpu.assume_multiple %76, 8 : i32
    %78 = arith.index_cast %77 : i32 to index
    %c0_32 = arith.constant 0 : index
    %79 = vector.load %arg12[%78, %c0_32] : memref<64x384xf32, #tpu.memory_space<vmem>>, vector<8x384xf32>
    %c0_33 = arith.constant 0 : index
    %c0_34 = arith.constant 0 : index
    %80 = vector.load %arg2[%c0_33, %c0_34] : memref<128x384xf32, #tpu.memory_space<vmem>>, vector<128x384xf32>
    %cst_35 = arith.constant dense<0.000000e+00> : vector<8x384xf32>
    %81 = tpu.matmul %45, %80, %cst_35 {dimension_numbers = #tpu.dot_dimension_numbers<[1], [0], [0], [1], [0, 0, 1, 1], [], []>} : vector<8x128xf32>, vector<128x384xf32>, vector<8x384xf32> -> vector<8x384xf32>
    %82 = vector.extract_strided_slice %79 {offsets = [0, 0], sizes = [8, 128], strides = [1, 1]} : vector<8x384xf32> to vector<8x128xf32>
    %83 = vector.extract_strided_slice %81 {offsets = [0, 0], sizes = [8, 128], strides = [1, 1]} : vector<8x384xf32> to vector<8x128xf32>
    %84 = arith.addf %82, %83 : vector<8x128xf32>
    %85 = arith.negf %84 : vector<8x128xf32>
    %86 = math.exp %85 : vector<8x128xf32>
    %cst_36 = arith.constant 1.000000e+00 : f32
    %87 = vector.broadcast %cst_36 : f32 to vector<8x128xf32>
    %88 = arith.addf %87, %86 : vector<8x128xf32>
    %89 = arith.divf %87, %88 : vector<8x128xf32>
    %90 = vector.extract_strided_slice %79 {offsets = [0, 128], sizes = [8, 128], strides = [1, 1]} : vector<8x384xf32> to vector<8x128xf32>
    %91 = vector.extract_strided_slice %81 {offsets = [0, 128], sizes = [8, 128], strides = [1, 1]} : vector<8x384xf32> to vector<8x128xf32>
    %92 = arith.addf %90, %91 : vector<8x128xf32>
    %93 = arith.negf %92 : vector<8x128xf32>
    %94 = math.exp %93 : vector<8x128xf32>
    %cst_37 = arith.constant 1.000000e+00 : f32
    %95 = vector.broadcast %cst_37 : f32 to vector<8x128xf32>
    %96 = arith.addf %95, %94 : vector<8x128xf32>
    %97 = arith.divf %95, %96 : vector<8x128xf32>
    %98 = vector.extract_strided_slice %79 {offsets = [0, 256], sizes = [8, 128], strides = [1, 1]} : vector<8x384xf32> to vector<8x128xf32>
    %99 = vector.extract_strided_slice %81 {offsets = [0, 256], sizes = [8, 128], strides = [1, 1]} : vector<8x384xf32> to vector<8x128xf32>
    %100 = vector.broadcast %7 : vector<1x128xf32> to vector<8x128xf32>
    %101 = arith.addf %99, %100 : vector<8x128xf32>
    %102 = arith.mulf %89, %101 : vector<8x128xf32>
    %103 = arith.addf %98, %102 : vector<8x128xf32>
    %104 = math.tanh %103 : vector<8x128xf32>
    %cst_38 = arith.constant 1.000000e+00 : f32
    %105 = vector.broadcast %cst_38 : f32 to vector<8x128xf32>
    %106 = arith.subf %105, %97 : vector<8x128xf32>
    %107 = arith.mulf %106, %104 : vector<8x128xf32>
    %108 = arith.mulf %97, %45 : vector<8x128xf32>
    %109 = arith.addf %107, %108 : vector<8x128xf32>
    %110 = tpu.concatenate %109, %75 in 1 : vector<8x128xf32>, vector<8x128xf32> -> vector<8x256xf32>
    %c0_39 = arith.constant 0 : index
    %c0_40 = arith.constant 0 : index
    %111 = vector.load %arg5[%c0_39, %c0_40] : memref<256x384xf32, #tpu.memory_space<vmem>>, vector<256x384xf32>
    %cst_41 = arith.constant dense<0.000000e+00> : vector<8x384xf32>
    %112 = tpu.matmul %110, %111, %cst_41 {dimension_numbers = #tpu.dot_dimension_numbers<[1], [0], [0], [1], [0, 0, 1, 1], [], []>} : vector<8x256xf32>, vector<256x384xf32>, vector<8x384xf32> -> vector<8x384xf32>
    %113 = vector.broadcast %8 : vector<1x384xf32> to vector<8x384xf32>
    %114 = arith.addf %112, %113 : vector<8x384xf32>
    %c0_42 = arith.constant 0 : index
    %c0_43 = arith.constant 0 : index
    %115 = vector.load %arg6[%c0_42, %c0_43] : memref<128x128xf32, #tpu.memory_space<vmem>>, vector<128x128xf32>
    %cst_44 = arith.constant dense<0.000000e+00> : vector<8x128xf32>
    %116 = tpu.matmul %75, %115, %cst_44 {dimension_numbers = #tpu.dot_dimension_numbers<[1], [0], [0], [1], [0, 0, 1, 1], [], []>} : vector<8x128xf32>, vector<128x128xf32>, vector<8x128xf32> -> vector<8x128xf32>
    %117 = vector.extract_strided_slice %114 {offsets = [0, 0], sizes = [8, 128], strides = [1, 1]} : vector<8x384xf32> to vector<8x128xf32>
    %118 = arith.negf %117 : vector<8x128xf32>
    %119 = math.exp %118 : vector<8x128xf32>
    %cst_45 = arith.constant 1.000000e+00 : f32
    %120 = vector.broadcast %cst_45 : f32 to vector<8x128xf32>
    %121 = arith.addf %120, %119 : vector<8x128xf32>
    %122 = arith.divf %120, %121 : vector<8x128xf32>
    %123 = vector.extract_strided_slice %114 {offsets = [0, 128], sizes = [8, 128], strides = [1, 1]} : vector<8x384xf32> to vector<8x128xf32>
    %124 = arith.negf %123 : vector<8x128xf32>
    %125 = math.exp %124 : vector<8x128xf32>
    %cst_46 = arith.constant 1.000000e+00 : f32
    %126 = vector.broadcast %cst_46 : f32 to vector<8x128xf32>
    %127 = arith.addf %126, %125 : vector<8x128xf32>
    %128 = arith.divf %126, %127 : vector<8x128xf32>
    %129 = vector.extract_strided_slice %114 {offsets = [0, 256], sizes = [8, 128], strides = [1, 1]} : vector<8x384xf32> to vector<8x128xf32>
    %130 = vector.broadcast %9 : vector<1x128xf32> to vector<8x128xf32>
    %131 = arith.addf %116, %130 : vector<8x128xf32>
    %132 = arith.mulf %122, %131 : vector<8x128xf32>
    %133 = arith.addf %129, %132 : vector<8x128xf32>
    %134 = math.tanh %133 : vector<8x128xf32>
    %cst_47 = arith.constant 1.000000e+00 : f32
    %135 = vector.broadcast %cst_47 : f32 to vector<8x128xf32>
    %136 = arith.subf %135, %128 : vector<8x128xf32>
    %137 = arith.mulf %136, %134 : vector<8x128xf32>
    %138 = arith.mulf %128, %75 : vector<8x128xf32>
    %139 = arith.addf %137, %138 : vector<8x128xf32>
    %c2_i32 = arith.constant 2 : i32
    %c8_i32_48 = arith.constant 8 : i32
    %140 = arith.muli %c2_i32, %c8_i32_48 : i32
    %141 = tpu.assume_multiple %140, 8 : i32
    %142 = arith.index_cast %141 : i32 to index
    %c0_49 = arith.constant 0 : index
    %143 = vector.load %arg12[%142, %c0_49] : memref<64x384xf32, #tpu.memory_space<vmem>>, vector<8x384xf32>
    %c0_50 = arith.constant 0 : index
    %c0_51 = arith.constant 0 : index
    %144 = vector.load %arg2[%c0_50, %c0_51] : memref<128x384xf32, #tpu.memory_space<vmem>>, vector<128x384xf32>
    %cst_52 = arith.constant dense<0.000000e+00> : vector<8x384xf32>
    %145 = tpu.matmul %109, %144, %cst_52 {dimension_numbers = #tpu.dot_dimension_numbers<[1], [0], [0], [1], [0, 0, 1, 1], [], []>} : vector<8x128xf32>, vector<128x384xf32>, vector<8x384xf32> -> vector<8x384xf32>
    %146 = vector.extract_strided_slice %143 {offsets = [0, 0], sizes = [8, 128], strides = [1, 1]} : vector<8x384xf32> to vector<8x128xf32>
    %147 = vector.extract_strided_slice %145 {offsets = [0, 0], sizes = [8, 128], strides = [1, 1]} : vector<8x384xf32> to vector<8x128xf32>
    %148 = arith.addf %146, %147 : vector<8x128xf32>
    %149 = arith.negf %148 : vector<8x128xf32>
    %150 = math.exp %149 : vector<8x128xf32>
    %cst_53 = arith.constant 1.000000e+00 : f32
    %151 = vector.broadcast %cst_53 : f32 to vector<8x128xf32>
    %152 = arith.addf %151, %150 : vector<8x128xf32>
    %153 = arith.divf %151, %152 : vector<8x128xf32>
    %154 = vector.extract_strided_slice %143 {offsets = [0, 128], sizes = [8, 128], strides = [1, 1]} : vector<8x384xf32> to vector<8x128xf32>
    %155 = vector.extract_strided_slice %145 {offsets = [0, 128], sizes = [8, 128], strides = [1, 1]} : vector<8x384xf32> to vector<8x128xf32>
    %156 = arith.addf %154, %155 : vector<8x128xf32>
    %157 = arith.negf %156 : vector<8x128xf32>
    %158 = math.exp %157 : vector<8x128xf32>
    %cst_54 = arith.constant 1.000000e+00 : f32
    %159 = vector.broadcast %cst_54 : f32 to vector<8x128xf32>
    %160 = arith.addf %159, %158 : vector<8x128xf32>
    %161 = arith.divf %159, %160 : vector<8x128xf32>
    %162 = vector.extract_strided_slice %143 {offsets = [0, 256], sizes = [8, 128], strides = [1, 1]} : vector<8x384xf32> to vector<8x128xf32>
    %163 = vector.extract_strided_slice %145 {offsets = [0, 256], sizes = [8, 128], strides = [1, 1]} : vector<8x384xf32> to vector<8x128xf32>
    %164 = vector.broadcast %7 : vector<1x128xf32> to vector<8x128xf32>
    %165 = arith.addf %163, %164 : vector<8x128xf32>
    %166 = arith.mulf %153, %165 : vector<8x128xf32>
    %167 = arith.addf %162, %166 : vector<8x128xf32>
    %168 = math.tanh %167 : vector<8x128xf32>
    %cst_55 = arith.constant 1.000000e+00 : f32
    %169 = vector.broadcast %cst_55 : f32 to vector<8x128xf32>
    %170 = arith.subf %169, %161 : vector<8x128xf32>
    %171 = arith.mulf %170, %168 : vector<8x128xf32>
    %172 = arith.mulf %161, %109 : vector<8x128xf32>
    %173 = arith.addf %171, %172 : vector<8x128xf32>
    %174 = tpu.concatenate %173, %139 in 1 : vector<8x128xf32>, vector<8x128xf32> -> vector<8x256xf32>
    %c0_56 = arith.constant 0 : index
    %c0_57 = arith.constant 0 : index
    %175 = vector.load %arg5[%c0_56, %c0_57] : memref<256x384xf32, #tpu.memory_space<vmem>>, vector<256x384xf32>
    %cst_58 = arith.constant dense<0.000000e+00> : vector<8x384xf32>
    %176 = tpu.matmul %174, %175, %cst_58 {dimension_numbers = #tpu.dot_dimension_numbers<[1], [0], [0], [1], [0, 0, 1, 1], [], []>} : vector<8x256xf32>, vector<256x384xf32>, vector<8x384xf32> -> vector<8x384xf32>
    %177 = vector.broadcast %8 : vector<1x384xf32> to vector<8x384xf32>
    %178 = arith.addf %176, %177 : vector<8x384xf32>
    %c0_59 = arith.constant 0 : index
    %c0_60 = arith.constant 0 : index
    %179 = vector.load %arg6[%c0_59, %c0_60] : memref<128x128xf32, #tpu.memory_space<vmem>>, vector<128x128xf32>
    %cst_61 = arith.constant dense<0.000000e+00> : vector<8x128xf32>
    %180 = tpu.matmul %139, %179, %cst_61 {dimension_numbers = #tpu.dot_dimension_numbers<[1], [0], [0], [1], [0, 0, 1, 1], [], []>} : vector<8x128xf32>, vector<128x128xf32>, vector<8x128xf32> -> vector<8x128xf32>
    %181 = vector.extract_strided_slice %178 {offsets = [0, 0], sizes = [8, 128], strides = [1, 1]} : vector<8x384xf32> to vector<8x128xf32>
    %182 = arith.negf %181 : vector<8x128xf32>
    %183 = math.exp %182 : vector<8x128xf32>
    %cst_62 = arith.constant 1.000000e+00 : f32
    %184 = vector.broadcast %cst_62 : f32 to vector<8x128xf32>
    %185 = arith.addf %184, %183 : vector<8x128xf32>
    %186 = arith.divf %184, %185 : vector<8x128xf32>
    %187 = vector.extract_strided_slice %178 {offsets = [0, 128], sizes = [8, 128], strides = [1, 1]} : vector<8x384xf32> to vector<8x128xf32>
    %188 = arith.negf %187 : vector<8x128xf32>
    %189 = math.exp %188 : vector<8x128xf32>
    %cst_63 = arith.constant 1.000000e+00 : f32
    %190 = vector.broadcast %cst_63 : f32 to vector<8x128xf32>
    %191 = arith.addf %190, %189 : vector<8x128xf32>
    %192 = arith.divf %190, %191 : vector<8x128xf32>
    %193 = vector.extract_strided_slice %178 {offsets = [0, 256], sizes = [8, 128], strides = [1, 1]} : vector<8x384xf32> to vector<8x128xf32>
    %194 = vector.broadcast %9 : vector<1x128xf32> to vector<8x128xf32>
    %195 = arith.addf %180, %194 : vector<8x128xf32>
    %196 = arith.mulf %186, %195 : vector<8x128xf32>
    %197 = arith.addf %193, %196 : vector<8x128xf32>
    %198 = math.tanh %197 : vector<8x128xf32>
    %cst_64 = arith.constant 1.000000e+00 : f32
    %199 = vector.broadcast %cst_64 : f32 to vector<8x128xf32>
    %200 = arith.subf %199, %192 : vector<8x128xf32>
    %201 = arith.mulf %200, %198 : vector<8x128xf32>
    %202 = arith.mulf %192, %139 : vector<8x128xf32>
    %203 = arith.addf %201, %202 : vector<8x128xf32>
    %c3_i32 = arith.constant 3 : i32
    %c8_i32_65 = arith.constant 8 : i32
    %204 = arith.muli %c3_i32, %c8_i32_65 : i32
    %205 = tpu.assume_multiple %204, 8 : i32
    %206 = arith.index_cast %205 : i32 to index
    %c0_66 = arith.constant 0 : index
    %207 = vector.load %arg12[%206, %c0_66] : memref<64x384xf32, #tpu.memory_space<vmem>>, vector<8x384xf32>
    %c0_67 = arith.constant 0 : index
    %c0_68 = arith.constant 0 : index
    %208 = vector.load %arg2[%c0_67, %c0_68] : memref<128x384xf32, #tpu.memory_space<vmem>>, vector<128x384xf32>
    %cst_69 = arith.constant dense<0.000000e+00> : vector<8x384xf32>
    %209 = tpu.matmul %173, %208, %cst_69 {dimension_numbers = #tpu.dot_dimension_numbers<[1], [0], [0], [1], [0, 0, 1, 1], [], []>} : vector<8x128xf32>, vector<128x384xf32>, vector<8x384xf32> -> vector<8x384xf32>
    %210 = vector.extract_strided_slice %207 {offsets = [0, 0], sizes = [8, 128], strides = [1, 1]} : vector<8x384xf32> to vector<8x128xf32>
    %211 = vector.extract_strided_slice %209 {offsets = [0, 0], sizes = [8, 128], strides = [1, 1]} : vector<8x384xf32> to vector<8x128xf32>
    %212 = arith.addf %210, %211 : vector<8x128xf32>
    %213 = arith.negf %212 : vector<8x128xf32>
    %214 = math.exp %213 : vector<8x128xf32>
    %cst_70 = arith.constant 1.000000e+00 : f32
    %215 = vector.broadcast %cst_70 : f32 to vector<8x128xf32>
    %216 = arith.addf %215, %214 : vector<8x128xf32>
    %217 = arith.divf %215, %216 : vector<8x128xf32>
    %218 = vector.extract_strided_slice %207 {offsets = [0, 128], sizes = [8, 128], strides = [1, 1]} : vector<8x384xf32> to vector<8x128xf32>
    %219 = vector.extract_strided_slice %209 {offsets = [0, 128], sizes = [8, 128], strides = [1, 1]} : vector<8x384xf32> to vector<8x128xf32>
    %220 = arith.addf %218, %219 : vector<8x128xf32>
    %221 = arith.negf %220 : vector<8x128xf32>
    %222 = math.exp %221 : vector<8x128xf32>
    %cst_71 = arith.constant 1.000000e+00 : f32
    %223 = vector.broadcast %cst_71 : f32 to vector<8x128xf32>
    %224 = arith.addf %223, %222 : vector<8x128xf32>
    %225 = arith.divf %223, %224 : vector<8x128xf32>
    %226 = vector.extract_strided_slice %207 {offsets = [0, 256], sizes = [8, 128], strides = [1, 1]} : vector<8x384xf32> to vector<8x128xf32>
    %227 = vector.extract_strided_slice %209 {offsets = [0, 256], sizes = [8, 128], strides = [1, 1]} : vector<8x384xf32> to vector<8x128xf32>
    %228 = vector.broadcast %7 : vector<1x128xf32> to vector<8x128xf32>
    %229 = arith.addf %227, %228 : vector<8x128xf32>
    %230 = arith.mulf %217, %229 : vector<8x128xf32>
    %231 = arith.addf %226, %230 : vector<8x128xf32>
    %232 = math.tanh %231 : vector<8x128xf32>
    %cst_72 = arith.constant 1.000000e+00 : f32
    %233 = vector.broadcast %cst_72 : f32 to vector<8x128xf32>
    %234 = arith.subf %233, %225 : vector<8x128xf32>
    %235 = arith.mulf %234, %232 : vector<8x128xf32>
    %236 = arith.mulf %225, %173 : vector<8x128xf32>
    %237 = arith.addf %235, %236 : vector<8x128xf32>
    %238 = tpu.concatenate %237, %203 in 1 : vector<8x128xf32>, vector<8x128xf32> -> vector<8x256xf32>
    %c0_73 = arith.constant 0 : index
    %c0_74 = arith.constant 0 : index
    %239 = vector.load %arg5[%c0_73, %c0_74] : memref<256x384xf32, #tpu.memory_space<vmem>>, vector<256x384xf32>
    %cst_75 = arith.constant dense<0.000000e+00> : vector<8x384xf32>
    %240 = tpu.matmul %238, %239, %cst_75 {dimension_numbers = #tpu.dot_dimension_numbers<[1], [0], [0], [1], [0, 0, 1, 1], [], []>} : vector<8x256xf32>, vector<256x384xf32>, vector<8x384xf32> -> vector<8x384xf32>
    %241 = vector.broadcast %8 : vector<1x384xf32> to vector<8x384xf32>
    %242 = arith.addf %240, %241 : vector<8x384xf32>
    %c0_76 = arith.constant 0 : index
    %c0_77 = arith.constant 0 : index
    %243 = vector.load %arg6[%c0_76, %c0_77] : memref<128x128xf32, #tpu.memory_space<vmem>>, vector<128x128xf32>
    %cst_78 = arith.constant dense<0.000000e+00> : vector<8x128xf32>
    %244 = tpu.matmul %203, %243, %cst_78 {dimension_numbers = #tpu.dot_dimension_numbers<[1], [0], [0], [1], [0, 0, 1, 1], [], []>} : vector<8x128xf32>, vector<128x128xf32>, vector<8x128xf32> -> vector<8x128xf32>
    %245 = vector.extract_strided_slice %242 {offsets = [0, 0], sizes = [8, 128], strides = [1, 1]} : vector<8x384xf32> to vector<8x128xf32>
    %246 = arith.negf %245 : vector<8x128xf32>
    %247 = math.exp %246 : vector<8x128xf32>
    %cst_79 = arith.constant 1.000000e+00 : f32
    %248 = vector.broadcast %cst_79 : f32 to vector<8x128xf32>
    %249 = arith.addf %248, %247 : vector<8x128xf32>
    %250 = arith.divf %248, %249 : vector<8x128xf32>
    %251 = vector.extract_strided_slice %242 {offsets = [0, 128], sizes = [8, 128], strides = [1, 1]} : vector<8x384xf32> to vector<8x128xf32>
    %252 = arith.negf %251 : vector<8x128xf32>
    %253 = math.exp %252 : vector<8x128xf32>
    %cst_80 = arith.constant 1.000000e+00 : f32
    %254 = vector.broadcast %cst_80 : f32 to vector<8x128xf32>
    %255 = arith.addf %254, %253 : vector<8x128xf32>
    %256 = arith.divf %254, %255 : vector<8x128xf32>
    %257 = vector.extract_strided_slice %242 {offsets = [0, 256], sizes = [8, 128], strides = [1, 1]} : vector<8x384xf32> to vector<8x128xf32>
    %258 = vector.broadcast %9 : vector<1x128xf32> to vector<8x128xf32>
    %259 = arith.addf %244, %258 : vector<8x128xf32>
    %260 = arith.mulf %250, %259 : vector<8x128xf32>
    %261 = arith.addf %257, %260 : vector<8x128xf32>
    %262 = math.tanh %261 : vector<8x128xf32>
    %cst_81 = arith.constant 1.000000e+00 : f32
    %263 = vector.broadcast %cst_81 : f32 to vector<8x128xf32>
    %264 = arith.subf %263, %256 : vector<8x128xf32>
    %265 = arith.mulf %264, %262 : vector<8x128xf32>
    %266 = arith.mulf %256, %203 : vector<8x128xf32>
    %267 = arith.addf %265, %266 : vector<8x128xf32>
    %c4_i32 = arith.constant 4 : i32
    %c8_i32_82 = arith.constant 8 : i32
    %268 = arith.muli %c4_i32, %c8_i32_82 : i32
    %269 = tpu.assume_multiple %268, 8 : i32
    %270 = arith.index_cast %269 : i32 to index
    %c0_83 = arith.constant 0 : index
    %271 = vector.load %arg12[%270, %c0_83] : memref<64x384xf32, #tpu.memory_space<vmem>>, vector<8x384xf32>
    %c0_84 = arith.constant 0 : index
    %c0_85 = arith.constant 0 : index
    %272 = vector.load %arg2[%c0_84, %c0_85] : memref<128x384xf32, #tpu.memory_space<vmem>>, vector<128x384xf32>
    %cst_86 = arith.constant dense<0.000000e+00> : vector<8x384xf32>
    %273 = tpu.matmul %237, %272, %cst_86 {dimension_numbers = #tpu.dot_dimension_numbers<[1], [0], [0], [1], [0, 0, 1, 1], [], []>} : vector<8x128xf32>, vector<128x384xf32>, vector<8x384xf32> -> vector<8x384xf32>
    %274 = vector.extract_strided_slice %271 {offsets = [0, 0], sizes = [8, 128], strides = [1, 1]} : vector<8x384xf32> to vector<8x128xf32>
    %275 = vector.extract_strided_slice %273 {offsets = [0, 0], sizes = [8, 128], strides = [1, 1]} : vector<8x384xf32> to vector<8x128xf32>
    %276 = arith.addf %274, %275 : vector<8x128xf32>
    %277 = arith.negf %276 : vector<8x128xf32>
    %278 = math.exp %277 : vector<8x128xf32>
    %cst_87 = arith.constant 1.000000e+00 : f32
    %279 = vector.broadcast %cst_87 : f32 to vector<8x128xf32>
    %280 = arith.addf %279, %278 : vector<8x128xf32>
    %281 = arith.divf %279, %280 : vector<8x128xf32>
    %282 = vector.extract_strided_slice %271 {offsets = [0, 128], sizes = [8, 128], strides = [1, 1]} : vector<8x384xf32> to vector<8x128xf32>
    %283 = vector.extract_strided_slice %273 {offsets = [0, 128], sizes = [8, 128], strides = [1, 1]} : vector<8x384xf32> to vector<8x128xf32>
    %284 = arith.addf %282, %283 : vector<8x128xf32>
    %285 = arith.negf %284 : vector<8x128xf32>
    %286 = math.exp %285 : vector<8x128xf32>
    %cst_88 = arith.constant 1.000000e+00 : f32
    %287 = vector.broadcast %cst_88 : f32 to vector<8x128xf32>
    %288 = arith.addf %287, %286 : vector<8x128xf32>
    %289 = arith.divf %287, %288 : vector<8x128xf32>
    %290 = vector.extract_strided_slice %271 {offsets = [0, 256], sizes = [8, 128], strides = [1, 1]} : vector<8x384xf32> to vector<8x128xf32>
    %291 = vector.extract_strided_slice %273 {offsets = [0, 256], sizes = [8, 128], strides = [1, 1]} : vector<8x384xf32> to vector<8x128xf32>
    %292 = vector.broadcast %7 : vector<1x128xf32> to vector<8x128xf32>
    %293 = arith.addf %291, %292 : vector<8x128xf32>
    %294 = arith.mulf %281, %293 : vector<8x128xf32>
    %295 = arith.addf %290, %294 : vector<8x128xf32>
    %296 = math.tanh %295 : vector<8x128xf32>
    %cst_89 = arith.constant 1.000000e+00 : f32
    %297 = vector.broadcast %cst_89 : f32 to vector<8x128xf32>
    %298 = arith.subf %297, %289 : vector<8x128xf32>
    %299 = arith.mulf %298, %296 : vector<8x128xf32>
    %300 = arith.mulf %289, %237 : vector<8x128xf32>
    %301 = arith.addf %299, %300 : vector<8x128xf32>
    %302 = tpu.concatenate %301, %267 in 1 : vector<8x128xf32>, vector<8x128xf32> -> vector<8x256xf32>
    %c0_90 = arith.constant 0 : index
    %c0_91 = arith.constant 0 : index
    %303 = vector.load %arg5[%c0_90, %c0_91] : memref<256x384xf32, #tpu.memory_space<vmem>>, vector<256x384xf32>
    %cst_92 = arith.constant dense<0.000000e+00> : vector<8x384xf32>
    %304 = tpu.matmul %302, %303, %cst_92 {dimension_numbers = #tpu.dot_dimension_numbers<[1], [0], [0], [1], [0, 0, 1, 1], [], []>} : vector<8x256xf32>, vector<256x384xf32>, vector<8x384xf32> -> vector<8x384xf32>
    %305 = vector.broadcast %8 : vector<1x384xf32> to vector<8x384xf32>
    %306 = arith.addf %304, %305 : vector<8x384xf32>
    %c0_93 = arith.constant 0 : index
    %c0_94 = arith.constant 0 : index
    %307 = vector.load %arg6[%c0_93, %c0_94] : memref<128x128xf32, #tpu.memory_space<vmem>>, vector<128x128xf32>
    %cst_95 = arith.constant dense<0.000000e+00> : vector<8x128xf32>
    %308 = tpu.matmul %267, %307, %cst_95 {dimension_numbers = #tpu.dot_dimension_numbers<[1], [0], [0], [1], [0, 0, 1, 1], [], []>} : vector<8x128xf32>, vector<128x128xf32>, vector<8x128xf32> -> vector<8x128xf32>
    %309 = vector.extract_strided_slice %306 {offsets = [0, 0], sizes = [8, 128], strides = [1, 1]} : vector<8x384xf32> to vector<8x128xf32>
    %310 = arith.negf %309 : vector<8x128xf32>
    %311 = math.exp %310 : vector<8x128xf32>
    %cst_96 = arith.constant 1.000000e+00 : f32
    %312 = vector.broadcast %cst_96 : f32 to vector<8x128xf32>
    %313 = arith.addf %312, %311 : vector<8x128xf32>
    %314 = arith.divf %312, %313 : vector<8x128xf32>
    %315 = vector.extract_strided_slice %306 {offsets = [0, 128], sizes = [8, 128], strides = [1, 1]} : vector<8x384xf32> to vector<8x128xf32>
    %316 = arith.negf %315 : vector<8x128xf32>
    %317 = math.exp %316 : vector<8x128xf32>
    %cst_97 = arith.constant 1.000000e+00 : f32
    %318 = vector.broadcast %cst_97 : f32 to vector<8x128xf32>
    %319 = arith.addf %318, %317 : vector<8x128xf32>
    %320 = arith.divf %318, %319 : vector<8x128xf32>
    %321 = vector.extract_strided_slice %306 {offsets = [0, 256], sizes = [8, 128], strides = [1, 1]} : vector<8x384xf32> to vector<8x128xf32>
    %322 = vector.broadcast %9 : vector<1x128xf32> to vector<8x128xf32>
    %323 = arith.addf %308, %322 : vector<8x128xf32>
    %324 = arith.mulf %314, %323 : vector<8x128xf32>
    %325 = arith.addf %321, %324 : vector<8x128xf32>
    %326 = math.tanh %325 : vector<8x128xf32>
    %cst_98 = arith.constant 1.000000e+00 : f32
    %327 = vector.broadcast %cst_98 : f32 to vector<8x128xf32>
    %328 = arith.subf %327, %320 : vector<8x128xf32>
    %329 = arith.mulf %328, %326 : vector<8x128xf32>
    %330 = arith.mulf %320, %267 : vector<8x128xf32>
    %331 = arith.addf %329, %330 : vector<8x128xf32>
    %c5_i32 = arith.constant 5 : i32
    %c8_i32_99 = arith.constant 8 : i32
    %332 = arith.muli %c5_i32, %c8_i32_99 : i32
    %333 = tpu.assume_multiple %332, 8 : i32
    %334 = arith.index_cast %333 : i32 to index
    %c0_100 = arith.constant 0 : index
    %335 = vector.load %arg12[%334, %c0_100] : memref<64x384xf32, #tpu.memory_space<vmem>>, vector<8x384xf32>
    %c0_101 = arith.constant 0 : index
    %c0_102 = arith.constant 0 : index
    %336 = vector.load %arg2[%c0_101, %c0_102] : memref<128x384xf32, #tpu.memory_space<vmem>>, vector<128x384xf32>
    %cst_103 = arith.constant dense<0.000000e+00> : vector<8x384xf32>
    %337 = tpu.matmul %301, %336, %cst_103 {dimension_numbers = #tpu.dot_dimension_numbers<[1], [0], [0], [1], [0, 0, 1, 1], [], []>} : vector<8x128xf32>, vector<128x384xf32>, vector<8x384xf32> -> vector<8x384xf32>
    %338 = vector.extract_strided_slice %335 {offsets = [0, 0], sizes = [8, 128], strides = [1, 1]} : vector<8x384xf32> to vector<8x128xf32>
    %339 = vector.extract_strided_slice %337 {offsets = [0, 0], sizes = [8, 128], strides = [1, 1]} : vector<8x384xf32> to vector<8x128xf32>
    %340 = arith.addf %338, %339 : vector<8x128xf32>
    %341 = arith.negf %340 : vector<8x128xf32>
    %342 = math.exp %341 : vector<8x128xf32>
    %cst_104 = arith.constant 1.000000e+00 : f32
    %343 = vector.broadcast %cst_104 : f32 to vector<8x128xf32>
    %344 = arith.addf %343, %342 : vector<8x128xf32>
    %345 = arith.divf %343, %344 : vector<8x128xf32>
    %346 = vector.extract_strided_slice %335 {offsets = [0, 128], sizes = [8, 128], strides = [1, 1]} : vector<8x384xf32> to vector<8x128xf32>
    %347 = vector.extract_strided_slice %337 {offsets = [0, 128], sizes = [8, 128], strides = [1, 1]} : vector<8x384xf32> to vector<8x128xf32>
    %348 = arith.addf %346, %347 : vector<8x128xf32>
    %349 = arith.negf %348 : vector<8x128xf32>
    %350 = math.exp %349 : vector<8x128xf32>
    %cst_105 = arith.constant 1.000000e+00 : f32
    %351 = vector.broadcast %cst_105 : f32 to vector<8x128xf32>
    %352 = arith.addf %351, %350 : vector<8x128xf32>
    %353 = arith.divf %351, %352 : vector<8x128xf32>
    %354 = vector.extract_strided_slice %335 {offsets = [0, 256], sizes = [8, 128], strides = [1, 1]} : vector<8x384xf32> to vector<8x128xf32>
    %355 = vector.extract_strided_slice %337 {offsets = [0, 256], sizes = [8, 128], strides = [1, 1]} : vector<8x384xf32> to vector<8x128xf32>
    %356 = vector.broadcast %7 : vector<1x128xf32> to vector<8x128xf32>
    %357 = arith.addf %355, %356 : vector<8x128xf32>
    %358 = arith.mulf %345, %357 : vector<8x128xf32>
    %359 = arith.addf %354, %358 : vector<8x128xf32>
    %360 = math.tanh %359 : vector<8x128xf32>
    %cst_106 = arith.constant 1.000000e+00 : f32
    %361 = vector.broadcast %cst_106 : f32 to vector<8x128xf32>
    %362 = arith.subf %361, %353 : vector<8x128xf32>
    %363 = arith.mulf %362, %360 : vector<8x128xf32>
    %364 = arith.mulf %353, %301 : vector<8x128xf32>
    %365 = arith.addf %363, %364 : vector<8x128xf32>
    %366 = tpu.concatenate %365, %331 in 1 : vector<8x128xf32>, vector<8x128xf32> -> vector<8x256xf32>
    %c0_107 = arith.constant 0 : index
    %c0_108 = arith.constant 0 : index
    %367 = vector.load %arg5[%c0_107, %c0_108] : memref<256x384xf32, #tpu.memory_space<vmem>>, vector<256x384xf32>
    %cst_109 = arith.constant dense<0.000000e+00> : vector<8x384xf32>
    %368 = tpu.matmul %366, %367, %cst_109 {dimension_numbers = #tpu.dot_dimension_numbers<[1], [0], [0], [1], [0, 0, 1, 1], [], []>} : vector<8x256xf32>, vector<256x384xf32>, vector<8x384xf32> -> vector<8x384xf32>
    %369 = vector.broadcast %8 : vector<1x384xf32> to vector<8x384xf32>
    %370 = arith.addf %368, %369 : vector<8x384xf32>
    %c0_110 = arith.constant 0 : index
    %c0_111 = arith.constant 0 : index
    %371 = vector.load %arg6[%c0_110, %c0_111] : memref<128x128xf32, #tpu.memory_space<vmem>>, vector<128x128xf32>
    %cst_112 = arith.constant dense<0.000000e+00> : vector<8x128xf32>
    %372 = tpu.matmul %331, %371, %cst_112 {dimension_numbers = #tpu.dot_dimension_numbers<[1], [0], [0], [1], [0, 0, 1, 1], [], []>} : vector<8x128xf32>, vector<128x128xf32>, vector<8x128xf32> -> vector<8x128xf32>
    %373 = vector.extract_strided_slice %370 {offsets = [0, 0], sizes = [8, 128], strides = [1, 1]} : vector<8x384xf32> to vector<8x128xf32>
    %374 = arith.negf %373 : vector<8x128xf32>
    %375 = math.exp %374 : vector<8x128xf32>
    %cst_113 = arith.constant 1.000000e+00 : f32
    %376 = vector.broadcast %cst_113 : f32 to vector<8x128xf32>
    %377 = arith.addf %376, %375 : vector<8x128xf32>
    %378 = arith.divf %376, %377 : vector<8x128xf32>
    %379 = vector.extract_strided_slice %370 {offsets = [0, 128], sizes = [8, 128], strides = [1, 1]} : vector<8x384xf32> to vector<8x128xf32>
    %380 = arith.negf %379 : vector<8x128xf32>
    %381 = math.exp %380 : vector<8x128xf32>
    %cst_114 = arith.constant 1.000000e+00 : f32
    %382 = vector.broadcast %cst_114 : f32 to vector<8x128xf32>
    %383 = arith.addf %382, %381 : vector<8x128xf32>
    %384 = arith.divf %382, %383 : vector<8x128xf32>
    %385 = vector.extract_strided_slice %370 {offsets = [0, 256], sizes = [8, 128], strides = [1, 1]} : vector<8x384xf32> to vector<8x128xf32>
    %386 = vector.broadcast %9 : vector<1x128xf32> to vector<8x128xf32>
    %387 = arith.addf %372, %386 : vector<8x128xf32>
    %388 = arith.mulf %378, %387 : vector<8x128xf32>
    %389 = arith.addf %385, %388 : vector<8x128xf32>
    %390 = math.tanh %389 : vector<8x128xf32>
    %cst_115 = arith.constant 1.000000e+00 : f32
    %391 = vector.broadcast %cst_115 : f32 to vector<8x128xf32>
    %392 = arith.subf %391, %384 : vector<8x128xf32>
    %393 = arith.mulf %392, %390 : vector<8x128xf32>
    %394 = arith.mulf %384, %331 : vector<8x128xf32>
    %395 = arith.addf %393, %394 : vector<8x128xf32>
    %c6_i32 = arith.constant 6 : i32
    %c8_i32_116 = arith.constant 8 : i32
    %396 = arith.muli %c6_i32, %c8_i32_116 : i32
    %397 = tpu.assume_multiple %396, 8 : i32
    %398 = arith.index_cast %397 : i32 to index
    %c0_117 = arith.constant 0 : index
    %399 = vector.load %arg12[%398, %c0_117] : memref<64x384xf32, #tpu.memory_space<vmem>>, vector<8x384xf32>
    %c0_118 = arith.constant 0 : index
    %c0_119 = arith.constant 0 : index
    %400 = vector.load %arg2[%c0_118, %c0_119] : memref<128x384xf32, #tpu.memory_space<vmem>>, vector<128x384xf32>
    %cst_120 = arith.constant dense<0.000000e+00> : vector<8x384xf32>
    %401 = tpu.matmul %365, %400, %cst_120 {dimension_numbers = #tpu.dot_dimension_numbers<[1], [0], [0], [1], [0, 0, 1, 1], [], []>} : vector<8x128xf32>, vector<128x384xf32>, vector<8x384xf32> -> vector<8x384xf32>
    %402 = vector.extract_strided_slice %399 {offsets = [0, 0], sizes = [8, 128], strides = [1, 1]} : vector<8x384xf32> to vector<8x128xf32>
    %403 = vector.extract_strided_slice %401 {offsets = [0, 0], sizes = [8, 128], strides = [1, 1]} : vector<8x384xf32> to vector<8x128xf32>
    %404 = arith.addf %402, %403 : vector<8x128xf32>
    %405 = arith.negf %404 : vector<8x128xf32>
    %406 = math.exp %405 : vector<8x128xf32>
    %cst_121 = arith.constant 1.000000e+00 : f32
    %407 = vector.broadcast %cst_121 : f32 to vector<8x128xf32>
    %408 = arith.addf %407, %406 : vector<8x128xf32>
    %409 = arith.divf %407, %408 : vector<8x128xf32>
    %410 = vector.extract_strided_slice %399 {offsets = [0, 128], sizes = [8, 128], strides = [1, 1]} : vector<8x384xf32> to vector<8x128xf32>
    %411 = vector.extract_strided_slice %401 {offsets = [0, 128], sizes = [8, 128], strides = [1, 1]} : vector<8x384xf32> to vector<8x128xf32>
    %412 = arith.addf %410, %411 : vector<8x128xf32>
    %413 = arith.negf %412 : vector<8x128xf32>
    %414 = math.exp %413 : vector<8x128xf32>
    %cst_122 = arith.constant 1.000000e+00 : f32
    %415 = vector.broadcast %cst_122 : f32 to vector<8x128xf32>
    %416 = arith.addf %415, %414 : vector<8x128xf32>
    %417 = arith.divf %415, %416 : vector<8x128xf32>
    %418 = vector.extract_strided_slice %399 {offsets = [0, 256], sizes = [8, 128], strides = [1, 1]} : vector<8x384xf32> to vector<8x128xf32>
    %419 = vector.extract_strided_slice %401 {offsets = [0, 256], sizes = [8, 128], strides = [1, 1]} : vector<8x384xf32> to vector<8x128xf32>
    %420 = vector.broadcast %7 : vector<1x128xf32> to vector<8x128xf32>
    %421 = arith.addf %419, %420 : vector<8x128xf32>
    %422 = arith.mulf %409, %421 : vector<8x128xf32>
    %423 = arith.addf %418, %422 : vector<8x128xf32>
    %424 = math.tanh %423 : vector<8x128xf32>
    %cst_123 = arith.constant 1.000000e+00 : f32
    %425 = vector.broadcast %cst_123 : f32 to vector<8x128xf32>
    %426 = arith.subf %425, %417 : vector<8x128xf32>
    %427 = arith.mulf %426, %424 : vector<8x128xf32>
    %428 = arith.mulf %417, %365 : vector<8x128xf32>
    %429 = arith.addf %427, %428 : vector<8x128xf32>
    %430 = tpu.concatenate %429, %395 in 1 : vector<8x128xf32>, vector<8x128xf32> -> vector<8x256xf32>
    %c0_124 = arith.constant 0 : index
    %c0_125 = arith.constant 0 : index
    %431 = vector.load %arg5[%c0_124, %c0_125] : memref<256x384xf32, #tpu.memory_space<vmem>>, vector<256x384xf32>
    %cst_126 = arith.constant dense<0.000000e+00> : vector<8x384xf32>
    %432 = tpu.matmul %430, %431, %cst_126 {dimension_numbers = #tpu.dot_dimension_numbers<[1], [0], [0], [1], [0, 0, 1, 1], [], []>} : vector<8x256xf32>, vector<256x384xf32>, vector<8x384xf32> -> vector<8x384xf32>
    %433 = vector.broadcast %8 : vector<1x384xf32> to vector<8x384xf32>
    %434 = arith.addf %432, %433 : vector<8x384xf32>
    %c0_127 = arith.constant 0 : index
    %c0_128 = arith.constant 0 : index
    %435 = vector.load %arg6[%c0_127, %c0_128] : memref<128x128xf32, #tpu.memory_space<vmem>>, vector<128x128xf32>
    %cst_129 = arith.constant dense<0.000000e+00> : vector<8x128xf32>
    %436 = tpu.matmul %395, %435, %cst_129 {dimension_numbers = #tpu.dot_dimension_numbers<[1], [0], [0], [1], [0, 0, 1, 1], [], []>} : vector<8x128xf32>, vector<128x128xf32>, vector<8x128xf32> -> vector<8x128xf32>
    %437 = vector.extract_strided_slice %434 {offsets = [0, 0], sizes = [8, 128], strides = [1, 1]} : vector<8x384xf32> to vector<8x128xf32>
    %438 = arith.negf %437 : vector<8x128xf32>
    %439 = math.exp %438 : vector<8x128xf32>
    %cst_130 = arith.constant 1.000000e+00 : f32
    %440 = vector.broadcast %cst_130 : f32 to vector<8x128xf32>
    %441 = arith.addf %440, %439 : vector<8x128xf32>
    %442 = arith.divf %440, %441 : vector<8x128xf32>
    %443 = vector.extract_strided_slice %434 {offsets = [0, 128], sizes = [8, 128], strides = [1, 1]} : vector<8x384xf32> to vector<8x128xf32>
    %444 = arith.negf %443 : vector<8x128xf32>
    %445 = math.exp %444 : vector<8x128xf32>
    %cst_131 = arith.constant 1.000000e+00 : f32
    %446 = vector.broadcast %cst_131 : f32 to vector<8x128xf32>
    %447 = arith.addf %446, %445 : vector<8x128xf32>
    %448 = arith.divf %446, %447 : vector<8x128xf32>
    %449 = vector.extract_strided_slice %434 {offsets = [0, 256], sizes = [8, 128], strides = [1, 1]} : vector<8x384xf32> to vector<8x128xf32>
    %450 = vector.broadcast %9 : vector<1x128xf32> to vector<8x128xf32>
    %451 = arith.addf %436, %450 : vector<8x128xf32>
    %452 = arith.mulf %442, %451 : vector<8x128xf32>
    %453 = arith.addf %449, %452 : vector<8x128xf32>
    %454 = math.tanh %453 : vector<8x128xf32>
    %cst_132 = arith.constant 1.000000e+00 : f32
    %455 = vector.broadcast %cst_132 : f32 to vector<8x128xf32>
    %456 = arith.subf %455, %448 : vector<8x128xf32>
    %457 = arith.mulf %456, %454 : vector<8x128xf32>
    %458 = arith.mulf %448, %395 : vector<8x128xf32>
    %459 = arith.addf %457, %458 : vector<8x128xf32>
    %c7_i32 = arith.constant 7 : i32
    %c8_i32_133 = arith.constant 8 : i32
    %460 = arith.muli %c7_i32, %c8_i32_133 : i32
    %461 = tpu.assume_multiple %460, 8 : i32
    %462 = arith.index_cast %461 : i32 to index
    %c0_134 = arith.constant 0 : index
    %463 = vector.load %arg12[%462, %c0_134] : memref<64x384xf32, #tpu.memory_space<vmem>>, vector<8x384xf32>
    %c0_135 = arith.constant 0 : index
    %c0_136 = arith.constant 0 : index
    %464 = vector.load %arg2[%c0_135, %c0_136] : memref<128x384xf32, #tpu.memory_space<vmem>>, vector<128x384xf32>
    %cst_137 = arith.constant dense<0.000000e+00> : vector<8x384xf32>
    %465 = tpu.matmul %429, %464, %cst_137 {dimension_numbers = #tpu.dot_dimension_numbers<[1], [0], [0], [1], [0, 0, 1, 1], [], []>} : vector<8x128xf32>, vector<128x384xf32>, vector<8x384xf32> -> vector<8x384xf32>
    %466 = vector.extract_strided_slice %463 {offsets = [0, 0], sizes = [8, 128], strides = [1, 1]} : vector<8x384xf32> to vector<8x128xf32>
    %467 = vector.extract_strided_slice %465 {offsets = [0, 0], sizes = [8, 128], strides = [1, 1]} : vector<8x384xf32> to vector<8x128xf32>
    %468 = arith.addf %466, %467 : vector<8x128xf32>
    %469 = arith.negf %468 : vector<8x128xf32>
    %470 = math.exp %469 : vector<8x128xf32>
    %cst_138 = arith.constant 1.000000e+00 : f32
    %471 = vector.broadcast %cst_138 : f32 to vector<8x128xf32>
    %472 = arith.addf %471, %470 : vector<8x128xf32>
    %473 = arith.divf %471, %472 : vector<8x128xf32>
    %474 = vector.extract_strided_slice %463 {offsets = [0, 128], sizes = [8, 128], strides = [1, 1]} : vector<8x384xf32> to vector<8x128xf32>
    %475 = vector.extract_strided_slice %465 {offsets = [0, 128], sizes = [8, 128], strides = [1, 1]} : vector<8x384xf32> to vector<8x128xf32>
    %476 = arith.addf %474, %475 : vector<8x128xf32>
    %477 = arith.negf %476 : vector<8x128xf32>
    %478 = math.exp %477 : vector<8x128xf32>
    %cst_139 = arith.constant 1.000000e+00 : f32
    %479 = vector.broadcast %cst_139 : f32 to vector<8x128xf32>
    %480 = arith.addf %479, %478 : vector<8x128xf32>
    %481 = arith.divf %479, %480 : vector<8x128xf32>
    %482 = vector.extract_strided_slice %463 {offsets = [0, 256], sizes = [8, 128], strides = [1, 1]} : vector<8x384xf32> to vector<8x128xf32>
    %483 = vector.extract_strided_slice %465 {offsets = [0, 256], sizes = [8, 128], strides = [1, 1]} : vector<8x384xf32> to vector<8x128xf32>
    %484 = vector.broadcast %7 : vector<1x128xf32> to vector<8x128xf32>
    %485 = arith.addf %483, %484 : vector<8x128xf32>
    %486 = arith.mulf %473, %485 : vector<8x128xf32>
    %487 = arith.addf %482, %486 : vector<8x128xf32>
    %488 = math.tanh %487 : vector<8x128xf32>
    %cst_140 = arith.constant 1.000000e+00 : f32
    %489 = vector.broadcast %cst_140 : f32 to vector<8x128xf32>
    %490 = arith.subf %489, %481 : vector<8x128xf32>
    %491 = arith.mulf %490, %488 : vector<8x128xf32>
    %492 = arith.mulf %481, %429 : vector<8x128xf32>
    %493 = arith.addf %491, %492 : vector<8x128xf32>
    %494 = tpu.concatenate %493, %459 in 1 : vector<8x128xf32>, vector<8x128xf32> -> vector<8x256xf32>
    %c0_141 = arith.constant 0 : index
    %c0_142 = arith.constant 0 : index
    %495 = vector.load %arg5[%c0_141, %c0_142] : memref<256x384xf32, #tpu.memory_space<vmem>>, vector<256x384xf32>
    %cst_143 = arith.constant dense<0.000000e+00> : vector<8x384xf32>
    %496 = tpu.matmul %494, %495, %cst_143 {dimension_numbers = #tpu.dot_dimension_numbers<[1], [0], [0], [1], [0, 0, 1, 1], [], []>} : vector<8x256xf32>, vector<256x384xf32>, vector<8x384xf32> -> vector<8x384xf32>
    %497 = vector.broadcast %8 : vector<1x384xf32> to vector<8x384xf32>
    %498 = arith.addf %496, %497 : vector<8x384xf32>
    %c0_144 = arith.constant 0 : index
    %c0_145 = arith.constant 0 : index
    %499 = vector.load %arg6[%c0_144, %c0_145] : memref<128x128xf32, #tpu.memory_space<vmem>>, vector<128x128xf32>
    %cst_146 = arith.constant dense<0.000000e+00> : vector<8x128xf32>
    %500 = tpu.matmul %459, %499, %cst_146 {dimension_numbers = #tpu.dot_dimension_numbers<[1], [0], [0], [1], [0, 0, 1, 1], [], []>} : vector<8x128xf32>, vector<128x128xf32>, vector<8x128xf32> -> vector<8x128xf32>
    %501 = vector.extract_strided_slice %498 {offsets = [0, 0], sizes = [8, 128], strides = [1, 1]} : vector<8x384xf32> to vector<8x128xf32>
    %502 = arith.negf %501 : vector<8x128xf32>
    %503 = math.exp %502 : vector<8x128xf32>
    %cst_147 = arith.constant 1.000000e+00 : f32
    %504 = vector.broadcast %cst_147 : f32 to vector<8x128xf32>
    %505 = arith.addf %504, %503 : vector<8x128xf32>
    %506 = arith.divf %504, %505 : vector<8x128xf32>
    %507 = vector.extract_strided_slice %498 {offsets = [0, 128], sizes = [8, 128], strides = [1, 1]} : vector<8x384xf32> to vector<8x128xf32>
    %508 = arith.negf %507 : vector<8x128xf32>
    %509 = math.exp %508 : vector<8x128xf32>
    %cst_148 = arith.constant 1.000000e+00 : f32
    %510 = vector.broadcast %cst_148 : f32 to vector<8x128xf32>
    %511 = arith.addf %510, %509 : vector<8x128xf32>
    %512 = arith.divf %510, %511 : vector<8x128xf32>
    %513 = vector.extract_strided_slice %498 {offsets = [0, 256], sizes = [8, 128], strides = [1, 1]} : vector<8x384xf32> to vector<8x128xf32>
    %514 = vector.broadcast %9 : vector<1x128xf32> to vector<8x128xf32>
    %515 = arith.addf %500, %514 : vector<8x128xf32>
    %516 = arith.mulf %506, %515 : vector<8x128xf32>
    %517 = arith.addf %513, %516 : vector<8x128xf32>
    %518 = math.tanh %517 : vector<8x128xf32>
    %cst_149 = arith.constant 1.000000e+00 : f32
    %519 = vector.broadcast %cst_149 : f32 to vector<8x128xf32>
    %520 = arith.subf %519, %512 : vector<8x128xf32>
    %521 = arith.mulf %520, %518 : vector<8x128xf32>
    %522 = arith.mulf %512, %459 : vector<8x128xf32>
    %523 = arith.addf %521, %522 : vector<8x128xf32>
    %c8_i32_150 = arith.constant 8 : i32
    %c0_151 = arith.constant 0 : index
    %c0_152 = arith.constant 0 : index
    %524 = vector.load %arg9[%c0_151, %c0_152] : memref<1x128xf32, #tpu.memory_space<vmem>>, vector<1x128xf32>
    %525 = vector.broadcast %524 : vector<1x128xf32> to vector<8x128xf32>
    %526 = arith.mulf %523, %525 : vector<8x128xf32>
    %cst_153 = arith.constant dense<0.000000e+00> : vector<8xf32>
    %527 = vector.multi_reduction <add>, %526, %cst_153 [1] : vector<8x128xf32> to vector<8xf32>
    %528 = vector.shape_cast %527 : vector<8xf32> to vector<8x1xf32>
    %c0_154 = arith.constant 0 : index
    %c0_155 = arith.constant 0 : index
    %529 = vector.load %arg10[%c0_154, %c0_155] : memref<1x1xf32, #tpu.memory_space<vmem>>, vector<1x1xf32>
    %530 = vector.broadcast %529 : vector<1x1xf32> to vector<8x1xf32>
    %531 = arith.addf %528, %530 : vector<8x1xf32>
    %c0_156 = arith.constant 0 : index
    %c0_157 = arith.constant 0 : index
    %532 = vector.load %arg11[%c0_156, %c0_157] : memref<8x1xf32, #tpu.memory_space<vmem>>, vector<8x1xf32>
    tpu.vector_store %arg11[%c0_156, %c0_157], %531 {strides = array<i32>} : memref<8x1xf32, #tpu.memory_space<vmem>>, vector<8x1xf32>,
    return
  }
}

</mosaic_0001>

<llo_original>
// kernel: gru_regression_forward.1
$region0: #{gru_regression_forward.1}
  #allocation0 [shape = 'u32[]', space=smem, size = 0x4, offset = 0x4, fixed_abs, tag = 'smem constant byte address 0x4 - core index']
  #allocation1 [shape = 'u32[72,128]{1,0:T(1,128)}', space=vmem, size = 0x9000, scoped, tag = 'internal scratch']
  #allocation2 [shape = 'f32[64,384]{1,0:T(8,128)}', space=vmem, size = 0x18000, scoped, tag = 'scratch operand']
  #allocation3 [shape = 'f32[1,1]{1,0:T(1,128)S(1)}', space=vmem, size = 0x200, scoped, tag = 'scoped memory for gru_regression_forward.1']
  %s0 = inlined_call_operand.vmem [shape: f32[64,16], index: 0, kind: input, shape index: {}]
  %s1 = inlined_call_operand.vmem [shape: f32[16,384], index: 1, kind: input, shape index: {}]
  %s2 = inlined_call_operand.vmem [shape: f32[128,384], index: 2, kind: input, shape index: {}]
  %s3 = inlined_call_operand.vmem [shape: f32[1,384], index: 3, kind: input, shape index: {}]
  %s4 = inlined_call_operand.vmem [shape: f32[1,128], index: 4, kind: input, shape index: {}]
  %s5 = inlined_call_operand.vmem [shape: f32[256,384], index: 5, kind: input, shape index: {}]
  %s6 = inlined_call_operand.vmem [shape: f32[128,128], index: 6, kind: input, shape index: {}]
  %s7 = inlined_call_operand.vmem [shape: f32[1,384], index: 7, kind: input, shape index: {}]
  %s8 = inlined_call_operand.vmem [shape: f32[1,128], index: 8, kind: input, shape index: {}]
  %s9 = inlined_call_operand.vmem [shape: f32[1,128], index: 9, kind: input, shape index: {}]
  %s10 = inlined_call_operand.<no memory space> [shape: f32[1,1], index: 10, kind: input, shape index: {}]
  %s11 = inlined_call_operand.vmem [shape: f32[8,1], index: 11, kind: output, shape index: {}]
  %s12 = sld [smem:[#allocation0]]
  $region54: #{gru_regression_forward.1} parent=0
    _
  %s14 = ssub.s32 1, %s12
  %s15 = scalar_select 0, %s14, %s12
  %v16 = vstv %s10
  %17 = vst [vmem:[#allocation3] sm:$0x1] %v16
  // Predicated region
  $region2: #{gru_regression_forward.1} parent=0 // pred_check
    _
  $region3: #{gru_regression_forward.1} parent=0 // pred_check_branch
    %19 = sbr.rel (0) target = $region5
  $region4: #{gru_regression_forward.1} parent=0 // pred_region
    _
  $region5: #{gru_regression_forward.1} parent=0 // pred_fallthru
    _
  // Predicated region
  $region6: #{gru_regression_forward.1} parent=0 // pred_check
    _
  $region7: #{gru_regression_forward.1} parent=0 // pred_check_branch
    %21 = sbr.rel (0) target = $region9
  $region8: #{gru_regression_forward.1} parent=0 // pred_region
    _
  $region9: #{gru_regression_forward.1} parent=0 // pred_fallthru
    _
  // Predicated region
  $region10: #{gru_regression_forward.1} parent=0 // pred_check
    _
  $region11: #{gru_regression_forward.1} parent=0 // pred_check_branch
    %23 = sbr.rel (0) target = $region13
  $region12: #{gru_regression_forward.1} parent=0 // pred_region
    _
  $region13: #{gru_regression_forward.1} parent=0 // pred_fallthru
    _
  // Predicated region
  $region14: #{gru_regression_forward.1} parent=0 // pred_check
    _
  $region15: #{gru_regression_forward.1} parent=0 // pred_check_branch
    %25 = sbr.rel (0) target = $region17
  $region16: #{gru_regression_forward.1} parent=0 // pred_region
    _
  $region17: #{gru_regression_forward.1} parent=0 // pred_fallthru
    _
  // Predicated region
  $region18: #{gru_regression_forward.1} parent=0 // pred_check
    _
  $region19: #{gru_regression_forward.1} parent=0 // pred_check_branch
    %27 = sbr.rel (0) target = $region21
  $region20: #{gru_regression_forward.1} parent=0 // pred_region
    _
  $region21: #{gru_regression_forward.1} parent=0 // pred_fallthru
    _
  // Predicated region
  $region22: #{gru_regression_forward.1} parent=0 // pred_check
    _
  $region23: #{gru_regression_forward.1} parent=0 // pred_check_branch
    %29 = sbr.rel (0) target = $region25
  $region24: #{gru_regression_forward.1} parent=0 // pred_region
    _
  $region25: #{gru_regression_forward.1} parent=0 // pred_fallthru
    _
  // Predicated region
  $region26: #{gru_regression_forward.1} parent=0 // pred_check
    _
  $region27: #{gru_regression_forward.1} parent=0 // pred_check_branch
    %31 = sbr.rel (0) target = $region29
  $region28: #{gru_regression_forward.1} parent=0 // pred_region
    _
  $region29: #{gru_regression_forward.1} parent=0 // pred_fallthru
    _
  // Predicated region
  $region30: #{gru_regression_forward.1} parent=0 // pred_check
    _
  $region31: #{gru_regression_forward.1} parent=0 // pred_check_branch
    %33 = sbr.rel (0) target = $region33
  $region32: #{gru_regression_forward.1} parent=0 // pred_region
    _
  $region33: #{gru_regression_forward.1} parent=0 // pred_fallthru
    _
  // Predicated region
  $region34: #{gru_regression_forward.1} parent=0 // pred_check
    _
  $region35: #{gru_regression_forward.1} parent=0 // pred_check_branch
    %35 = sbr.rel (0) target = $region37
  $region36: #{gru_regression_forward.1} parent=0 // pred_region
    _
  $region37: #{gru_regression_forward.1} parent=0 // pred_fallthru
    _
  // Predicated region
  $region38: #{gru_regression_forward.1} parent=0 // pred_check
    _
  $region39: #{gru_regression_forward.1} parent=0 // pred_check_branch
    %37 = sbr.rel (0) target = $region41
  $region40: #{gru_regression_forward.1} parent=0 // pred_region
    _
  $region41: #{gru_regression_forward.1} parent=0 // pred_fallthru
    _
  // Predicated region
  $region42: #{gru_regression_forward.1} parent=0 // pred_check
    _
  $region43: #{gru_regression_forward.1} parent=0 // pred_check_branch
    %39 = sbr.rel (0) target = $region45
  $region44: #{gru_regression_forward.1} parent=0 // pred_region
    _
  $region45: #{gru_regression_forward.1} parent=0 // pred_fallthru
    _
  %v40 = vld [vmem:[%s0] sm:$0xff]
  %v41 = vld [vmem:[%s0 + $0x8] sm:$0xff]
  %v42 = vld [vmem:[%s0 + $0x10] sm:$0xff]
  %v43 = vld [vmem:[%s0 + $0x18] sm:$0xff]
  %v44 = vld [vmem:[%s0 + $0x20] sm:$0xff]
  %v45 = vld [vmem:[%s0 + $0x28] sm:$0xff]
  %v46 = vld [vmem:[%s0 + $0x30] sm:$0xff]
  %v47 = vld [vmem:[%s0 + $0x38] sm:$0xff]
  %v48 = vld [vmem:[%s1] sm:$0xff]
  %v49 = vld [vmem:[%s1 + $0x8] sm:$0xff]
  %v50 = vld [vmem:[%s1 + $0x10] sm:$0xff]
  %v51 = vld [vmem:[%s1 + $0x18] sm:$0xff]
  %v52 = vld [vmem:[%s1 + $0x20] sm:$0xff]
  %v53 = vld [vmem:[%s1 + $0x28] sm:$0xff]
  %v54 = vld [vmem:[%s3] sm:$0x7]
  %v56 = vperm.slane %v54, 0
  %v57 = vperm.slane %v54, 1
  %v58 = vperm.slane %v54, 2
  %vm62 = vcmask 130048
  %v64 = vsel %vm62, %v40, 0
  %v67 = vsel %vm62, %v41, 0
  %v70 = vsel %vm62, %v42, 0
  %v73 = vsel %vm62, %v43, 0
  %v76 = vsel %vm62, %v44, 0
  %v79 = vsel %vm62, %v45, 0
  %v82 = vsel %vm62, %v46, 0
  %v85 = vsel %vm62, %v47, 0
  %87 = vmatpush.msra.mxu0 0.0
  %88 = vmatpush.msra.mxu0 0.0
  %89 = vmatpush.msra.mxu0 0.0
  %90 = vmatpush.msra.mxu0 0.0
  %91 = vmatpush.msra.mxu0 0.0
  %92 = vmatpush.msra.mxu0 0.0
  %93 = vmatpush.msra.mxu0 0.0
  %94 = vmatpush.msra.mxu0 0.0
  %95 = vmatpush.msra.mxu0 0.0
  %96 = vmatpush.msra.mxu0 0.0
  %97 = vmatpush.msra.mxu0 0.0
  %98 = vmatpush.msra.mxu0 0.0
  %99 = vmatpush.msra.mxu0 0.0
  %100 = vmatpush.msra.mxu0 0.0
  %101 = vmatpush.msra.mxu0 %v51
  %102 = vmatpush.msra.mxu0 %v48
  %103 = vmatmul.f32.gmra.mxu0 %v64
  %v104 = vpop.f32.mrf.mxu0
  %v105 = vadd.f32 %v56, %v104
  %106 = vmatmul.f32.gmra.mxu0 %v67
  %v107 = vpop.f32.mrf.mxu0
  %v108 = vadd.f32 %v56, %v107
  %109 = vmatmul.f32.gmra.mxu0 %v70
  %v110 = vpop.f32.mrf.mxu0
  %v111 = vadd.f32 %v56, %v110
  %112 = vmatmul.f32.gmra.mxu0 %v73
  %v113 = vpop.f32.mrf.mxu0
  %v114 = vadd.f32 %v56, %v113
  %115 = vmatmul.f32.gmra.mxu0 %v76
  %v116 = vpop.f32.mrf.mxu0
  %v117 = vadd.f32 %v56, %v116
  %118 = vmatmul.f32.gmra.mxu0 %v79
  %v119 = vpop.f32.mrf.mxu0
  %v120 = vadd.f32 %v56, %v119
  %121 = vmatmul.f32.gmra.mxu0 %v82
  %v122 = vpop.f32.mrf.mxu0
  %v123 = vadd.f32 %v56, %v122
  %124 = vmatmul.f32.gmra.mxu0 %v85
  %v125 = vpop.f32.mrf.mxu0
  %v126 = vadd.f32 %v56, %v125
  %127 = vdwg.mxu0
  %128 = vmatpush.msra.mxu0 0.0
  %129 = vmatpush.msra.mxu0 0.0
  %130 = vmatpush.msra.mxu0 0.0
  %131 = vmatpush.msra.mxu0 0.0
  %132 = vmatpush.msra.mxu0 0.0
  %133 = vmatpush.msra.mxu0 0.0
  %134 = vmatpush.msra.mxu0 0.0
  %135 = vmatpush.msra.mxu0 0.0
  %136 = vmatpush.msra.mxu0 0.0
  %137 = vmatpush.msra.mxu0 0.0
  %138 = vmatpush.msra.mxu0 0.0
  %139 = vmatpush.msra.mxu0 0.0
  %140 = vmatpush.msra.mxu0 0.0
  %141 = vmatpush.msra.mxu0 0.0
  %142 = vmatpush.msra.mxu0 %v52
  %143 = vmatpush.msra.mxu0 %v49
  %144 = vmatmul.f32.gmra.mxu0 %v64
  %v145 = vpop.f32.mrf.mxu0
  %v146 = vadd.f32 %v57, %v145
  %147 = vmatmul.f32.gmra.mxu0 %v67
  %v148 = vpop.f32.mrf.mxu0
  %v149 = vadd.f32 %v57, %v148
  %150 = vmatmul.f32.gmra.mxu0 %v70
  %v151 = vpop.f32.mrf.mxu0
  %v152 = vadd.f32 %v57, %v151
  %153 = vmatmul.f32.gmra.mxu0 %v73
  %v154 = vpop.f32.mrf.mxu0
  %v155 = vadd.f32 %v57, %v154
  %156 = vmatmul.f32.gmra.mxu0 %v76
  %v157 = vpop.f32.mrf.mxu0
  %v158 = vadd.f32 %v57, %v157
  %159 = vmatmul.f32.gmra.mxu0 %v79
  %v160 = vpop.f32.mrf.mxu0
  %v161 = vadd.f32 %v57, %v160
  %162 = vmatmul.f32.gmra.mxu0 %v82
  %v163 = vpop.f32.mrf.mxu0
  %v164 = vadd.f32 %v57, %v163
  %165 = vmatmul.f32.gmra.mxu0 %v85
  %v166 = vpop.f32.mrf.mxu0
  %v167 = vadd.f32 %v57, %v166
  %168 = vdwg.mxu0
  %169 = vmatpush.msra.mxu0 0.0
  %170 = vmatpush.msra.mxu0 0.0
  %171 = vmatpush.msra.mxu0 0.0
  %172 = vmatpush.msra.mxu0 0.0
  %173 = vmatpush.msra.mxu0 0.0
  %174 = vmatpush.msra.mxu0 0.0
  %175 = vmatpush.msra.mxu0 0.0
  %176 = vmatpush.msra.mxu0 0.0
  %177 = vmatpush.msra.mxu0 0.0
  %178 = vmatpush.msra.mxu0 0.0
  %179 = vmatpush.msra.mxu0 0.0
  %180 = vmatpush.msra.mxu0 0.0
  %181 = vmatpush.msra.mxu0 0.0
  %182 = vmatpush.msra.mxu0 0.0
  %183 = vmatpush.msra.mxu0 %v53
  %184 = vmatpush.msra.mxu0 %v50
  %185 = vmatmul.f32.gmra.mxu0 %v64
  %v186 = vpop.f32.mrf.mxu0
  %v187 = vadd.f32 %v58, %v186
  %188 = vmatmul.f32.gmra.mxu0 %v67
  %v189 = vpop.f32.mrf.mxu0
  %v190 = vadd.f32 %v58, %v189
  %191 = vmatmul.f32.gmra.mxu0 %v70
  %v192 = vpop.f32.mrf.mxu0
  %v193 = vadd.f32 %v58, %v192
  %194 = vmatmul.f32.gmra.mxu0 %v73
  %v195 = vpop.f32.mrf.mxu0
  %v196 = vadd.f32 %v58, %v195
  %197 = vmatmul.f32.gmra.mxu0 %v76
  %v198 = vpop.f32.mrf.mxu0
  %v199 = vadd.f32 %v58, %v198
  %200 = vmatmul.f32.gmra.mxu0 %v79
  %v201 = vpop.f32.mrf.mxu0
  %v202 = vadd.f32 %v58, %v201
  %203 = vmatmul.f32.gmra.mxu0 %v82
  %v204 = vpop.f32.mrf.mxu0
  %v205 = vadd.f32 %v58, %v204
  %206 = vmatmul.f32.gmra.mxu0 %v85
  %v207 = vpop.f32.mrf.mxu0
  %v208 = vadd.f32 %v58, %v207
  %209 = vdwg.mxu0
  %210 = vst [vmem:[#allocation2] sm:$0xff] %v105
  %211 = vst [vmem:[#allocation2 + $0x8] sm:$0xff] %v146
  %212 = vst [vmem:[#allocation2 + $0x10] sm:$0xff] %v187
  %213 = vst [vmem:[#allocation2 + $0x18] sm:$0xff] %v108
  %214 = vst [vmem:[#allocation2 + $0x20] sm:$0xff] %v149
  %215 = vst [vmem:[#allocation2 + $0x28] sm:$0xff] %v190
  %216 = vst [vmem:[#allocation2 + $0x30] sm:$0xff] %v111
  %217 = vst [vmem:[#allocation2 + $0x38] sm:$0xff] %v152
  %218 = vst [vmem:[#allocation2 + $0x40] sm:$0xff] %v193
  %219 = vst [vmem:[#allocation2 + $0x48] sm:$0xff] %v114
  %220 = vst [vmem:[#allocation2 + $0x50] sm:$0xff] %v155
  %221 = vst [vmem:[#allocation2 + $0x58] sm:$0xff] %v196
  %222 = vst [vmem:[#allocation2 + $0x60] sm:$0xff] %v117
  %223 = vst [vmem:[#allocation2 + $0x68] sm:$0xff] %v158
  %224 = vst [vmem:[#allocation2 + $0x70] sm:$0xff] %v199
  %225 = vst [vmem:[#allocation2 + $0x78] sm:$0xff] %v120
  %226 = vst [vmem:[#allocation2 + $0x80] sm:$0xff] %v161
  %227 = vst [vmem:[#allocation2 + $0x88] sm:$0xff] %v202
  %228 = vst [vmem:[#allocation2 + $0x90] sm:$0xff] %v123
  %229 = vst [vmem:[#allocation2 + $0x98] sm:$0xff] %v164
  %230 = vst [vmem:[#allocation2 + $0xa0] sm:$0xff] %v205
  %231 = vst [vmem:[#allocation2 + $0xa8] sm:$0xff] %v126
  %232 = vst [vmem:[#allocation2 + $0xb0] sm:$0xff] %v167
  %233 = vst [vmem:[#allocation2 + $0xb8] sm:$0xff] %v208
  %v234 = vld [vmem:[%s4] sm:$0x1]
  %v235 = vld [vmem:[%s7] sm:$0x7]
  %v236 = vld [vmem:[%s8] sm:$0x1]
  %s237 = smul.u32 0, 3
  %s238 = smul.addr %s237, 8
  %s239 = scalar_lea.vmem [#allocation2], %s238
  %v240 = vld [vmem:[%s239] sm:$0xff]
  %v241 = vld [vmem:[%s239 + $0x8] sm:$0xff]
  %v242 = vld [vmem:[%s239 + $0x10] sm:$0xff]
  %v243 = vld [vmem:[%s2] sm:$0xff]
  %v244 = vld [vmem:[%s2 + $0x8] sm:$0xff]
  %v245 = vld [vmem:[%s2 + $0x10] sm:$0xff]
  %v246 = vld [vmem:[%s2 + $0x18] sm:$0xff]
  %v247 = vld [vmem:[%s2 + $0x20] sm:$0xff]
  %v248 = vld [vmem:[%s2 + $0x28] sm:$0xff]
  %v249 = vld [vmem:[%s2 + $0x30] sm:$0xff]
  %v250 = vld [vmem:[%s2 + $0x38] sm:$0xff]
  %v251 = vld [vmem:[%s2 + $0x40] sm:$0xff]
  %v252 = vld [vmem:[%s2 + $0x48] sm:$0xff]
  %v253 = vld [vmem:[%s2 + $0x50] sm:$0xff]
  %v254 = vld [vmem:[%s2 + $0x58] sm:$0xff]
  %v255 = vld [vmem:[%s2 + $0x60] sm:$0xff]
  %v256 = vld [vmem:[%s2 + $0x68] sm:$0xff]
  %v257 = vld [vmem:[%s2 + $0x70] sm:$0xff]
  %v258 = vld [vmem:[%s2 + $0x78] sm:$0xff]
  %v259 = vld [vmem:[%s2 + $0x80] sm:$0xff]
  %v260 = vld [vmem:[%s2 + $0x88] sm:$0xff]
  %v261 = vld [vmem:[%s2 + $0x90] sm:$0xff]
  %v262 = vld [vmem:[%s2 + $0x98] sm:$0xff]
  %v263 = vld [vmem:[%s2 + $0xa0] sm:$0xff]
  %v264 = vld [vmem:[%s2 + $0xa8] sm:$0xff]
  %v265 = vld [vmem:[%s2 + $0xb0] sm:$0xff]
  %v266 = vld [vmem:[%s2 + $0xb8] sm:$0xff]
  %v267 = vld [vmem:[%s2 + $0xc0] sm:$0xff]
  %v268 = vld [vmem:[%s2 + $0xc8] sm:$0xff]
  %v269 = vld [vmem:[%s2 + $0xd0] sm:$0xff]
  %v270 = vld [vmem:[%s2 + $0xd8] sm:$0xff]
  %v271 = vld [vmem:[%s2 + $0xe0] sm:$0xff]
  %v272 = vld [vmem:[%s2 + $0xe8] sm:$0xff]
  %v273 = vld [vmem:[%s2 + $0xf0] sm:$0xff]
  %v274 = vld [vmem:[%s2 + $0xf8] sm:$0xff]
  %v275 = vld [vmem:[%s2 + $0x100] sm:$0xff]
  %v276 = vld [vmem:[%s2 + $0x108] sm:$0xff]
  %v277 = vld [vmem:[%s2 + $0x110] sm:$0xff]
  %v278 = vld [vmem:[%s2 + $0x118] sm:$0xff]
  %v279 = vld [vmem:[%s2 + $0x120] sm:$0xff]
  %v280 = vld [vmem:[%s2 + $0x128] sm:$0xff]
  %v281 = vld [vmem:[%s2 + $0x130] sm:$0xff]
  %v282 = vld [vmem:[%s2 + $0x138] sm:$0xff]
  %v283 = vld [vmem:[%s2 + $0x140] sm:$0xff]
  %v284 = vld [vmem:[%s2 + $0x148] sm:$0xff]
  %v285 = vld [vmem:[%s2 + $0x150] sm:$0xff]
  %v286 = vld [vmem:[%s2 + $0x158] sm:$0xff]
  %v287 = vld [vmem:[%s2 + $0x160] sm:$0xff]
  %v288 = vld [vmem:[%s2 + $0x168] sm:$0xff]
  %v289 = vld [vmem:[%s2 + $0x170] sm:$0xff]
  %v290 = vld [vmem:[%s2 + $0x178] sm:$0xff]
  %291 = vmatpush.msra.mxu0 %v288
  %292 = vmatpush.msra.mxu0 %v285
  %293 = vmatpush.msra.mxu0 %v282
  %294 = vmatpush.msra.mxu0 %v279
  %295 = vmatpush.msra.mxu0 %v276
  %296 = vmatpush.msra.mxu0 %v273
  %297 = vmatpush.msra.mxu0 %v270
  %298 = vmatpush.msra.mxu0 %v267
  %299 = vmatpush.msra.mxu0 %v264
  %300 = vmatpush.msra.mxu0 %v261
  %301 = vmatpush.msra.mxu0 %v258
  %302 = vmatpush.msra.mxu0 %v255
  %303 = vmatpush.msra.mxu0 %v252
  %304 = vmatpush.msra.mxu0 %v249
  %305 = vmatpush.msra.mxu0 %v246
  %306 = vmatpush.msra.mxu0 %v243
  %307 = vmatmul.f32.gmra.mxu0 0.0
  %v308 = vpop.f32.mrf.mxu0
  %v309 = vadd.f32 0.0, %v308
  %310 = vdwg.mxu0
  %311 = vmatpush.msra.mxu0 %v289
  %312 = vmatpush.msra.mxu0 %v286
  %313 = vmatpush.msra.mxu0 %v283
  %314 = vmatpush.msra.mxu0 %v280
  %315 = vmatpush.msra.mxu0 %v277
  %316 = vmatpush.msra.mxu0 %v274
  %317 = vmatpush.msra.mxu0 %v271
  %318 = vmatpush.msra.mxu0 %v268
  %319 = vmatpush.msra.mxu0 %v265
  %320 = vmatpush.msra.mxu0 %v262
  %321 = vmatpush.msra.mxu0 %v259
  %322 = vmatpush.msra.mxu0 %v256
  %323 = vmatpush.msra.mxu0 %v253
  %324 = vmatpush.msra.mxu0 %v250
  %325 = vmatpush.msra.mxu0 %v247
  %326 = vmatpush.msra.mxu0 %v244
  %327 = vmatmul.f32.gmra.mxu0 0.0
  %v328 = vpop.f32.mrf.mxu0
  %v329 = vadd.f32 0.0, %v328
  %330 = vdwg.mxu0
  %331 = vmatpush.msra.mxu0 %v290
  %332 = vmatpush.msra.mxu0 %v287
  %333 = vmatpush.msra.mxu0 %v284
  %334 = vmatpush.msra.mxu0 %v281
  %335 = vmatpush.msra.mxu0 %v278
  %336 = vmatpush.msra.mxu0 %v275
  %337 = vmatpush.msra.mxu0 %v272
  %338 = vmatpush.msra.mxu0 %v269
  %339 = vmatpush.msra.mxu0 %v266
  %340 = vmatpush.msra.mxu0 %v263
  %341 = vmatpush.msra.mxu0 %v260
  %342 = vmatpush.msra.mxu0 %v257
  %343 = vmatpush.msra.mxu0 %v254
  %344 = vmatpush.msra.mxu0 %v251
  %345 = vmatpush.msra.mxu0 %v248
  %346 = vmatpush.msra.mxu0 %v245
  %347 = vmatmul.f32.gmra.mxu0 0.0
  %v348 = vpop.f32.mrf.mxu0
  %v349 = vadd.f32 0.0, %v348
  %350 = vdwg.mxu0
  %v351 = vadd.f32 %v240, %v309
  %v352 = vxor.u32 %v351, 2147483648
  %v353 = vmul.f32 %v352, 1.442695
  %v354 = vpow.pop %v353
  %v355 = vadd.f32 %v354, 1.0
  %v356 = vrcp.pop %v355
  %v357 = vmul.f32 %v355, %v356
  %v358 = vsub.f32 1.0, %v357
  %v359 = vmul.f32 %v356, %v358
  %v360 = vadd.f32 %v356, %v359
  %vm361 = vweird.f32 %v355
  %vm362 = vweird.f32 %v356
  %vm363 = vmor %vm361, %vm362
  %v364 = vsel %vm363, %v356, %v360
  %v365 = vand.u32 2147483647, %v355
  %vm366 = vcmp.eq.f32.partialorder %v365, 8.507059e+37
  %v367 = vand.u32 %v355, 2147483648
  %v368 = vor.u32 1.1754944e-38, %v367
  %v369 = vsel %vm366, %v368, %v364
  %v370 = vmul.f32 1.0, %v369
  %v371 = vadd.f32 %v241, %v329
  %v372 = vxor.u32 %v371, 2147483648
  %v373 = vmul.f32 %v372, 1.442695
  %v374 = vpow.pop %v373
  %v375 = vadd.f32 %v374, 1.0
  %v376 = vrcp.pop %v375
  %v377 = vmul.f32 %v375, %v376
  %v378 = vsub.f32 1.0, %v377
  %v379 = vmul.f32 %v376, %v378
  %v380 = vadd.f32 %v376, %v379
  %vm381 = vweird.f32 %v375
  %vm382 = vweird.f32 %v376
  %vm383 = vmor %vm381, %vm382
  %v384 = vsel %vm383, %v376, %v380
  %v385 = vand.u32 2147483647, %v375
  %vm386 = vcmp.eq.f32.partialorder %v385, 8.507059e+37
  %v387 = vand.u32 %v375, 2147483648
  %v388 = vor.u32 1.1754944e-38, %v387
  %v389 = vsel %vm386, %v388, %v384
  %v390 = vmul.f32 1.0, %v389
  %v392 = vperm.slane %v234, 0
  %v394 = vadd.f32 %v349, %v392
  %v395 = vmul.f32 %v370, %v394
  %v396 = vadd.f32 %v242, %v395
  %v397 = vtanh.pop %v396
  %v398 = vsub.f32 1.0, %v390
  %v399 = vmul.f32 %v398, %v397
  %v400 = vmul.f32 %v390, 0.0
  %v401 = vadd.f32 %v399, %v400
  %v402 = vld [vmem:[%s5] sm:$0xff]
  %v403 = vld [vmem:[%s5 + $0x8] sm:$0xff]
  %v404 = vld [vmem:[%s5 + $0x10] sm:$0xff]
  %v405 = vld [vmem:[%s5 + $0x18] sm:$0xff]
  %v406 = vld [vmem:[%s5 + $0x20] sm:$0xff]
  %v407 = vld [vmem:[%s5 + $0x28] sm:$0xff]
  %v408 = vld [vmem:[%s5 + $0x30] sm:$0xff]
  %v409 = vld [vmem:[%s5 + $0x38] sm:$0xff]
  %v410 = vld [vmem:[%s5 + $0x40] sm:$0xff]
  %v411 = vld [vmem:[%s5 + $0x48] sm:$0xff]
  %v412 = vld [vmem:[%s5 + $0x50] sm:$0xff]
  %v413 = vld [vmem:[%s5 + $0x58] sm:$0xff]
  %v414 = vld [vmem:[%s5 + $0x60] sm:$0xff]
  %v415 = vld [vmem:[%s5 + $0x68] sm:$0xff]
  %v416 = vld [vmem:[%s5 + $0x70] sm:$0xff]
  %v417 = vld [vmem:[%s5 + $0x78] sm:$0xff]
  %v418 = vld [vmem:[%s5 + $0x80] sm:$0xff]
  %v419 = vld [vmem:[%s5 + $0x88] sm:$0xff]
  %v420 = vld [vmem:[%s5 + $0x90] sm:$0xff]
  %v421 = vld [vmem:[%s5 + $0x98] sm:$0xff]
  %v422 = vld [vmem:[%s5 + $0xa0] sm:$0xff]
  %v423 = vld [vmem:[%s5 + $0xa8] sm:$0xff]
  %v424 = vld [vmem:[%s5 + $0xb0] sm:$0xff]
  %v425 = vld [vmem:[%s5 + $0xb8] sm:$0xff]
  %v426 = vld [vmem:[%s5 + $0xc0] sm:$0xff]
  %v427 = vld [vmem:[%s5 + $0xc8] sm:$0xff]
  %v428 = vld [vmem:[%s5 + $0xd0] sm:$0xff]
  %v429 = vld [vmem:[%s5 + $0xd8] sm:$0xff]
  %v430 = vld [vmem:[%s5 + $0xe0] sm:$0xff]
  %v431 = vld [vmem:[%s5 + $0xe8] sm:$0xff]
  %v432 = vld [vmem:[%s5 + $0xf0] sm:$0xff]
  %v433 = vld [vmem:[%s5 + $0xf8] sm:$0xff]
  %v434 = vld [vmem:[%s5 + $0x100] sm:$0xff]
  %v435 = vld [vmem:[%s5 + $0x108] sm:$0xff]
  %v436 = vld [vmem:[%s5 + $0x110] sm:$0xff]
  %v437 = vld [vmem:[%s5 + $0x118] sm:$0xff]
  %v438 = vld [vmem:[%s5 + $0x120] sm:$0xff]
  %v439 = vld [vmem:[%s5 + $0x128] sm:$0xff]
  %v440 = vld [vmem:[%s5 + $0x130] sm:$0xff]
  %v441 = vld [vmem:[%s5 + $0x138] sm:$0xff]
  %v442 = vld [vmem:[%s5 + $0x140] sm:$0xff]
  %v443 = vld [vmem:[%s5 + $0x148] sm:$0xff]
  %v444 = vld [vmem:[%s5 + $0x150] sm:$0xff]
  %v445 = vld [vmem:[%s5 + $0x158] sm:$0xff]
  %v446 = vld [vmem:[%s5 + $0x160] sm:$0xff]
  %v447 = vld [vmem:[%s5 + $0x168] sm:$0xff]
  %v448 = vld [vmem:[%s5 + $0x170] sm:$0xff]
  %v449 = vld [vmem:[%s5 + $0x178] sm:$0xff]
  %v450 = vld [vmem:[%s5 + $0x180] sm:$0xff]
  %v451 = vld [vmem:[%s5 + $0x188] sm:$0xff]
  %v452 = vld [vmem:[%s5 + $0x190] sm:$0xff]
  %v453 = vld [vmem:[%s5 + $0x198] sm:$0xff]
  %v454 = vld [vmem:[%s5 + $0x1a0] sm:$0xff]
  %v455 = vld [vmem:[%s5 + $0x1a8] sm:$0xff]
  %v456 = vld [vmem:[%s5 + $0x1b0] sm:$0xff]
  %v457 = vld [vmem:[%s5 + $0x1b8] sm:$0xff]
  %v458 = vld [vmem:[%s5 + $0x1c0] sm:$0xff]
  %v459 = vld [vmem:[%s5 + $0x1c8] sm:$0xff]
  %v460 = vld [vmem:[%s5 + $0x1d0] sm:$0xff]
  %v461 = vld [vmem:[%s5 + $0x1d8] sm:$0xff]
  %v462 = vld [vmem:[%s5 + $0x1e0] sm:$0xff]
  %v463 = vld [vmem:[%s5 + $0x1e8] sm:$0xff]
  %v464 = vld [vmem:[%s5 + $0x1f0] sm:$0xff]
  %v465 = vld [vmem:[%s5 + $0x1f8] sm:$0xff]
  %v466 = vld [vmem:[%s5 + $0x200] sm:$0xff]
  %v467 = vld [vmem:[%s5 + $0x208] sm:$0xff]
  %v468 = vld [vmem:[%s5 + $0x210] sm:$0xff]
  %v469 = vld [vmem:[%s5 + $0x218] sm:$0xff]
  %v470 = vld [vmem:[%s5 + $0x220] sm:$0xff]
  %v471 = vld [vmem:[%s5 + $0x228] sm:$0xff]
  %v472 = vld [vmem:[%s5 + $0x230] sm:$0xff]
  %v473 = vld [vmem:[%s5 + $0x238] sm:$0xff]
  %v474 = vld [vmem:[%s5 + $0x240] sm:$0xff]
  %v475 = vld [vmem:[%s5 + $0x248] sm:$0xff]
  %v476 = vld [vmem:[%s5 + $0x250] sm:$0xff]
  %v477 = vld [vmem:[%s5 + $0x258] sm:$0xff]
  %v478 = vld [vmem:[%s5 + $0x260] sm:$0xff]
  %v479 = vld [vmem:[%s5 + $0x268] sm:$0xff]
  %v480 = vld [vmem:[%s5 + $0x270] sm:$0xff]
  %v481 = vld [vmem:[%s5 + $0x278] sm:$0xff]
  %v482 = vld [vmem:[%s5 + $0x280] sm:$0xff]
  %v483 = vld [vmem:[%s5 + $0x288] sm:$0xff]
  %v484 = vld [vmem:[%s5 + $0x290] sm:$0xff]
  %v485 = vld [vmem:[%s5 + $0x298] sm:$0xff]
  %v486 = vld [vmem:[%s5 + $0x2a0] sm:$0xff]
  %v487 = vld [vmem:[%s5 + $0x2a8] sm:$0xff]
  %v488 = vld [vmem:[%s5 + $0x2b0] sm:$0xff]
  %v489 = vld [vmem:[%s5 + $0x2b8] sm:$0xff]
  %v490 = vld [vmem:[%s5 + $0x2c0] sm:$0xff]
  %v491 = vld [vmem:[%s5 + $0x2c8] sm:$0xff]
  %v492 = vld [vmem:[%s5 + $0x2d0] sm:$0xff]
  %v493 = vld [vmem:[%s5 + $0x2d8] sm:$0xff]
  %v494 = vld [vmem:[%s5 + $0x2e0] sm:$0xff]
  %v495 = vld [vmem:[%s5 + $0x2e8] sm:$0xff]
  %v496 = vld [vmem:[%s5 + $0x2f0] sm:$0xff]
  %v497 = vld [vmem:[%s5 + $0x2f8] sm:$0xff]
  %v499 = vperm.slane %v235, 0
  %v500 = vperm.slane %v235, 1
  %v501 = vperm.slane %v235, 2
  %505 = vmatpush.msra.mxu0 %v447
  %506 = vmatpush.msra.mxu0 %v444
  %507 = vmatpush.msra.mxu0 %v441
  %508 = vmatpush.msra.mxu0 %v438
  %509 = vmatpush.msra.mxu0 %v435
  %510 = vmatpush.msra.mxu0 %v432
  %511 = vmatpush.msra.mxu0 %v429
  %512 = vmatpush.msra.mxu0 %v426
  %513 = vmatpush.msra.mxu0 %v423
  %514 = vmatpush.msra.mxu0 %v420
  %515 = vmatpush.msra.mxu0 %v417
  %516 = vmatpush.msra.mxu0 %v414
  %517 = vmatpush.msra.mxu0 %v411
  %518 = vmatpush.msra.mxu0 %v408
  %519 = vmatpush.msra.mxu0 %v405
  %520 = vmatpush.msra.mxu0 %v402
  %521 = vmatmul.f32.gmra.mxu0 %v401
  %v522 = vpop.f32.mrf.mxu0
  %v523 = vadd.f32 %v499, %v522
  %524 = vdwg.mxu0
  %525 = vmatpush.msra.mxu0 %v495
  %526 = vmatpush.msra.mxu0 %v492
  %527 = vmatpush.msra.mxu0 %v489
  %528 = vmatpush.msra.mxu0 %v486
  %529 = vmatpush.msra.mxu0 %v483
  %530 = vmatpush.msra.mxu0 %v480
  %531 = vmatpush.msra.mxu0 %v477
  %532 = vmatpush.msra.mxu0 %v474
  %533 = vmatpush.msra.mxu0 %v471
  %534 = vmatpush.msra.mxu0 %v468
  %535 = vmatpush.msra.mxu0 %v465
  %536 = vmatpush.msra.mxu0 %v462
  %537 = vmatpush.msra.mxu0 %v459
  %538 = vmatpush.msra.mxu0 %v456
  %539 = vmatpush.msra.mxu0 %v453
  %540 = vmatpush.msra.mxu0 %v450
  %541 = vmatmul.f32.gmra.mxu0 0.0
  %v542 = vpop.f32.mrf.mxu0
  %v543 = vadd.f32 %v523, %v542
  %544 = vdwg.mxu0
  %545 = vmatpush.msra.mxu0 %v448
  %546 = vmatpush.msra.mxu0 %v445
  %547 = vmatpush.msra.mxu0 %v442
  %548 = vmatpush.msra.mxu0 %v439
  %549 = vmatpush.msra.mxu0 %v436
  %550 = vmatpush.msra.mxu0 %v433
  %551 = vmatpush.msra.mxu0 %v430
  %552 = vmatpush.msra.mxu0 %v427
  %553 = vmatpush.msra.mxu0 %v424
  %554 = vmatpush.msra.mxu0 %v421
  %555 = vmatpush.msra.mxu0 %v418
  %556 = vmatpush.msra.mxu0 %v415
  %557 = vmatpush.msra.mxu0 %v412
  %558 = vmatpush.msra.mxu0 %v409
  %559 = vmatpush.msra.mxu0 %v406
  %560 = vmatpush.msra.mxu0 %v403
  %561 = vmatmul.f32.gmra.mxu0 %v401
  %v562 = vpop.f32.mrf.mxu0
  %v563 = vadd.f32 %v500, %v562
  %564 = vdwg.mxu0
  %565 = vmatpush.msra.mxu0 %v496
  %566 = vmatpush.msra.mxu0 %v493
  %567 = vmatpush.msra.mxu0 %v490
  %568 = vmatpush.msra.mxu0 %v487
  %569 = vmatpush.msra.mxu0 %v484
  %570 = vmatpush.msra.mxu0 %v481
  %571 = vmatpush.msra.mxu0 %v478
  %572 = vmatpush.msra.mxu0 %v475
  %573 = vmatpush.msra.mxu0 %v472
  %574 = vmatpush.msra.mxu0 %v469
  %575 = vmatpush.msra.mxu0 %v466
  %576 = vmatpush.msra.mxu0 %v463
  %577 = vmatpush.msra.mxu0 %v460
  %578 = vmatpush.msra.mxu0 %v457
  %579 = vmatpush.msra.mxu0 %v454
  %580 = vmatpush.msra.mxu0 %v451
  %581 = vmatmul.f32.gmra.mxu0 0.0
  %v582 = vpop.f32.mrf.mxu0
  %v583 = vadd.f32 %v563, %v582
  %584 = vdwg.mxu0
  %585 = vmatpush.msra.mxu0 %v449
  %586 = vmatpush.msra.mxu0 %v446
  %587 = vmatpush.msra.mxu0 %v443
  %588 = vmatpush.msra.mxu0 %v440
  %589 = vmatpush.msra.mxu0 %v437
  %590 = vmatpush.msra.mxu0 %v434
  %591 = vmatpush.msra.mxu0 %v431
  %592 = vmatpush.msra.mxu0 %v428
  %593 = vmatpush.msra.mxu0 %v425
  %594 = vmatpush.msra.mxu0 %v422
  %595 = vmatpush.msra.mxu0 %v419
  %596 = vmatpush.msra.mxu0 %v416
  %597 = vmatpush.msra.mxu0 %v413
  %598 = vmatpush.msra.mxu0 %v410
  %599 = vmatpush.msra.mxu0 %v407
  %600 = vmatpush.msra.mxu0 %v404
  %601 = vmatmul.f32.gmra.mxu0 %v401
  %v602 = vpop.f32.mrf.mxu0
  %v603 = vadd.f32 %v501, %v602
  %604 = vdwg.mxu0
  %605 = vmatpush.msra.mxu0 %v497
  %606 = vmatpush.msra.mxu0 %v494
  %607 = vmatpush.msra.mxu0 %v491
  %608 = vmatpush.msra.mxu0 %v488
  %609 = vmatpush.msra.mxu0 %v485
  %610 = vmatpush.msra.mxu0 %v482
  %611 = vmatpush.msra.mxu0 %v479
  %612 = vmatpush.msra.mxu0 %v476
  %613 = vmatpush.msra.mxu0 %v473
  %614 = vmatpush.msra.mxu0 %v470
  %615 = vmatpush.msra.mxu0 %v467
  %616 = vmatpush.msra.mxu0 %v464
  %617 = vmatpush.msra.mxu0 %v461
  %618 = vmatpush.msra.mxu0 %v458
  %619 = vmatpush.msra.mxu0 %v455
  %620 = vmatpush.msra.mxu0 %v452
  %621 = vmatmul.f32.gmra.mxu0 0.0
  %v622 = vpop.f32.mrf.mxu0
  %v623 = vadd.f32 %v603, %v622
  %624 = vdwg.mxu0
  %v625 = vld [vmem:[%s6] sm:$0xff]
  %v626 = vld [vmem:[%s6 + $0x8] sm:$0xff]
  %v627 = vld [vmem:[%s6 + $0x10] sm:$0xff]
  %v628 = vld [vmem:[%s6 + $0x18] sm:$0xff]
  %v629 = vld [vmem:[%s6 + $0x20] sm:$0xff]
  %v630 = vld [vmem:[%s6 + $0x28] sm:$0xff]
  %v631 = vld [vmem:[%s6 + $0x30] sm:$0xff]
  %v632 = vld [vmem:[%s6 + $0x38] sm:$0xff]
  %v633 = vld [vmem:[%s6 + $0x40] sm:$0xff]
  %v634 = vld [vmem:[%s6 + $0x48] sm:$0xff]
  %v635 = vld [vmem:[%s6 + $0x50] sm:$0xff]
  %v636 = vld [vmem:[%s6 + $0x58] sm:$0xff]
  %v637 = vld [vmem:[%s6 + $0x60] sm:$0xff]
  %v638 = vld [vmem:[%s6 + $0x68] sm:$0xff]
  %v639 = vld [vmem:[%s6 + $0x70] sm:$0xff]
  %v640 = vld [vmem:[%s6 + $0x78] sm:$0xff]
  %v641 = vxor.u32 %v543, 2147483648
  %v642 = vmul.f32 %v641, 1.442695
  %v643 = vpow.pop %v642
  %v644 = vadd.f32 %v643, 1.0
  %v645 = vrcp.pop %v644
  %v646 = vmul.f32 %v644, %v645
  %v647 = vsub.f32 1.0, %v646
  %v648 = vmul.f32 %v645, %v647
  %v649 = vadd.f32 %v645, %v648
  %vm650 = vweird.f32 %v644
  %vm651 = vweird.f32 %v645
  %vm652 = vmor %vm650, %vm651
  %v653 = vsel %vm652, %v645, %v649
  %v654 = vand.u32 2147483647, %v644
  %vm655 = vcmp.eq.f32.partialorder %v654, 8.507059e+37
  %v656 = vand.u32 %v644, 2147483648
  %v657 = vor.u32 1.1754944e-38, %v656
  %v658 = vsel %vm655, %v657, %v653
  %v659 = vmul.f32 1.0, %v658
  %v660 = vxor.u32 %v583, 2147483648
  %v661 = vmul.f32 %v660, 1.442695
  %v662 = vpow.pop %v661
  %v663 = vadd.f32 %v662, 1.0
  %v664 = vrcp.pop %v663
  %v665 = vmul.f32 %v663, %v664
  %v666 = vsub.f32 1.0, %v665
  %v667 = vmul.f32 %v664, %v666
  %v668 = vadd.f32 %v664, %v667
  %vm669 = vweird.f32 %v663
  %vm670 = vweird.f32 %v664
  %vm671 = vmor %vm669, %vm670
  %v672 = vsel %vm671, %v664, %v668
  %v673 = vand.u32 2147483647, %v663
  %vm674 = vcmp.eq.f32.partialorder %v673, 8.507059e+37
  %v675 = vand.u32 %v663, 2147483648
  %v676 = vor.u32 1.1754944e-38, %v675
  %v677 = vsel %vm674, %v676, %v672
  %v678 = vmul.f32 1.0, %v677
  %v680 = vperm.slane %v236, 0
  %682 = vmatpush.msra.mxu0 %v640
  %683 = vmatpush.msra.mxu0 %v639
  %684 = vmatpush.msra.mxu0 %v638
  %685 = vmatpush.msra.mxu0 %v637
  %686 = vmatpush.msra.mxu0 %v636
  %687 = vmatpush.msra.mxu0 %v635
  %688 = vmatpush.msra.mxu0 %v634
  %689 = vmatpush.msra.mxu0 %v633
  %690 = vmatpush.msra.mxu0 %v632
  %691 = vmatpush.msra.mxu0 %v631
  %692 = vmatpush.msra.mxu0 %v630
  %693 = vmatpush.msra.mxu0 %v629
  %694 = vmatpush.msra.mxu0 %v628
  %695 = vmatpush.msra.mxu0 %v627
  %696 = vmatpush.msra.mxu0 %v626
  %697 = vmatpush.msra.mxu0 %v625
  %698 = vmatmul.f32.gmra.mxu0 0.0
  %v699 = vpop.f32.mrf.mxu0
  %v700 = vadd.f32 %v680, %v699
  %701 = vdwg.mxu0
  %v702 = vmul.f32 %v659, %v700
  %v703 = vadd.f32 %v623, %v702
  %v704 = vtanh.pop %v703
  %v705 = vsub.f32 1.0, %v678
  %v706 = vmul.f32 %v705, %v704
  %v707 = vmul.f32 %v678, 0.0
  %v708 = vadd.f32 %v706, %v707
  %s709 = smul.u32 1, 3
  %s710 = smul.addr %s709, 8
  %s711 = scalar_lea.vmem [#allocation2], %s710
  %v712 = vld [vmem:[%s711] sm:$0xff]
  %v713 = vld [vmem:[%s711 + $0x8] sm:$0xff]
  %v714 = vld [vmem:[%s711 + $0x10] sm:$0xff]
  %715 = vmatpush.msra.mxu0 %v288
  %716 = vmatpush.msra.mxu0 %v285
  %717 = vmatpush.msra.mxu0 %v282
  %718 = vmatpush.msra.mxu0 %v279
  %719 = vmatpush.msra.mxu0 %v276
  %720 = vmatpush.msra.mxu0 %v273
  %721 = vmatpush.msra.mxu0 %v270
  %722 = vmatpush.msra.mxu0 %v267
  %723 = vmatpush.msra.mxu0 %v264
  %724 = vmatpush.msra.mxu0 %v261
  %725 = vmatpush.msra.mxu0 %v258
  %726 = vmatpush.msra.mxu0 %v255
  %727 = vmatpush.msra.mxu0 %v252
  %728 = vmatpush.msra.mxu0 %v249
  %729 = vmatpush.msra.mxu0 %v246
  %730 = vmatpush.msra.mxu0 %v243
  %731 = vmatmul.f32.gmra.mxu0 %v401
  %v732 = vpop.f32.mrf.mxu0
  %v733 = vadd.f32 0.0, %v732
  %734 = vdwg.mxu0
  %735 = vmatpush.msra.mxu0 %v289
  %736 = vmatpush.msra.mxu0 %v286
  %737 = vmatpush.msra.mxu0 %v283
  %738 = vmatpush.msra.mxu0 %v280
  %739 = vmatpush.msra.mxu0 %v277
  %740 = vmatpush.msra.mxu0 %v274
  %741 = vmatpush.msra.mxu0 %v271
  %742 = vmatpush.msra.mxu0 %v268
  %743 = vmatpush.msra.mxu0 %v265
  %744 = vmatpush.msra.mxu0 %v262
  %745 = vmatpush.msra.mxu0 %v259
  %746 = vmatpush.msra.mxu0 %v256
  %747 = vmatpush.msra.mxu0 %v253
  %748 = vmatpush.msra.mxu0 %v250
  %749 = vmatpush.msra.mxu0 %v247
  %750 = vmatpush.msra.mxu0 %v244
  %751 = vmatmul.f32.gmra.mxu0 %v401
  %v752 = vpop.f32.mrf.mxu0
  %v753 = vadd.f32 0.0, %v752
  %754 = vdwg.mxu0
  %755 = vmatpush.msra.mxu0 %v290
  %756 = vmatpush.msra.mxu0 %v287
  %757 = vmatpush.msra.mxu0 %v284
  %758 = vmatpush.msra.mxu0 %v281
  %759 = vmatpush.msra.mxu0 %v278
  %760 = vmatpush.msra.mxu0 %v275
  %761 = vmatpush.msra.mxu0 %v272
  %762 = vmatpush.msra.mxu0 %v269
  %763 = vmatpush.msra.mxu0 %v266
  %764 = vmatpush.msra.mxu0 %v263
  %765 = vmatpush.msra.mxu0 %v260
  %766 = vmatpush.msra.mxu0 %v257
  %767 = vmatpush.msra.mxu0 %v254
  %768 = vmatpush.msra.mxu0 %v251
  %769 = vmatpush.msra.mxu0 %v248
  %770 = vmatpush.msra.mxu0 %v245
  %771 = vmatmul.f32.gmra.mxu0 %v401
  %v772 = vpop.f32.mrf.mxu0
  %v773 = vadd.f32 0.0, %v772
  %774 = vdwg.mxu0
  %v775 = vadd.f32 %v712, %v733
  %v776 = vxor.u32 %v775, 2147483648
  %v777 = vmul.f32 %v776, 1.442695
  %v778 = vpow.pop %v777
  %v779 = vadd.f32 %v778, 1.0
  %v780 = vrcp.pop %v779
  %v781 = vmul.f32 %v779, %v780
  %v782 = vsub.f32 1.0, %v781
  %v783 = vmul.f32 %v780, %v782
  %v784 = vadd.f32 %v780, %v783
  %vm785 = vweird.f32 %v779
  %vm786 = vweird.f32 %v780
  %vm787 = vmor %vm785, %vm786
  %v788 = vsel %vm787, %v780, %v784
  %v789 = vand.u32 2147483647, %v779
  %vm790 = vcmp.eq.f32.partialorder %v789, 8.507059e+37
  %v791 = vand.u32 %v779, 2147483648
  %v792 = vor.u32 1.1754944e-38, %v791
  %v793 = vsel %vm790, %v792, %v788
  %v794 = vmul.f32 1.0, %v793
  %v795 = vadd.f32 %v713, %v753
  %v796 = vxor.u32 %v795, 2147483648
  %v797 = vmul.f32 %v796, 1.442695
  %v798 = vpow.pop %v797
  %v799 = vadd.f32 %v798, 1.0
  %v800 = vrcp.pop %v799
  %v801 = vmul.f32 %v799, %v800
  %v802 = vsub.f32 1.0, %v801
  %v803 = vmul.f32 %v800, %v802
  %v804 = vadd.f32 %v800, %v803
  %vm805 = vweird.f32 %v799
  %vm806 = vweird.f32 %v800
  %vm807 = vmor %vm805, %vm806
  %v808 = vsel %vm807, %v800, %v804
  %v809 = vand.u32 2147483647, %v799
  %vm810 = vcmp.eq.f32.partialorder %v809, 8.507059e+37
  %v811 = vand.u32 %v799, 2147483648
  %v812 = vor.u32 1.1754944e-38, %v811
  %v813 = vsel %vm810, %v812, %v808
  %v814 = vmul.f32 1.0, %v813
  %v815 = vadd.f32 %v773, %v392
  %v816 = vmul.f32 %v794, %v815
  %v817 = vadd.f32 %v714, %v816
  %v818 = vtanh.pop %v817
  %v819 = vsub.f32 1.0, %v814
  %v820 = vmul.f32 %v819, %v818
  %v821 = vmul.f32 %v814, %v401
  %v822 = vadd.f32 %v820, %v821
  %823 = vmatpush.msra.mxu0 %v447
  %824 = vmatpush.msra.mxu0 %v444
  %825 = vmatpush.msra.mxu0 %v441
  %826 = vmatpush.msra.mxu0 %v438
  %827 = vmatpush.msra.mxu0 %v435
  %828 = vmatpush.msra.mxu0 %v432
  %829 = vmatpush.msra.mxu0 %v429
  %830 = vmatpush.msra.mxu0 %v426
  %831 = vmatpush.msra.mxu0 %v423
  %832 = vmatpush.msra.mxu0 %v420
  %833 = vmatpush.msra.mxu0 %v417
  %834 = vmatpush.msra.mxu0 %v414
  %835 = vmatpush.msra.mxu0 %v411
  %836 = vmatpush.msra.mxu0 %v408
  %837 = vmatpush.msra.mxu0 %v405
  %838 = vmatpush.msra.mxu0 %v402
  %839 = vmatmul.f32.gmra.mxu0 %v822
  %v840 = vpop.f32.mrf.mxu0
  %v841 = vadd.f32 %v499, %v840
  %842 = vdwg.mxu0
  %843 = vmatpush.msra.mxu0 %v495
  %844 = vmatpush.msra.mxu0 %v492
  %845 = vmatpush.msra.mxu0 %v489
  %846 = vmatpush.msra.mxu0 %v486
  %847 = vmatpush.msra.mxu0 %v483
  %848 = vmatpush.msra.mxu0 %v480
  %849 = vmatpush.msra.mxu0 %v477
  %850 = vmatpush.msra.mxu0 %v474
  %851 = vmatpush.msra.mxu0 %v471
  %852 = vmatpush.msra.mxu0 %v468
  %853 = vmatpush.msra.mxu0 %v465
  %854 = vmatpush.msra.mxu0 %v462
  %855 = vmatpush.msra.mxu0 %v459
  %856 = vmatpush.msra.mxu0 %v456
  %857 = vmatpush.msra.mxu0 %v453
  %858 = vmatpush.msra.mxu0 %v450
  %859 = vmatmul.f32.gmra.mxu0 %v708
  %v860 = vpop.f32.mrf.mxu0
  %v861 = vadd.f32 %v841, %v860
  %862 = vdwg.mxu0
  %863 = vmatpush.msra.mxu0 %v448
  %864 = vmatpush.msra.mxu0 %v445
  %865 = vmatpush.msra.mxu0 %v442
  %866 = vmatpush.msra.mxu0 %v439
  %867 = vmatpush.msra.mxu0 %v436
  %868 = vmatpush.msra.mxu0 %v433
  %869 = vmatpush.msra.mxu0 %v430
  %870 = vmatpush.msra.mxu0 %v427
  %871 = vmatpush.msra.mxu0 %v424
  %872 = vmatpush.msra.mxu0 %v421
  %873 = vmatpush.msra.mxu0 %v418
  %874 = vmatpush.msra.mxu0 %v415
  %875 = vmatpush.msra.mxu0 %v412
  %876 = vmatpush.msra.mxu0 %v409
  %877 = vmatpush.msra.mxu0 %v406
  %878 = vmatpush.msra.mxu0 %v403
  %879 = vmatmul.f32.gmra.mxu0 %v822
  %v880 = vpop.f32.mrf.mxu0
  %v881 = vadd.f32 %v500, %v880
  %882 = vdwg.mxu0
  %883 = vmatpush.msra.mxu0 %v496
  %884 = vmatpush.msra.mxu0 %v493
  %885 = vmatpush.msra.mxu0 %v490
  %886 = vmatpush.msra.mxu0 %v487
  %887 = vmatpush.msra.mxu0 %v484
  %888 = vmatpush.msra.mxu0 %v481
  %889 = vmatpush.msra.mxu0 %v478
  %890 = vmatpush.msra.mxu0 %v475
  %891 = vmatpush.msra.mxu0 %v472
  %892 = vmatpush.msra.mxu0 %v469
  %893 = vmatpush.msra.mxu0 %v466
  %894 = vmatpush.msra.mxu0 %v463
  %895 = vmatpush.msra.mxu0 %v460
  %896 = vmatpush.msra.mxu0 %v457
  %897 = vmatpush.msra.mxu0 %v454
  %898 = vmatpush.msra.mxu0 %v451
  %899 = vmatmul.f32.gmra.mxu0 %v708
  %v900 = vpop.f32.mrf.mxu0
  %v901 = vadd.f32 %v881, %v900
  %902 = vdwg.mxu0
  %903 = vmatpush.msra.mxu0 %v449
  %904 = vmatpush.msra.mxu0 %v446
  %905 = vmatpush.msra.mxu0 %v443
  %906 = vmatpush.msra.mxu0 %v440
  %907 = vmatpush.msra.mxu0 %v437
  %908 = vmatpush.msra.mxu0 %v434
  %909 = vmatpush.msra.mxu0 %v431
  %910 = vmatpush.msra.mxu0 %v428
  %911 = vmatpush.msra.mxu0 %v425
  %912 = vmatpush.msra.mxu0 %v422
  %913 = vmatpush.msra.mxu0 %v419
  %914 = vmatpush.msra.mxu0 %v416
  %915 = vmatpush.msra.mxu0 %v413
  %916 = vmatpush.msra.mxu0 %v410
  %917 = vmatpush.msra.mxu0 %v407
  %918 = vmatpush.msra.mxu0 %v404
  %919 = vmatmul.f32.gmra.mxu0 %v822
  %v920 = vpop.f32.mrf.mxu0
  %v921 = vadd.f32 %v501, %v920
  %922 = vdwg.mxu0
  %923 = vmatpush.msra.mxu0 %v497
  %924 = vmatpush.msra.mxu0 %v494
  %925 = vmatpush.msra.mxu0 %v491
  %926 = vmatpush.msra.mxu0 %v488
  %927 = vmatpush.msra.mxu0 %v485
  %928 = vmatpush.msra.mxu0 %v482
  %929 = vmatpush.msra.mxu0 %v479
  %930 = vmatpush.msra.mxu0 %v476
  %931 = vmatpush.msra.mxu0 %v473
  %932 = vmatpush.msra.mxu0 %v470
  %933 = vmatpush.msra.mxu0 %v467
  %934 = vmatpush.msra.mxu0 %v464
  %935 = vmatpush.msra.mxu0 %v461
  %936 = vmatpush.msra.mxu0 %v458
  %937 = vmatpush.msra.mxu0 %v455
  %938 = vmatpush.msra.mxu0 %v452
  %939 = vmatmul.f32.gmra.mxu0 %v708
  %v940 = vpop.f32.mrf.mxu0
  %v941 = vadd.f32 %v921, %v940
  %942 = vdwg.mxu0
  %v943 = vxor.u32 %v861, 2147483648
  %v944 = vmul.f32 %v943, 1.442695
  %v945 = vpow.pop %v944
  %v946 = vadd.f32 %v945, 1.0
  %v947 = vrcp.pop %v946
  %v948 = vmul.f32 %v946, %v947
  %v949 = vsub.f32 1.0, %v948
  %v950 = vmul.f32 %v947, %v949
  %v951 = vadd.f32 %v947, %v950
  %vm952 = vweird.f32 %v946
  %vm953 = vweird.f32 %v947
  %vm954 = vmor %vm952, %vm953
  %v955 = vsel %vm954, %v947, %v951
  %v956 = vand.u32 2147483647, %v946
  %vm957 = vcmp.eq.f32.partialorder %v956, 8.507059e+37
  %v958 = vand.u32 %v946, 2147483648
  %v959 = vor.u32 1.1754944e-38, %v958
  %v960 = vsel %vm957, %v959, %v955
  %v961 = vmul.f32 1.0, %v960
  %v962 = vxor.u32 %v901, 2147483648
  %v963 = vmul.f32 %v962, 1.442695
  %v964 = vpow.pop %v963
  %v965 = vadd.f32 %v964, 1.0
  %v966 = vrcp.pop %v965
  %v967 = vmul.f32 %v965, %v966
  %v968 = vsub.f32 1.0, %v967
  %v969 = vmul.f32 %v966, %v968
  %v970 = vadd.f32 %v966, %v969
  %vm971 = vweird.f32 %v965
  %vm972 = vweird.f32 %v966
  %vm973 = vmor %vm971, %vm972
  %v974 = vsel %vm973, %v966, %v970
  %v975 = vand.u32 2147483647, %v965
  %vm976 = vcmp.eq.f32.partialorder %v975, 8.507059e+37
  %v977 = vand.u32 %v965, 2147483648
  %v978 = vor.u32 1.1754944e-38, %v977
  %v979 = vsel %vm976, %v978, %v974
  %v980 = vmul.f32 1.0, %v979
  %981 = vmatpush.msra.mxu0 %v640
  %982 = vmatpush.msra.mxu0 %v639
  %983 = vmatpush.msra.mxu0 %v638
  %984 = vmatpush.msra.mxu0 %v637
  %985 = vmatpush.msra.mxu0 %v636
  %986 = vmatpush.msra.mxu0 %v635
  %987 = vmatpush.msra.mxu0 %v634
  %988 = vmatpush.msra.mxu0 %v633
  %989 = vmatpush.msra.mxu0 %v632
  %990 = vmatpush.msra.mxu0 %v631
  %991 = vmatpush.msra.mxu0 %v630
  %992 = vmatpush.msra.mxu0 %v629
  %993 = vmatpush.msra.mxu0 %v628
  %994 = vmatpush.msra.mxu0 %v627
  %995 = vmatpush.msra.mxu0 %v626
  %996 = vmatpush.msra.mxu0 %v625
  %997 = vmatmul.f32.gmra.mxu0 %v708
  %v998 = vpop.f32.mrf.mxu0
  %v999 = vadd.f32 %v680, %v998
  %1000 = vdwg.mxu0
  %v1001 = vmul.f32 %v961, %v999
  %v1002 = vadd.f32 %v941, %v1001
  %v1003 = vtanh.pop %v1002
  %v1004 = vsub.f32 1.0, %v980
  %v1005 = vmul.f32 %v1004, %v1003
  %v1006 = vmul.f32 %v980, %v708
  %v1007 = vadd.f32 %v1005, %v1006
  %s1008 = smul.u32 2, 3
  %s1009 = smul.addr %s1008, 8
  %s1010 = scalar_lea.vmem [#allocation2], %s1009
  %v1011 = vld [vmem:[%s1010] sm:$0xff]
  %v1012 = vld [vmem:[%s1010 + $0x8] sm:$0xff]
  %v1013 = vld [vmem:[%s1010 + $0x10] sm:$0xff]
  %1014 = vmatpush.msra.mxu0 %v288
  %1015 = vmatpush.msra.mxu0 %v285
  %1016 = vmatpush.msra.mxu0 %v282
  %1017 = vmatpush.msra.mxu0 %v279
  %1018 = vmatpush.msra.mxu0 %v276
  %1019 = vmatpush.msra.mxu0 %v273
  %1020 = vmatpush.msra.mxu0 %v270
  %1021 = vmatpush.msra.mxu0 %v267
  %1022 = vmatpush.msra.mxu0 %v264
  %1023 = vmatpush.msra.mxu0 %v261
  %1024 = vmatpush.msra.mxu0 %v258
  %1025 = vmatpush.msra.mxu0 %v255
  %1026 = vmatpush.msra.mxu0 %v252
  %1027 = vmatpush.msra.mxu0 %v249
  %1028 = vmatpush.msra.mxu0 %v246
  %1029 = vmatpush.msra.mxu0 %v243
  %1030 = vmatmul.f32.gmra.mxu0 %v822
  %v1031 = vpop.f32.mrf.mxu0
  %v1032 = vadd.f32 0.0, %v1031
  %1033 = vdwg.mxu0
  %1034 = vmatpush.msra.mxu0 %v289
  %1035 = vmatpush.msra.mxu0 %v286
  %1036 = vmatpush.msra.mxu0 %v283
  %1037 = vmatpush.msra.mxu0 %v280
  %1038 = vmatpush.msra.mxu0 %v277
  %1039 = vmatpush.msra.mxu0 %v274
  %1040 = vmatpush.msra.mxu0 %v271
  %1041 = vmatpush.msra.mxu0 %v268
  %1042 = vmatpush.msra.mxu0 %v265
  %1043 = vmatpush.msra.mxu0 %v262
  %1044 = vmatpush.msra.mxu0 %v259
  %1045 = vmatpush.msra.mxu0 %v256
  %1046 = vmatpush.msra.mxu0 %v253
  %1047 = vmatpush.msra.mxu0 %v250
  %1048 = vmatpush.msra.mxu0 %v247
  %1049 = vmatpush.msra.mxu0 %v244
  %1050 = vmatmul.f32.gmra.mxu0 %v822
  %v1051 = vpop.f32.mrf.mxu0
  %v1052 = vadd.f32 0.0, %v1051
  %1053 = vdwg.mxu0
  %1054 = vmatpush.msra.mxu0 %v290
  %1055 = vmatpush.msra.mxu0 %v287
  %1056 = vmatpush.msra.mxu0 %v284
  %1057 = vmatpush.msra.mxu0 %v281
  %1058 = vmatpush.msra.mxu0 %v278
  %1059 = vmatpush.msra.mxu0 %v275
  %1060 = vmatpush.msra.mxu0 %v272
  %1061 = vmatpush.msra.mxu0 %v269
  %1062 = vmatpush.msra.mxu0 %v266
  %1063 = vmatpush.msra.mxu0 %v263
  %1064 = vmatpush.msra.mxu0 %v260
  %1065 = vmatpush.msra.mxu0 %v257
  %1066 = vmatpush.msra.mxu0 %v254
  %1067 = vmatpush.msra.mxu0 %v251
  %1068 = vmatpush.msra.mxu0 %v248
  %1069 = vmatpush.msra.mxu0 %v245
  %1070 = vmatmul.f32.gmra.mxu0 %v822
  %v1071 = vpop.f32.mrf.mxu0
  %v1072 = vadd.f32 0.0, %v1071
  %1073 = vdwg.mxu0
  %v1074 = vadd.f32 %v1011, %v1032
  %v1075 = vxor.u32 %v1074, 2147483648
  %v1076 = vmul.f32 %v1075, 1.442695
  %v1077 = vpow.pop %v1076
  %v1078 = vadd.f32 %v1077, 1.0
  %v1079 = vrcp.pop %v1078
  %v1080 = vmul.f32 %v1078, %v1079
  %v1081 = vsub.f32 1.0, %v1080
  %v1082 = vmul.f32 %v1079, %v1081
  %v1083 = vadd.f32 %v1079, %v1082
  %vm1084 = vweird.f32 %v1078
  %vm1085 = vweird.f32 %v1079
  %vm1086 = vmor %vm1084, %vm1085
  %v1087 = vsel %vm1086, %v1079, %v1083
  %v1088 = vand.u32 2147483647, %v1078
  %vm1089 = vcmp.eq.f32.partialorder %v1088, 8.507059e+37
  %v1090 = vand.u32 %v1078, 2147483648
  %v1091 = vor.u32 1.1754944e-38, %v1090
  %v1092 = vsel %vm1089, %v1091, %v1087
  %v1093 = vmul.f32 1.0, %v1092
  %v1094 = vadd.f32 %v1012, %v1052
  %v1095 = vxor.u32 %v1094, 2147483648
  %v1096 = vmul.f32 %v1095, 1.442695
  %v1097 = vpow.pop %v1096
  %v1098 = vadd.f32 %v1097, 1.0
  %v1099 = vrcp.pop %v1098
  %v1100 = vmul.f32 %v1098, %v1099
  %v1101 = vsub.f32 1.0, %v1100
  %v1102 = vmul.f32 %v1099, %v1101
  %v1103 = vadd.f32 %v1099, %v1102
  %vm1104 = vweird.f32 %v1098
  %vm1105 = vweird.f32 %v1099
  %vm1106 = vmor %vm1104, %vm1105
  %v1107 = vsel %vm1106, %v1099, %v1103
  %v1108 = vand.u32 2147483647, %v1098
  %vm1109 = vcmp.eq.f32.partialorder %v1108, 8.507059e+37
  %v1110 = vand.u32 %v1098, 2147483648
  %v1111 = vor.u32 1.1754944e-38, %v1110
  %v1112 = vsel %vm1109, %v1111, %v1107
  %v1113 = vmul.f32 1.0, %v1112
  %v1114 = vadd.f32 %v1072, %v392
  %v1115 = vmul.f32 %v1093, %v1114
  %v1116 = vadd.f32 %v1013, %v1115
  %v1117 = vtanh.pop %v1116
  %v1118 = vsub.f32 1.0, %v1113
  %v1119 = vmul.f32 %v1118, %v1117
  %v1120 = vmul.f32 %v1113, %v822
  %v1121 = vadd.f32 %v1119, %v1120
  %1122 = vmatpush.msra.mxu0 %v447
  %1123 = vmatpush.msra.mxu0 %v444
  %1124 = vmatpush.msra.mxu0 %v441
  %1125 = vmatpush.msra.mxu0 %v438
  %1126 = vmatpush.msra.mxu0 %v435
  %1127 = vmatpush.msra.mxu0 %v432
  %1128 = vmatpush.msra.mxu0 %v429
  %1129 = vmatpush.msra.mxu0 %v426
  %1130 = vmatpush.msra.mxu0 %v423
  %1131 = vmatpush.msra.mxu0 %v420
  %1132 = vmatpush.msra.mxu0 %v417
  %1133 = vmatpush.msra.mxu0 %v414
  %1134 = vmatpush.msra.mxu0 %v411
  %1135 = vmatpush.msra.mxu0 %v408
  %1136 = vmatpush.msra.mxu0 %v405
  %1137 = vmatpush.msra.mxu0 %v402
  %1138 = vmatmul.f32.gmra.mxu0 %v1121
  %v1139 = vpop.f32.mrf.mxu0
  %v1140 = vadd.f32 %v499, %v1139
  %1141 = vdwg.mxu0
  %1142 = vmatpush.msra.mxu0 %v495
  %1143 = vmatpush.msra.mxu0 %v492
  %1144 = vmatpush.msra.mxu0 %v489
  %1145 = vmatpush.msra.mxu0 %v486
  %1146 = vmatpush.msra.mxu0 %v483
  %1147 = vmatpush.msra.mxu0 %v480
  %1148 = vmatpush.msra.mxu0 %v477
  %1149 = vmatpush.msra.mxu0 %v474
  %1150 = vmatpush.msra.mxu0 %v471
  %1151 = vmatpush.msra.mxu0 %v468
  %1152 = vmatpush.msra.mxu0 %v465
  %1153 = vmatpush.msra.mxu0 %v462
  %1154 = vmatpush.msra.mxu0 %v459
  %1155 = vmatpush.msra.mxu0 %v456
  %1156 = vmatpush.msra.mxu0 %v453
  %1157 = vmatpush.msra.mxu0 %v450
  %1158 = vmatmul.f32.gmra.mxu0 %v1007
  %v1159 = vpop.f32.mrf.mxu0
  %v1160 = vadd.f32 %v1140, %v1159
  %1161 = vdwg.mxu0
  %1162 = vmatpush.msra.mxu0 %v448
  %1163 = vmatpush.msra.mxu0 %v445
  %1164 = vmatpush.msra.mxu0 %v442
  %1165 = vmatpush.msra.mxu0 %v439
  %1166 = vmatpush.msra.mxu0 %v436
  %1167 = vmatpush.msra.mxu0 %v433
  %1168 = vmatpush.msra.mxu0 %v430
  %1169 = vmatpush.msra.mxu0 %v427
  %1170 = vmatpush.msra.mxu0 %v424
  %1171 = vmatpush.msra.mxu0 %v421
  %1172 = vmatpush.msra.mxu0 %v418
  %1173 = vmatpush.msra.mxu0 %v415
  %1174 = vmatpush.msra.mxu0 %v412
  %1175 = vmatpush.msra.mxu0 %v409
  %1176 = vmatpush.msra.mxu0 %v406
  %1177 = vmatpush.msra.mxu0 %v403
  %1178 = vmatmul.f32.gmra.mxu0 %v1121
  %v1179 = vpop.f32.mrf.mxu0
  %v1180 = vadd.f32 %v500, %v1179
  %1181 = vdwg.mxu0
  %1182 = vmatpush.msra.mxu0 %v496
  %1183 = vmatpush.msra.mxu0 %v493
  %1184 = vmatpush.msra.mxu0 %v490
  %1185 = vmatpush.msra.mxu0 %v487
  %1186 = vmatpush.msra.mxu0 %v484
  %1187 = vmatpush.msra.mxu0 %v481
  %1188 = vmatpush.msra.mxu0 %v478
  %1189 = vmatpush.msra.mxu0 %v475
  %1190 = vmatpush.msra.mxu0 %v472
  %1191 = vmatpush.msra.mxu0 %v469
  %1192 = vmatpush.msra.mxu0 %v466
  %1193 = vmatpush.msra.mxu0 %v463
  %1194 = vmatpush.msra.mxu0 %v460
  %1195 = vmatpush.msra.mxu0 %v457
  %1196 = vmatpush.msra.mxu0 %v454
  %1197 = vmatpush.msra.mxu0 %v451
  %1198 = vmatmul.f32.gmra.mxu0 %v1007
  %v1199 = vpop.f32.mrf.mxu0
  %v1200 = vadd.f32 %v1180, %v1199
  %1201 = vdwg.mxu0
  %1202 = vmatpush.msra.mxu0 %v449
  %1203 = vmatpush.msra.mxu0 %v446
  %1204 = vmatpush.msra.mxu0 %v443
  %1205 = vmatpush.msra.mxu0 %v440
  %1206 = vmatpush.msra.mxu0 %v437
  %1207 = vmatpush.msra.mxu0 %v434
  %1208 = vmatpush.msra.mxu0 %v431
  %1209 = vmatpush.msra.mxu0 %v428
  %1210 = vmatpush.msra.mxu0 %v425
  %1211 = vmatpush.msra.mxu0 %v422
  %1212 = vmatpush.msra.mxu0 %v419
  %1213 = vmatpush.msra.mxu0 %v416
  %1214 = vmatpush.msra.mxu0 %v413
  %1215 = vmatpush.msra.mxu0 %v410
  %1216 = vmatpush.msra.mxu0 %v407
  %1217 = vmatpush.msra.mxu0 %v404
  %1218 = vmatmul.f32.gmra.mxu0 %v1121
  %v1219 = vpop.f32.mrf.mxu0
  %v1220 = vadd.f32 %v501, %v1219
  %1221 = vdwg.mxu0
  %1222 = vmatpush.msra.mxu0 %v497
  %1223 = vmatpush.msra.mxu0 %v494
  %1224 = vmatpush.msra.mxu0 %v491
  %1225 = vmatpush.msra.mxu0 %v488
  %1226 = vmatpush.msra.mxu0 %v485
  %1227 = vmatpush.msra.mxu0 %v482
  %1228 = vmatpush.msra.mxu0 %v479
  %1229 = vmatpush.msra.mxu0 %v476
  %1230 = vmatpush.msra.mxu0 %v473
  %1231 = vmatpush.msra.mxu0 %v470
  %1232 = vmatpush.msra.mxu0 %v467
  %1233 = vmatpush.msra.mxu0 %v464
  %1234 = vmatpush.msra.mxu0 %v461
  %1235 = vmatpush.msra.mxu0 %v458
  %1236 = vmatpush.msra.mxu0 %v455
  %1237 = vmatpush.msra.mxu0 %v452
  %1238 = vmatmul.f32.gmra.mxu0 %v1007
  %v1239 = vpop.f32.mrf.mxu0
  %v1240 = vadd.f32 %v1220, %v1239
  %1241 = vdwg.mxu0
  %v1242 = vxor.u32 %v1160, 2147483648
  %v1243 = vmul.f32 %v1242, 1.442695
  %v1244 = vpow.pop %v1243
  %v1245 = vadd.f32 %v1244, 1.0
  %v1246 = vrcp.pop %v1245
  %v1247 = vmul.f32 %v1245, %v1246
  %v1248 = vsub.f32 1.0, %v1247
  %v1249 = vmul.f32 %v1246, %v1248
  %v1250 = vadd.f32 %v1246, %v1249
  %vm1251 = vweird.f32 %v1245
  %vm1252 = vweird.f32 %v1246
  %vm1253 = vmor %vm1251, %vm1252
  %v1254 = vsel %vm1253, %v1246, %v1250
  %v1255 = vand.u32 2147483647, %v1245
  %vm1256 = vcmp.eq.f32.partialorder %v1255, 8.507059e+37
  %v1257 = vand.u32 %v1245, 2147483648
  %v1258 = vor.u32 1.1754944e-38, %v1257
  %v1259 = vsel %vm1256, %v1258, %v1254
  %v1260 = vmul.f32 1.0, %v1259
  %v1261 = vxor.u32 %v1200, 2147483648
  %v1262 = vmul.f32 %v1261, 1.442695
  %v1263 = vpow.pop %v1262
  %v1264 = vadd.f32 %v1263, 1.0
  %v1265 = vrcp.pop %v1264
  %v1266 = vmul.f32 %v1264, %v1265
  %v1267 = vsub.f32 1.0, %v1266
  %v1268 = vmul.f32 %v1265, %v1267
  %v1269 = vadd.f32 %v1265, %v1268
  %vm1270 = vweird.f32 %v1264
  %vm1271 = vweird.f32 %v1265
  %vm1272 = vmor %vm1270, %vm1271
  %v1273 = vsel %vm1272, %v1265, %v1269
  %v1274 = vand.u32 2147483647, %v1264
  %vm1275 = vcmp.eq.f32.partialorder %v1274, 8.507059e+37
  %v1276 = vand.u32 %v1264, 2147483648
  %v1277 = vor.u32 1.1754944e-38, %v1276
  %v1278 = vsel %vm1275, %v1277, %v1273
  %v1279 = vmul.f32 1.0, %v1278
  %1280 = vmatpush.msra.mxu0 %v640
  %1281 = vmatpush.msra.mxu0 %v639
  %1282 = vmatpush.msra.mxu0 %v638
  %1283 = vmatpush.msra.mxu0 %v637
  %1284 = vmatpush.msra.mxu0 %v636
  %1285 = vmatpush.msra.mxu0 %v635
  %1286 = vmatpush.msra.mxu0 %v634
  %1287 = vmatpush.msra.mxu0 %v633
  %1288 = vmatpush.msra.mxu0 %v632
  %1289 = vmatpush.msra.mxu0 %v631
  %1290 = vmatpush.msra.mxu0 %v630
  %1291 = vmatpush.msra.mxu0 %v629
  %1292 = vmatpush.msra.mxu0 %v628
  %1293 = vmatpush.msra.mxu0 %v627
  %1294 = vmatpush.msra.mxu0 %v626
  %1295 = vmatpush.msra.mxu0 %v625
  %1296 = vmatmul.f32.gmra.mxu0 %v1007
  %v1297 = vpop.f32.mrf.mxu0
  %v1298 = vadd.f32 %v680, %v1297
  %1299 = vdwg.mxu0
  %v1300 = vmul.f32 %v1260, %v1298
  %v1301 = vadd.f32 %v1240, %v1300
  %v1302 = vtanh.pop %v1301
  %v1303 = vsub.f32 1.0, %v1279
  %v1304 = vmul.f32 %v1303, %v1302
  %v1305 = vmul.f32 %v1279, %v1007
  %v1306 = vadd.f32 %v1304, %v1305
  %s1307 = smul.u32 3, 3
  %s1308 = smul.addr %s1307, 8
  %s1309 = scalar_lea.vmem [#allocation2], %s1308
  %v1310 = vld [vmem:[%s1309] sm:$0xff]
  %v1311 = vld [vmem:[%s1309 + $0x8] sm:$0xff]
  %v1312 = vld [vmem:[%s1309 + $0x10] sm:$0xff]
  %1313 = vmatpush.msra.mxu0 %v288
  %1314 = vmatpush.msra.mxu0 %v285
  %1315 = vmatpush.msra.mxu0 %v282
  %1316 = vmatpush.msra.mxu0 %v279
  %1317 = vmatpush.msra.mxu0 %v276
  %1318 = vmatpush.msra.mxu0 %v273
  %1319 = vmatpush.msra.mxu0 %v270
  %1320 = vmatpush.msra.mxu0 %v267
  %1321 = vmatpush.msra.mxu0 %v264
  %1322 = vmatpush.msra.mxu0 %v261
  %1323 = vmatpush.msra.mxu0 %v258
  %1324 = vmatpush.msra.mxu0 %v255
  %1325 = vmatpush.msra.mxu0 %v252
  %1326 = vmatpush.msra.mxu0 %v249
  %1327 = vmatpush.msra.mxu0 %v246
  %1328 = vmatpush.msra.mxu0 %v243
  %1329 = vmatmul.f32.gmra.mxu0 %v1121
  %v1330 = vpop.f32.mrf.mxu0
  %v1331 = vadd.f32 0.0, %v1330
  %1332 = vdwg.mxu0
  %1333 = vmatpush.msra.mxu0 %v289
  %1334 = vmatpush.msra.mxu0 %v286
  %1335 = vmatpush.msra.mxu0 %v283
  %1336 = vmatpush.msra.mxu0 %v280
  %1337 = vmatpush.msra.mxu0 %v277
  %1338 = vmatpush.msra.mxu0 %v274
  %1339 = vmatpush.msra.mxu0 %v271
  %1340 = vmatpush.msra.mxu0 %v268
  %1341 = vmatpush.msra.mxu0 %v265
  %1342 = vmatpush.msra.mxu0 %v262
  %1343 = vmatpush.msra.mxu0 %v259
  %1344 = vmatpush.msra.mxu0 %v256
  %1345 = vmatpush.msra.mxu0 %v253
  %1346 = vmatpush.msra.mxu0 %v250
  %1347 = vmatpush.msra.mxu0 %v247
  %1348 = vmatpush.msra.mxu0 %v244
  %1349 = vmatmul.f32.gmra.mxu0 %v1121
  %v1350 = vpop.f32.mrf.mxu0
  %v1351 = vadd.f32 0.0, %v1350
  %1352 = vdwg.mxu0
  %1353 = vmatpush.msra.mxu0 %v290
  %1354 = vmatpush.msra.mxu0 %v287
  %1355 = vmatpush.msra.mxu0 %v284
  %1356 = vmatpush.msra.mxu0 %v281
  %1357 = vmatpush.msra.mxu0 %v278
  %1358 = vmatpush.msra.mxu0 %v275
  %1359 = vmatpush.msra.mxu0 %v272
  %1360 = vmatpush.msra.mxu0 %v269
  %1361 = vmatpush.msra.mxu0 %v266
  %1362 = vmatpush.msra.mxu0 %v263
  %1363 = vmatpush.msra.mxu0 %v260
  %1364 = vmatpush.msra.mxu0 %v257
  %1365 = vmatpush.msra.mxu0 %v254
  %1366 = vmatpush.msra.mxu0 %v251
  %1367 = vmatpush.msra.mxu0 %v248
  %1368 = vmatpush.msra.mxu0 %v245
  %1369 = vmatmul.f32.gmra.mxu0 %v1121
  %v1370 = vpop.f32.mrf.mxu0
  %v1371 = vadd.f32 0.0, %v1370
  %1372 = vdwg.mxu0
  %v1373 = vadd.f32 %v1310, %v1331
  %v1374 = vxor.u32 %v1373, 2147483648
  %v1375 = vmul.f32 %v1374, 1.442695
  %v1376 = vpow.pop %v1375
  %v1377 = vadd.f32 %v1376, 1.0
  %v1378 = vrcp.pop %v1377
  %v1379 = vmul.f32 %v1377, %v1378
  %v1380 = vsub.f32 1.0, %v1379
  %v1381 = vmul.f32 %v1378, %v1380
  %v1382 = vadd.f32 %v1378, %v1381
  %vm1383 = vweird.f32 %v1377
  %vm1384 = vweird.f32 %v1378
  %vm1385 = vmor %vm1383, %vm1384
  %v1386 = vsel %vm1385, %v1378, %v1382
  %v1387 = vand.u32 2147483647, %v1377
  %vm1388 = vcmp.eq.f32.partialorder %v1387, 8.507059e+37
  %v1389 = vand.u32 %v1377, 2147483648
  %v1390 = vor.u32 1.1754944e-38, %v1389
  %v1391 = vsel %vm1388, %v1390, %v1386
  %v1392 = vmul.f32 1.0, %v1391
  %v1393 = vadd.f32 %v1311, %v1351
  %v1394 = vxor.u32 %v1393, 2147483648
  %v1395 = vmul.f32 %v1394, 1.442695
  %v1396 = vpow.pop %v1395
  %v1397 = vadd.f32 %v1396, 1.0
  %v1398 = vrcp.pop %v1397
  %v1399 = vmul.f32 %v1397, %v1398
  %v1400 = vsub.f32 1.0, %v1399
  %v1401 = vmul.f32 %v1398, %v1400
  %v1402 = vadd.f32 %v1398, %v1401
  %vm1403 = vweird.f32 %v1397
  %vm1404 = vweird.f32 %v1398
  %vm1405 = vmor %vm1403, %vm1404
  %v1406 = vsel %vm1405, %v1398, %v1402
  %v1407 = vand.u32 2147483647, %v1397
  %vm1408 = vcmp.eq.f32.partialorder %v1407, 8.507059e+37
  %v1409 = vand.u32 %v1397, 2147483648
  %v1410 = vor.u32 1.1754944e-38, %v1409
  %v1411 = vsel %vm1408, %v1410, %v1406
  %v1412 = vmul.f32 1.0, %v1411
  %v1413 = vadd.f32 %v1371, %v392
  %v1414 = vmul.f32 %v1392, %v1413
  %v1415 = vadd.f32 %v1312, %v1414
  %v1416 = vtanh.pop %v1415
  %v1417 = vsub.f32 1.0, %v1412
  %v1418 = vmul.f32 %v1417, %v1416
  %v1419 = vmul.f32 %v1412, %v1121
  %v1420 = vadd.f32 %v1418, %v1419
  %1421 = vmatpush.msra.mxu0 %v447
  %1422 = vmatpush.msra.mxu0 %v444
  %1423 = vmatpush.msra.mxu0 %v441
  %1424 = vmatpush.msra.mxu0 %v438
  %1425 = vmatpush.msra.mxu0 %v435
  %1426 = vmatpush.msra.mxu0 %v432
  %1427 = vmatpush.msra.mxu0 %v429
  %1428 = vmatpush.msra.mxu0 %v426
  %1429 = vmatpush.msra.mxu0 %v423
  %1430 = vmatpush.msra.mxu0 %v420
  %1431 = vmatpush.msra.mxu0 %v417
  %1432 = vmatpush.msra.mxu0 %v414
  %1433 = vmatpush.msra.mxu0 %v411
  %1434 = vmatpush.msra.mxu0 %v408
  %1435 = vmatpush.msra.mxu0 %v405
  %1436 = vmatpush.msra.mxu0 %v402
  %1437 = vmatmul.f32.gmra.mxu0 %v1420
  %v1438 = vpop.f32.mrf.mxu0
  %v1439 = vadd.f32 %v499, %v1438
  %1440 = vdwg.mxu0
  %1441 = vmatpush.msra.mxu0 %v495
  %1442 = vmatpush.msra.mxu0 %v492
  %1443 = vmatpush.msra.mxu0 %v489
  %1444 = vmatpush.msra.mxu0 %v486
  %1445 = vmatpush.msra.mxu0 %v483
  %1446 = vmatpush.msra.mxu0 %v480
  %1447 = vmatpush.msra.mxu0 %v477
  %1448 = vmatpush.msra.mxu0 %v474
  %1449 = vmatpush.msra.mxu0 %v471
  %1450 = vmatpush.msra.mxu0 %v468
  %1451 = vmatpush.msra.mxu0 %v465
  %1452 = vmatpush.msra.mxu0 %v462
  %1453 = vmatpush.msra.mxu0 %v459
  %1454 = vmatpush.msra.mxu0 %v456
  %1455 = vmatpush.msra.mxu0 %v453
  %1456 = vmatpush.msra.mxu0 %v450
  %1457 = vmatmul.f32.gmra.mxu0 %v1306
  %v1458 = vpop.f32.mrf.mxu0
  %v1459 = vadd.f32 %v1439, %v1458
  %1460 = vdwg.mxu0
  %1461 = vmatpush.msra.mxu0 %v448
  %1462 = vmatpush.msra.mxu0 %v445
  %1463 = vmatpush.msra.mxu0 %v442
  %1464 = vmatpush.msra.mxu0 %v439
  %1465 = vmatpush.msra.mxu0 %v436
  %1466 = vmatpush.msra.mxu0 %v433
  %1467 = vmatpush.msra.mxu0 %v430
  %1468 = vmatpush.msra.mxu0 %v427
  %1469 = vmatpush.msra.mxu0 %v424
  %1470 = vmatpush.msra.mxu0 %v421
  %1471 = vmatpush.msra.mxu0 %v418
  %1472 = vmatpush.msra.mxu0 %v415
  %1473 = vmatpush.msra.mxu0 %v412
  %1474 = vmatpush.msra.mxu0 %v409
  %1475 = vmatpush.msra.mxu0 %v406
  %1476 = vmatpush.msra.mxu0 %v403
  %1477 = vmatmul.f32.gmra.mxu0 %v1420
  %v1478 = vpop.f32.mrf.mxu0
  %v1479 = vadd.f32 %v500, %v1478
  %1480 = vdwg.mxu0
  %1481 = vmatpush.msra.mxu0 %v496
  %1482 = vmatpush.msra.mxu0 %v493
  %1483 = vmatpush.msra.mxu0 %v490
  %1484 = vmatpush.msra.mxu0 %v487
  %1485 = vmatpush.msra.mxu0 %v484
  %1486 = vmatpush.msra.mxu0 %v481
  %1487 = vmatpush.msra.mxu0 %v478
  %1488 = vmatpush.msra.mxu0 %v475
  %1489 = vmatpush.msra.mxu0 %v472
  %1490 = vmatpush.msra.mxu0 %v469
  %1491 = vmatpush.msra.mxu0 %v466
  %1492 = vmatpush.msra.mxu0 %v463
  %1493 = vmatpush.msra.mxu0 %v460
  %1494 = vmatpush.msra.mxu0 %v457
  %1495 = vmatpush.msra.mxu0 %v454
  %1496 = vmatpush.msra.mxu0 %v451
  %1497 = vmatmul.f32.gmra.mxu0 %v1306
  %v1498 = vpop.f32.mrf.mxu0
  %v1499 = vadd.f32 %v1479, %v1498
  %1500 = vdwg.mxu0
  %1501 = vmatpush.msra.mxu0 %v449
  %1502 = vmatpush.msra.mxu0 %v446
  %1503 = vmatpush.msra.mxu0 %v443
  %1504 = vmatpush.msra.mxu0 %v440
  %1505 = vmatpush.msra.mxu0 %v437
  %1506 = vmatpush.msra.mxu0 %v434
  %1507 = vmatpush.msra.mxu0 %v431
  %1508 = vmatpush.msra.mxu0 %v428
  %1509 = vmatpush.msra.mxu0 %v425
  %1510 = vmatpush.msra.mxu0 %v422
  %1511 = vmatpush.msra.mxu0 %v419
  %1512 = vmatpush.msra.mxu0 %v416
  %1513 = vmatpush.msra.mxu0 %v413
  %1514 = vmatpush.msra.mxu0 %v410
  %1515 = vmatpush.msra.mxu0 %v407
  %1516 = vmatpush.msra.mxu0 %v404
  %1517 = vmatmul.f32.gmra.mxu0 %v1420
  %v1518 = vpop.f32.mrf.mxu0
  %v1519 = vadd.f32 %v501, %v1518
  %1520 = vdwg.mxu0
  %1521 = vmatpush.msra.mxu0 %v497
  %1522 = vmatpush.msra.mxu0 %v494
  %1523 = vmatpush.msra.mxu0 %v491
  %1524 = vmatpush.msra.mxu0 %v488
  %1525 = vmatpush.msra.mxu0 %v485
  %1526 = vmatpush.msra.mxu0 %v482
  %1527 = vmatpush.msra.mxu0 %v479
  %1528 = vmatpush.msra.mxu0 %v476
  %1529 = vmatpush.msra.mxu0 %v473
  %1530 = vmatpush.msra.mxu0 %v470
  %1531 = vmatpush.msra.mxu0 %v467
  %1532 = vmatpush.msra.mxu0 %v464
  %1533 = vmatpush.msra.mxu0 %v461
  %1534 = vmatpush.msra.mxu0 %v458
  %1535 = vmatpush.msra.mxu0 %v455
  %1536 = vmatpush.msra.mxu0 %v452
  %1537 = vmatmul.f32.gmra.mxu0 %v1306
  %v1538 = vpop.f32.mrf.mxu0
  %v1539 = vadd.f32 %v1519, %v1538
  %1540 = vdwg.mxu0
  %v1541 = vxor.u32 %v1459, 2147483648
  %v1542 = vmul.f32 %v1541, 1.442695
  %v1543 = vpow.pop %v1542
  %v1544 = vadd.f32 %v1543, 1.0
  %v1545 = vrcp.pop %v1544
  %v1546 = vmul.f32 %v1544, %v1545
  %v1547 = vsub.f32 1.0, %v1546
  %v1548 = vmul.f32 %v1545, %v1547
  %v1549 = vadd.f32 %v1545, %v1548
  %vm1550 = vweird.f32 %v1544
  %vm1551 = vweird.f32 %v1545
  %vm1552 = vmor %vm1550, %vm1551
  %v1553 = vsel %vm1552, %v1545, %v1549
  %v1554 = vand.u32 2147483647, %v1544
  %vm1555 = vcmp.eq.f32.partialorder %v1554, 8.507059e+37
  %v1556 = vand.u32 %v1544, 2147483648
  %v1557 = vor.u32 1.1754944e-38, %v1556
  %v1558 = vsel %vm1555, %v1557, %v1553
  %v1559 = vmul.f32 1.0, %v1558
  %v1560 = vxor.u32 %v1499, 2147483648
  %v1561 = vmul.f32 %v1560, 1.442695
  %v1562 = vpow.pop %v1561
  %v1563 = vadd.f32 %v1562, 1.0
  %v1564 = vrcp.pop %v1563
  %v1565 = vmul.f32 %v1563, %v1564
  %v1566 = vsub.f32 1.0, %v1565
  %v1567 = vmul.f32 %v1564, %v1566
  %v1568 = vadd.f32 %v1564, %v1567
  %vm1569 = vweird.f32 %v1563
  %vm1570 = vweird.f32 %v1564
  %vm1571 = vmor %vm1569, %vm1570
  %v1572 = vsel %vm1571, %v1564, %v1568
  %v1573 = vand.u32 2147483647, %v1563
  %vm1574 = vcmp.eq.f32.partialorder %v1573, 8.507059e+37
  %v1575 = vand.u32 %v1563, 2147483648
  %v1576 = vor.u32 1.1754944e-38, %v1575
  %v1577 = vsel %vm1574, %v1576, %v1572
  %v1578 = vmul.f32 1.0, %v1577
  %1579 = vmatpush.msra.mxu0 %v640
  %1580 = vmatpush.msra.mxu0 %v639
  %1581 = vmatpush.msra.mxu0 %v638
  %1582 = vmatpush.msra.mxu0 %v637
  %1583 = vmatpush.msra.mxu0 %v636
  %1584 = vmatpush.msra.mxu0 %v635
  %1585 = vmatpush.msra.mxu0 %v634
  %1586 = vmatpush.msra.mxu0 %v633
  %1587 = vmatpush.msra.mxu0 %v632
  %1588 = vmatpush.msra.mxu0 %v631
  %1589 = vmatpush.msra.mxu0 %v630
  %1590 = vmatpush.msra.mxu0 %v629
  %1591 = vmatpush.msra.mxu0 %v628
  %1592 = vmatpush.msra.mxu0 %v627
  %1593 = vmatpush.msra.mxu0 %v626
  %1594 = vmatpush.msra.mxu0 %v625
  %1595 = vmatmul.f32.gmra.mxu0 %v1306
  %v1596 = vpop.f32.mrf.mxu0
  %v1597 = vadd.f32 %v680, %v1596
  %1598 = vdwg.mxu0
  %v1599 = vmul.f32 %v1559, %v1597
  %v1600 = vadd.f32 %v1539, %v1599
  %v1601 = vtanh.pop %v1600
  %v1602 = vsub.f32 1.0, %v1578
  %v1603 = vmul.f32 %v1602, %v1601
  %v1604 = vmul.f32 %v1578, %v1306
  %v1605 = vadd.f32 %v1603, %v1604
  %s1606 = smul.u32 4, 3
  %s1607 = smul.addr %s1606, 8
  %s1608 = scalar_lea.vmem [#allocation2], %s1607
  %v1609 = vld [vmem:[%s1608] sm:$0xff]
  %v1610 = vld [vmem:[%s1608 + $0x8] sm:$0xff]
  %v1611 = vld [vmem:[%s1608 + $0x10] sm:$0xff]
  %1612 = vmatpush.msra.mxu0 %v288
  %1613 = vmatpush.msra.mxu0 %v285
  %1614 = vmatpush.msra.mxu0 %v282
  %1615 = vmatpush.msra.mxu0 %v279
  %1616 = vmatpush.msra.mxu0 %v276
  %1617 = vmatpush.msra.mxu0 %v273
  %1618 = vmatpush.msra.mxu0 %v270
  %1619 = vmatpush.msra.mxu0 %v267
  %1620 = vmatpush.msra.mxu0 %v264
  %1621 = vmatpush.msra.mxu0 %v261
  %1622 = vmatpush.msra.mxu0 %v258
  %1623 = vmatpush.msra.mxu0 %v255
  %1624 = vmatpush.msra.mxu0 %v252
  %1625 = vmatpush.msra.mxu0 %v249
  %1626 = vmatpush.msra.mxu0 %v246
  %1627 = vmatpush.msra.mxu0 %v243
  %1628 = vmatmul.f32.gmra.mxu0 %v1420
  %v1629 = vpop.f32.mrf.mxu0
  %v1630 = vadd.f32 0.0, %v1629
  %1631 = vdwg.mxu0
  %1632 = vmatpush.msra.mxu0 %v289
  %1633 = vmatpush.msra.mxu0 %v286
  %1634 = vmatpush.msra.mxu0 %v283
  %1635 = vmatpush.msra.mxu0 %v280
  %1636 = vmatpush.msra.mxu0 %v277
  %1637 = vmatpush.msra.mxu0 %v274
  %1638 = vmatpush.msra.mxu0 %v271
  %1639 = vmatpush.msra.mxu0 %v268
  %1640 = vmatpush.msra.mxu0 %v265
  %1641 = vmatpush.msra.mxu0 %v262
  %1642 = vmatpush.msra.mxu0 %v259
  %1643 = vmatpush.msra.mxu0 %v256
  %1644 = vmatpush.msra.mxu0 %v253
  %1645 = vmatpush.msra.mxu0 %v250
  %1646 = vmatpush.msra.mxu0 %v247
  %1647 = vmatpush.msra.mxu0 %v244
  %1648 = vmatmul.f32.gmra.mxu0 %v1420
  %v1649 = vpop.f32.mrf.mxu0
  %v1650 = vadd.f32 0.0, %v1649
  %1651 = vdwg.mxu0
  %1652 = vmatpush.msra.mxu0 %v290
  %1653 = vmatpush.msra.mxu0 %v287
  %1654 = vmatpush.msra.mxu0 %v284
  %1655 = vmatpush.msra.mxu0 %v281
  %1656 = vmatpush.msra.mxu0 %v278
  %1657 = vmatpush.msra.mxu0 %v275
  %1658 = vmatpush.msra.mxu0 %v272
  %1659 = vmatpush.msra.mxu0 %v269
  %1660 = vmatpush.msra.mxu0 %v266
  %1661 = vmatpush.msra.mxu0 %v263
  %1662 = vmatpush.msra.mxu0 %v260
  %1663 = vmatpush.msra.mxu0 %v257
  %1664 = vmatpush.msra.mxu0 %v254
  %1665 = vmatpush.msra.mxu0 %v251
  %1666 = vmatpush.msra.mxu0 %v248
  %1667 = vmatpush.msra.mxu0 %v245
  %1668 = vmatmul.f32.gmra.mxu0 %v1420
  %v1669 = vpop.f32.mrf.mxu0
  %v1670 = vadd.f32 0.0, %v1669
  %1671 = vdwg.mxu0
  %v1672 = vadd.f32 %v1609, %v1630
  %v1673 = vxor.u32 %v1672, 2147483648
  %v1674 = vmul.f32 %v1673, 1.442695
  %v1675 = vpow.pop %v1674
  %v1676 = vadd.f32 %v1675, 1.0
  %v1677 = vrcp.pop %v1676
  %v1678 = vmul.f32 %v1676, %v1677
  %v1679 = vsub.f32 1.0, %v1678
  %v1680 = vmul.f32 %v1677, %v1679
  %v1681 = vadd.f32 %v1677, %v1680
  %vm1682 = vweird.f32 %v1676
  %vm1683 = vweird.f32 %v1677
  %vm1684 = vmor %vm1682, %vm1683
  %v1685 = vsel %vm1684, %v1677, %v1681
  %v1686 = vand.u32 2147483647, %v1676
  %vm1687 = vcmp.eq.f32.partialorder %v1686, 8.507059e+37
  %v1688 = vand.u32 %v1676, 2147483648
  %v1689 = vor.u32 1.1754944e-38, %v1688
  %v1690 = vsel %vm1687, %v1689, %v1685
  %v1691 = vmul.f32 1.0, %v1690
  %v1692 = vadd.f32 %v1610, %v1650
  %v1693 = vxor.u32 %v1692, 2147483648
  %v1694 = vmul.f32 %v1693, 1.442695
  %v1695 = vpow.pop %v1694
  %v1696 = vadd.f32 %v1695, 1.0
  %v1697 = vrcp.pop %v1696
  %v1698 = vmul.f32 %v1696, %v1697
  %v1699 = vsub.f32 1.0, %v1698
  %v1700 = vmul.f32 %v1697, %v1699
  %v1701 = vadd.f32 %v1697, %v1700
  %vm1702 = vweird.f32 %v1696
  %vm1703 = vweird.f32 %v1697
  %vm1704 = vmor %vm1702, %vm1703
  %v1705 = vsel %vm1704, %v1697, %v1701
  %v1706 = vand.u32 2147483647, %v1696
  %vm1707 = vcmp.eq.f32.partialorder %v1706, 8.507059e+37
  %v1708 = vand.u32 %v1696, 2147483648
  %v1709 = vor.u32 1.1754944e-38, %v1708
  %v1710 = vsel %vm1707, %v1709, %v1705
  %v1711 = vmul.f32 1.0, %v1710
  %v1712 = vadd.f32 %v1670, %v392
  %v1713 = vmul.f32 %v1691, %v1712
  %v1714 = vadd.f32 %v1611, %v1713
  %v1715 = vtanh.pop %v1714
  %v1716 = vsub.f32 1.0, %v1711
  %v1717 = vmul.f32 %v1716, %v1715
  %v1718 = vmul.f32 %v1711, %v1420
  %v1719 = vadd.f32 %v1717, %v1718
  %1720 = vmatpush.msra.mxu0 %v447
  %1721 = vmatpush.msra.mxu0 %v444
  %1722 = vmatpush.msra.mxu0 %v441
  %1723 = vmatpush.msra.mxu0 %v438
  %1724 = vmatpush.msra.mxu0 %v435
  %1725 = vmatpush.msra.mxu0 %v432
  %1726 = vmatpush.msra.mxu0 %v429
  %1727 = vmatpush.msra.mxu0 %v426
  %1728 = vmatpush.msra.mxu0 %v423
  %1729 = vmatpush.msra.mxu0 %v420
  %1730 = vmatpush.msra.mxu0 %v417
  %1731 = vmatpush.msra.mxu0 %v414
  %1732 = vmatpush.msra.mxu0 %v411
  %1733 = vmatpush.msra.mxu0 %v408
  %1734 = vmatpush.msra.mxu0 %v405
  %1735 = vmatpush.msra.mxu0 %v402
  %1736 = vmatmul.f32.gmra.mxu0 %v1719
  %v1737 = vpop.f32.mrf.mxu0
  %v1738 = vadd.f32 %v499, %v1737
  %1739 = vdwg.mxu0
  %1740 = vmatpush.msra.mxu0 %v495
  %1741 = vmatpush.msra.mxu0 %v492
  %1742 = vmatpush.msra.mxu0 %v489
  %1743 = vmatpush.msra.mxu0 %v486
  %1744 = vmatpush.msra.mxu0 %v483
  %1745 = vmatpush.msra.mxu0 %v480
  %1746 = vmatpush.msra.mxu0 %v477
  %1747 = vmatpush.msra.mxu0 %v474
  %1748 = vmatpush.msra.mxu0 %v471
  %1749 = vmatpush.msra.mxu0 %v468
  %1750 = vmatpush.msra.mxu0 %v465
  %1751 = vmatpush.msra.mxu0 %v462
  %1752 = vmatpush.msra.mxu0 %v459
  %1753 = vmatpush.msra.mxu0 %v456
  %1754 = vmatpush.msra.mxu0 %v453
  %1755 = vmatpush.msra.mxu0 %v450
  %1756 = vmatmul.f32.gmra.mxu0 %v1605
  %v1757 = vpop.f32.mrf.mxu0
  %v1758 = vadd.f32 %v1738, %v1757
  %1759 = vdwg.mxu0
  %1760 = vmatpush.msra.mxu0 %v448
  %1761 = vmatpush.msra.mxu0 %v445
  %1762 = vmatpush.msra.mxu0 %v442
  %1763 = vmatpush.msra.mxu0 %v439
  %1764 = vmatpush.msra.mxu0 %v436
  %1765 = vmatpush.msra.mxu0 %v433
  %1766 = vmatpush.msra.mxu0 %v430
  %1767 = vmatpush.msra.mxu0 %v427
  %1768 = vmatpush.msra.mxu0 %v424
  %1769 = vmatpush.msra.mxu0 %v421
  %1770 = vmatpush.msra.mxu0 %v418
  %1771 = vmatpush.msra.mxu0 %v415
  %1772 = vmatpush.msra.mxu0 %v412
  %1773 = vmatpush.msra.mxu0 %v409
  %1774 = vmatpush.msra.mxu0 %v406
  %1775 = vmatpush.msra.mxu0 %v403
  %1776 = vmatmul.f32.gmra.mxu0 %v1719
  %v1777 = vpop.f32.mrf.mxu0
  %v1778 = vadd.f32 %v500, %v1777
  %1779 = vdwg.mxu0
  %1780 = vmatpush.msra.mxu0 %v496
  %1781 = vmatpush.msra.mxu0 %v493
  %1782 = vmatpush.msra.mxu0 %v490
  %1783 = vmatpush.msra.mxu0 %v487
  %1784 = vmatpush.msra.mxu0 %v484
  %1785 = vmatpush.msra.mxu0 %v481
  %1786 = vmatpush.msra.mxu0 %v478
  %1787 = vmatpush.msra.mxu0 %v475
  %1788 = vmatpush.msra.mxu0 %v472
  %1789 = vmatpush.msra.mxu0 %v469
  %1790 = vmatpush.msra.mxu0 %v466
  %1791 = vmatpush.msra.mxu0 %v463
  %1792 = vmatpush.msra.mxu0 %v460
  %1793 = vmatpush.msra.mxu0 %v457
  %1794 = vmatpush.msra.mxu0 %v454
  %1795 = vmatpush.msra.mxu0 %v451
  %1796 = vmatmul.f32.gmra.mxu0 %v1605
  %v1797 = vpop.f32.mrf.mxu0
  %v1798 = vadd.f32 %v1778, %v1797
  %1799 = vdwg.mxu0
  %1800 = vmatpush.msra.mxu0 %v449
  %1801 = vmatpush.msra.mxu0 %v446
  %1802 = vmatpush.msra.mxu0 %v443
  %1803 = vmatpush.msra.mxu0 %v440
  %1804 = vmatpush.msra.mxu0 %v437
  %1805 = vmatpush.msra.mxu0 %v434
  %1806 = vmatpush.msra.mxu0 %v431
  %1807 = vmatpush.msra.mxu0 %v428
  %1808 = vmatpush.msra.mxu0 %v425
  %1809 = vmatpush.msra.mxu0 %v422
  %1810 = vmatpush.msra.mxu0 %v419
  %1811 = vmatpush.msra.mxu0 %v416
  %1812 = vmatpush.msra.mxu0 %v413
  %1813 = vmatpush.msra.mxu0 %v410
  %1814 = vmatpush.msra.mxu0 %v407
  %1815 = vmatpush.msra.mxu0 %v404
  %1816 = vmatmul.f32.gmra.mxu0 %v1719
  %v1817 = vpop.f32.mrf.mxu0
  %v1818 = vadd.f32 %v501, %v1817
  %1819 = vdwg.mxu0
  %1820 = vmatpush.msra.mxu0 %v497
  %1821 = vmatpush.msra.mxu0 %v494
  %1822 = vmatpush.msra.mxu0 %v491
  %1823 = vmatpush.msra.mxu0 %v488
  %1824 = vmatpush.msra.mxu0 %v485
  %1825 = vmatpush.msra.mxu0 %v482
  %1826 = vmatpush.msra.mxu0 %v479
  %1827 = vmatpush.msra.mxu0 %v476
  %1828 = vmatpush.msra.mxu0 %v473
  %1829 = vmatpush.msra.mxu0 %v470
  %1830 = vmatpush.msra.mxu0 %v467
  %1831 = vmatpush.msra.mxu0 %v464
  %1832 = vmatpush.msra.mxu0 %v461
  %1833 = vmatpush.msra.mxu0 %v458
  %1834 = vmatpush.msra.mxu0 %v455
  %1835 = vmatpush.msra.mxu0 %v452
  %1836 = vmatmul.f32.gmra.mxu0 %v1605
  %v1837 = vpop.f32.mrf.mxu0
  %v1838 = vadd.f32 %v1818, %v1837
  %1839 = vdwg.mxu0
  %v1840 = vxor.u32 %v1758, 2147483648
  %v1841 = vmul.f32 %v1840, 1.442695
  %v1842 = vpow.pop %v1841
  %v1843 = vadd.f32 %v1842, 1.0
  %v1844 = vrcp.pop %v1843
  %v1845 = vmul.f32 %v1843, %v1844
  %v1846 = vsub.f32 1.0, %v1845
  %v1847 = vmul.f32 %v1844, %v1846
  %v1848 = vadd.f32 %v1844, %v1847
  %vm1849 = vweird.f32 %v1843
  %vm1850 = vweird.f32 %v1844
  %vm1851 = vmor %vm1849, %vm1850
  %v1852 = vsel %vm1851, %v1844, %v1848
  %v1853 = vand.u32 2147483647, %v1843
  %vm1854 = vcmp.eq.f32.partialorder %v1853, 8.507059e+37
  %v1855 = vand.u32 %v1843, 2147483648
  %v1856 = vor.u32 1.1754944e-38, %v1855
  %v1857 = vsel %vm1854, %v1856, %v1852
  %v1858 = vmul.f32 1.0, %v1857
  %v1859 = vxor.u32 %v1798, 2147483648
  %v1860 = vmul.f32 %v1859, 1.442695
  %v1861 = vpow.pop %v1860
  %v1862 = vadd.f32 %v1861, 1.0
  %v1863 = vrcp.pop %v1862
  %v1864 = vmul.f32 %v1862, %v1863
  %v1865 = vsub.f32 1.0, %v1864
  %v1866 = vmul.f32 %v1863, %v1865
  %v1867 = vadd.f32 %v1863, %v1866
  %vm1868 = vweird.f32 %v1862
  %vm1869 = vweird.f32 %v1863
  %vm1870 = vmor %vm1868, %vm1869
  %v1871 = vsel %vm1870, %v1863, %v1867
  %v1872 = vand.u32 2147483647, %v1862
  %vm1873 = vcmp.eq.f32.partialorder %v1872, 8.507059e+37
  %v1874 = vand.u32 %v1862, 2147483648
  %v1875 = vor.u32 1.1754944e-38, %v1874
  %v1876 = vsel %vm1873, %v1875, %v1871
  %v1877 = vmul.f32 1.0, %v1876
  %1878 = vmatpush.msra.mxu0 %v640
  %1879 = vmatpush.msra.mxu0 %v639
  %1880 = vmatpush.msra.mxu0 %v638
  %1881 = vmatpush.msra.mxu0 %v637
  %1882 = vmatpush.msra.mxu0 %v636
  %1883 = vmatpush.msra.mxu0 %v635
  %1884 = vmatpush.msra.mxu0 %v634
  %1885 = vmatpush.msra.mxu0 %v633
  %1886 = vmatpush.msra.mxu0 %v632
  %1887 = vmatpush.msra.mxu0 %v631
  %1888 = vmatpush.msra.mxu0 %v630
  %1889 = vmatpush.msra.mxu0 %v629
  %1890 = vmatpush.msra.mxu0 %v628
  %1891 = vmatpush.msra.mxu0 %v627
  %1892 = vmatpush.msra.mxu0 %v626
  %1893 = vmatpush.msra.mxu0 %v625
  %1894 = vmatmul.f32.gmra.mxu0 %v1605
  %v1895 = vpop.f32.mrf.mxu0
  %v1896 = vadd.f32 %v680, %v1895
  %1897 = vdwg.mxu0
  %v1898 = vmul.f32 %v1858, %v1896
  %v1899 = vadd.f32 %v1838, %v1898
  %v1900 = vtanh.pop %v1899
  %v1901 = vsub.f32 1.0, %v1877
  %v1902 = vmul.f32 %v1901, %v1900
  %v1903 = vmul.f32 %v1877, %v1605
  %v1904 = vadd.f32 %v1902, %v1903
  %s1905 = smul.u32 5, 3
  %s1906 = smul.addr %s1905, 8
  %s1907 = scalar_lea.vmem [#allocation2], %s1906
  %v1908 = vld [vmem:[%s1907] sm:$0xff]
  %v1909 = vld [vmem:[%s1907 + $0x8] sm:$0xff]
  %v1910 = vld [vmem:[%s1907 + $0x10] sm:$0xff]
  %1911 = vmatpush.msra.mxu0 %v288
  %1912 = vmatpush.msra.mxu0 %v285
  %1913 = vmatpush.msra.mxu0 %v282
  %1914 = vmatpush.msra.mxu0 %v279
  %1915 = vmatpush.msra.mxu0 %v276
  %1916 = vmatpush.msra.mxu0 %v273
  %1917 = vmatpush.msra.mxu0 %v270
  %1918 = vmatpush.msra.mxu0 %v267
  %1919 = vmatpush.msra.mxu0 %v264
  %1920 = vmatpush.msra.mxu0 %v261
  %1921 = vmatpush.msra.mxu0 %v258
  %1922 = vmatpush.msra.mxu0 %v255
  %1923 = vmatpush.msra.mxu0 %v252
  %1924 = vmatpush.msra.mxu0 %v249
  %1925 = vmatpush.msra.mxu0 %v246
  %1926 = vmatpush.msra.mxu0 %v243
  %1927 = vmatmul.f32.gmra.mxu0 %v1719
  %v1928 = vpop.f32.mrf.mxu0
  %v1929 = vadd.f32 0.0, %v1928
  %1930 = vdwg.mxu0
  %1931 = vmatpush.msra.mxu0 %v289
  %1932 = vmatpush.msra.mxu0 %v286
  %1933 = vmatpush.msra.mxu0 %v283
  %1934 = vmatpush.msra.mxu0 %v280
  %1935 = vmatpush.msra.mxu0 %v277
  %1936 = vmatpush.msra.mxu0 %v274
  %1937 = vmatpush.msra.mxu0 %v271
  %1938 = vmatpush.msra.mxu0 %v268
  %1939 = vmatpush.msra.mxu0 %v265
  %1940 = vmatpush.msra.mxu0 %v262
  %1941 = vmatpush.msra.mxu0 %v259
  %1942 = vmatpush.msra.mxu0 %v256
  %1943 = vmatpush.msra.mxu0 %v253
  %1944 = vmatpush.msra.mxu0 %v250
  %1945 = vmatpush.msra.mxu0 %v247
  %1946 = vmatpush.msra.mxu0 %v244
  %1947 = vmatmul.f32.gmra.mxu0 %v1719
  %v1948 = vpop.f32.mrf.mxu0
  %v1949 = vadd.f32 0.0, %v1948
  %1950 = vdwg.mxu0
  %1951 = vmatpush.msra.mxu0 %v290
  %1952 = vmatpush.msra.mxu0 %v287
  %1953 = vmatpush.msra.mxu0 %v284
  %1954 = vmatpush.msra.mxu0 %v281
  %1955 = vmatpush.msra.mxu0 %v278
  %1956 = vmatpush.msra.mxu0 %v275
  %1957 = vmatpush.msra.mxu0 %v272
  %1958 = vmatpush.msra.mxu0 %v269
  %1959 = vmatpush.msra.mxu0 %v266
  %1960 = vmatpush.msra.mxu0 %v263
  %1961 = vmatpush.msra.mxu0 %v260
  %1962 = vmatpush.msra.mxu0 %v257
  %1963 = vmatpush.msra.mxu0 %v254
  %1964 = vmatpush.msra.mxu0 %v251
  %1965 = vmatpush.msra.mxu0 %v248
  %1966 = vmatpush.msra.mxu0 %v245
  %1967 = vmatmul.f32.gmra.mxu0 %v1719
  %v1968 = vpop.f32.mrf.mxu0
  %v1969 = vadd.f32 0.0, %v1968
  %1970 = vdwg.mxu0
  %v1971 = vadd.f32 %v1908, %v1929
  %v1972 = vxor.u32 %v1971, 2147483648
  %v1973 = vmul.f32 %v1972, 1.442695
  %v1974 = vpow.pop %v1973
  %v1975 = vadd.f32 %v1974, 1.0
  %v1976 = vrcp.pop %v1975
  %v1977 = vmul.f32 %v1975, %v1976
  %v1978 = vsub.f32 1.0, %v1977
  %v1979 = vmul.f32 %v1976, %v1978
  %v1980 = vadd.f32 %v1976, %v1979
  %vm1981 = vweird.f32 %v1975
  %vm1982 = vweird.f32 %v1976
  %vm1983 = vmor %vm1981, %vm1982
  %v1984 = vsel %vm1983, %v1976, %v1980
  %v1985 = vand.u32 2147483647, %v1975
  %vm1986 = vcmp.eq.f32.partialorder %v1985, 8.507059e+37
  %v1987 = vand.u32 %v1975, 2147483648
  %v1988 = vor.u32 1.1754944e-38, %v1987
  %v1989 = vsel %vm1986, %v1988, %v1984
  %v1990 = vmul.f32 1.0, %v1989
  %v1991 = vadd.f32 %v1909, %v1949
  %v1992 = vxor.u32 %v1991, 2147483648
  %v1993 = vmul.f32 %v1992, 1.442695
  %v1994 = vpow.pop %v1993
  %v1995 = vadd.f32 %v1994, 1.0
  %v1996 = vrcp.pop %v1995
  %v1997 = vmul.f32 %v1995, %v1996
  %v1998 = vsub.f32 1.0, %v1997
  %v1999 = vmul.f32 %v1996, %v1998
  %v2000 = vadd.f32 %v1996, %v1999
  %vm2001 = vweird.f32 %v1995
  %vm2002 = vweird.f32 %v1996
  %vm2003 = vmor %vm2001, %vm2002
  %v2004 = vsel %vm2003, %v1996, %v2000
  %v2005 = vand.u32 2147483647, %v1995
  %vm2006 = vcmp.eq.f32.partialorder %v2005, 8.507059e+37
  %v2007 = vand.u32 %v1995, 2147483648
  %v2008 = vor.u32 1.1754944e-38, %v2007
  %v2009 = vsel %vm2006, %v2008, %v2004
  %v2010 = vmul.f32 1.0, %v2009
  %v2011 = vadd.f32 %v1969, %v392
  %v2012 = vmul.f32 %v1990, %v2011
  %v2013 = vadd.f32 %v1910, %v2012
  %v2014 = vtanh.pop %v2013
  %v2015 = vsub.f32 1.0, %v2010
  %v2016 = vmul.f32 %v2015, %v2014
  %v2017 = vmul.f32 %v2010, %v1719
  %v2018 = vadd.f32 %v2016, %v2017
  %2019 = vmatpush.msra.mxu0 %v447
  %2020 = vmatpush.msra.mxu0 %v444
  %2021 = vmatpush.msra.mxu0 %v441
  %2022 = vmatpush.msra.mxu0 %v438
  %2023 = vmatpush.msra.mxu0 %v435
  %2024 = vmatpush.msra.mxu0 %v432
  %2025 = vmatpush.msra.mxu0 %v429
  %2026 = vmatpush.msra.mxu0 %v426
  %2027 = vmatpush.msra.mxu0 %v423
  %2028 = vmatpush.msra.mxu0 %v420
  %2029 = vmatpush.msra.mxu0 %v417
  %2030 = vmatpush.msra.mxu0 %v414
  %2031 = vmatpush.msra.mxu0 %v411
  %2032 = vmatpush.msra.mxu0 %v408
  %2033 = vmatpush.msra.mxu0 %v405
  %2034 = vmatpush.msra.mxu0 %v402
  %2035 = vmatmul.f32.gmra.mxu0 %v2018
  %v2036 = vpop.f32.mrf.mxu0
  %v2037 = vadd.f32 %v499, %v2036
  %2038 = vdwg.mxu0
  %2039 = vmatpush.msra.mxu0 %v495
  %2040 = vmatpush.msra.mxu0 %v492
  %2041 = vmatpush.msra.mxu0 %v489
  %2042 = vmatpush.msra.mxu0 %v486
  %2043 = vmatpush.msra.mxu0 %v483
  %2044 = vmatpush.msra.mxu0 %v480
  %2045 = vmatpush.msra.mxu0 %v477
  %2046 = vmatpush.msra.mxu0 %v474
  %2047 = vmatpush.msra.mxu0 %v471
  %2048 = vmatpush.msra.mxu0 %v468
  %2049 = vmatpush.msra.mxu0 %v465
  %2050 = vmatpush.msra.mxu0 %v462
  %2051 = vmatpush.msra.mxu0 %v459
  %2052 = vmatpush.msra.mxu0 %v456
  %2053 = vmatpush.msra.mxu0 %v453
  %2054 = vmatpush.msra.mxu0 %v450
  %2055 = vmatmul.f32.gmra.mxu0 %v1904
  %v2056 = vpop.f32.mrf.mxu0
  %v2057 = vadd.f32 %v2037, %v2056
  %2058 = vdwg.mxu0
  %2059 = vmatpush.msra.mxu0 %v448
  %2060 = vmatpush.msra.mxu0 %v445
  %2061 = vmatpush.msra.mxu0 %v442
  %2062 = vmatpush.msra.mxu0 %v439
  %2063 = vmatpush.msra.mxu0 %v436
  %2064 = vmatpush.msra.mxu0 %v433
  %2065 = vmatpush.msra.mxu0 %v430
  %2066 = vmatpush.msra.mxu0 %v427
  %2067 = vmatpush.msra.mxu0 %v424
  %2068 = vmatpush.msra.mxu0 %v421
  %2069 = vmatpush.msra.mxu0 %v418
  %2070 = vmatpush.msra.mxu0 %v415
  %2071 = vmatpush.msra.mxu0 %v412
  %2072 = vmatpush.msra.mxu0 %v409
  %2073 = vmatpush.msra.mxu0 %v406
  %2074 = vmatpush.msra.mxu0 %v403
  %2075 = vmatmul.f32.gmra.mxu0 %v2018
  %v2076 = vpop.f32.mrf.mxu0
  %v2077 = vadd.f32 %v500, %v2076
  %2078 = vdwg.mxu0
  %2079 = vmatpush.msra.mxu0 %v496
  %2080 = vmatpush.msra.mxu0 %v493
  %2081 = vmatpush.msra.mxu0 %v490
  %2082 = vmatpush.msra.mxu0 %v487
  %2083 = vmatpush.msra.mxu0 %v484
  %2084 = vmatpush.msra.mxu0 %v481
  %2085 = vmatpush.msra.mxu0 %v478
  %2086 = vmatpush.msra.mxu0 %v475
  %2087 = vmatpush.msra.mxu0 %v472
  %2088 = vmatpush.msra.mxu0 %v469
  %2089 = vmatpush.msra.mxu0 %v466
  %2090 = vmatpush.msra.mxu0 %v463
  %2091 = vmatpush.msra.mxu0 %v460
  %2092 = vmatpush.msra.mxu0 %v457
  %2093 = vmatpush.msra.mxu0 %v454
  %2094 = vmatpush.msra.mxu0 %v451
  %2095 = vmatmul.f32.gmra.mxu0 %v1904
  %v2096 = vpop.f32.mrf.mxu0
  %v2097 = vadd.f32 %v2077, %v2096
  %2098 = vdwg.mxu0
  %2099 = vmatpush.msra.mxu0 %v449
  %2100 = vmatpush.msra.mxu0 %v446
  %2101 = vmatpush.msra.mxu0 %v443
  %2102 = vmatpush.msra.mxu0 %v440
  %2103 = vmatpush.msra.mxu0 %v437
  %2104 = vmatpush.msra.mxu0 %v434
  %2105 = vmatpush.msra.mxu0 %v431
  %2106 = vmatpush.msra.mxu0 %v428
  %2107 = vmatpush.msra.mxu0 %v425
  %2108 = vmatpush.msra.mxu0 %v422
  %2109 = vmatpush.msra.mxu0 %v419
  %2110 = vmatpush.msra.mxu0 %v416
  %2111 = vmatpush.msra.mxu0 %v413
  %2112 = vmatpush.msra.mxu0 %v410
  %2113 = vmatpush.msra.mxu0 %v407
  %2114 = vmatpush.msra.mxu0 %v404
  %2115 = vmatmul.f32.gmra.mxu0 %v2018
  %v2116 = vpop.f32.mrf.mxu0
  %v2117 = vadd.f32 %v501, %v2116
  %2118 = vdwg.mxu0
  %2119 = vmatpush.msra.mxu0 %v497
  %2120 = vmatpush.msra.mxu0 %v494
  %2121 = vmatpush.msra.mxu0 %v491
  %2122 = vmatpush.msra.mxu0 %v488
  %2123 = vmatpush.msra.mxu0 %v485
  %2124 = vmatpush.msra.mxu0 %v482
  %2125 = vmatpush.msra.mxu0 %v479
  %2126 = vmatpush.msra.mxu0 %v476
  %2127 = vmatpush.msra.mxu0 %v473
  %2128 = vmatpush.msra.mxu0 %v470
  %2129 = vmatpush.msra.mxu0 %v467
  %2130 = vmatpush.msra.mxu0 %v464
  %2131 = vmatpush.msra.mxu0 %v461
  %2132 = vmatpush.msra.mxu0 %v458
  %2133 = vmatpush.msra.mxu0 %v455
  %2134 = vmatpush.msra.mxu0 %v452
  %2135 = vmatmul.f32.gmra.mxu0 %v1904
  %v2136 = vpop.f32.mrf.mxu0
  %v2137 = vadd.f32 %v2117, %v2136
  %2138 = vdwg.mxu0
  %v2139 = vxor.u32 %v2057, 2147483648
  %v2140 = vmul.f32 %v2139, 1.442695
  %v2141 = vpow.pop %v2140
  %v2142 = vadd.f32 %v2141, 1.0
  %v2143 = vrcp.pop %v2142
  %v2144 = vmul.f32 %v2142, %v2143
  %v2145 = vsub.f32 1.0, %v2144
  %v2146 = vmul.f32 %v2143, %v2145
  %v2147 = vadd.f32 %v2143, %v2146
  %vm2148 = vweird.f32 %v2142
  %vm2149 = vweird.f32 %v2143
  %vm2150 = vmor %vm2148, %vm2149
  %v2151 = vsel %vm2150, %v2143, %v2147
  %v2152 = vand.u32 2147483647, %v2142
  %vm2153 = vcmp.eq.f32.partialorder %v2152, 8.507059e+37
  %v2154 = vand.u32 %v2142, 2147483648
  %v2155 = vor.u32 1.1754944e-38, %v2154
  %v2156 = vsel %vm2153, %v2155, %v2151
  %v2157 = vmul.f32 1.0, %v2156
  %v2158 = vxor.u32 %v2097, 2147483648
  %v2159 = vmul.f32 %v2158, 1.442695
  %v2160 = vpow.pop %v2159
  %v2161 = vadd.f32 %v2160, 1.0
  %v2162 = vrcp.pop %v2161
  %v2163 = vmul.f32 %v2161, %v2162
  %v2164 = vsub.f32 1.0, %v2163
  %v2165 = vmul.f32 %v2162, %v2164
  %v2166 = vadd.f32 %v2162, %v2165
  %vm2167 = vweird.f32 %v2161
  %vm2168 = vweird.f32 %v2162
  %vm2169 = vmor %vm2167, %vm2168
  %v2170 = vsel %vm2169, %v2162, %v2166
  %v2171 = vand.u32 2147483647, %v2161
  %vm2172 = vcmp.eq.f32.partialorder %v2171, 8.507059e+37
  %v2173 = vand.u32 %v2161, 2147483648
  %v2174 = vor.u32 1.1754944e-38, %v2173
  %v2175 = vsel %vm2172, %v2174, %v2170
  %v2176 = vmul.f32 1.0, %v2175
  %2177 = vmatpush.msra.mxu0 %v640
  %2178 = vmatpush.msra.mxu0 %v639
  %2179 = vmatpush.msra.mxu0 %v638
  %2180 = vmatpush.msra.mxu0 %v637
  %2181 = vmatpush.msra.mxu0 %v636
  %2182 = vmatpush.msra.mxu0 %v635
  %2183 = vmatpush.msra.mxu0 %v634
  %2184 = vmatpush.msra.mxu0 %v633
  %2185 = vmatpush.msra.mxu0 %v632
  %2186 = vmatpush.msra.mxu0 %v631
  %2187 = vmatpush.msra.mxu0 %v630
  %2188 = vmatpush.msra.mxu0 %v629
  %2189 = vmatpush.msra.mxu0 %v628
  %2190 = vmatpush.msra.mxu0 %v627
  %2191 = vmatpush.msra.mxu0 %v626
  %2192 = vmatpush.msra.mxu0 %v625
  %2193 = vmatmul.f32.gmra.mxu0 %v1904
  %v2194 = vpop.f32.mrf.mxu0
  %v2195 = vadd.f32 %v680, %v2194
  %2196 = vdwg.mxu0
  %v2197 = vmul.f32 %v2157, %v2195
  %v2198 = vadd.f32 %v2137, %v2197
  %v2199 = vtanh.pop %v2198
  %v2200 = vsub.f32 1.0, %v2176
  %v2201 = vmul.f32 %v2200, %v2199
  %v2202 = vmul.f32 %v2176, %v1904
  %v2203 = vadd.f32 %v2201, %v2202
  %s2204 = smul.u32 6, 3
  %s2205 = smul.addr %s2204, 8
  %s2206 = scalar_lea.vmem [#allocation2], %s2205
  %v2207 = vld [vmem:[%s2206] sm:$0xff]
  %v2208 = vld [vmem:[%s2206 + $0x8] sm:$0xff]
  %v2209 = vld [vmem:[%s2206 + $0x10] sm:$0xff]
  %2210 = vmatpush.msra.mxu0 %v288
  %2211 = vmatpush.msra.mxu0 %v285
  %2212 = vmatpush.msra.mxu0 %v282
  %2213 = vmatpush.msra.mxu0 %v279
  %2214 = vmatpush.msra.mxu0 %v276
  %2215 = vmatpush.msra.mxu0 %v273
  %2216 = vmatpush.msra.mxu0 %v270
  %2217 = vmatpush.msra.mxu0 %v267
  %2218 = vmatpush.msra.mxu0 %v264
  %2219 = vmatpush.msra.mxu0 %v261
  %2220 = vmatpush.msra.mxu0 %v258
  %2221 = vmatpush.msra.mxu0 %v255
  %2222 = vmatpush.msra.mxu0 %v252
  %2223 = vmatpush.msra.mxu0 %v249
  %2224 = vmatpush.msra.mxu0 %v246
  %2225 = vmatpush.msra.mxu0 %v243
  %2226 = vmatmul.f32.gmra.mxu0 %v2018
  %v2227 = vpop.f32.mrf.mxu0
  %v2228 = vadd.f32 0.0, %v2227
  %2229 = vdwg.mxu0
  %2230 = vmatpush.msra.mxu0 %v289
  %2231 = vmatpush.msra.mxu0 %v286
  %2232 = vmatpush.msra.mxu0 %v283
  %2233 = vmatpush.msra.mxu0 %v280
  %2234 = vmatpush.msra.mxu0 %v277
  %2235 = vmatpush.msra.mxu0 %v274
  %2236 = vmatpush.msra.mxu0 %v271
  %2237 = vmatpush.msra.mxu0 %v268
  %2238 = vmatpush.msra.mxu0 %v265
  %2239 = vmatpush.msra.mxu0 %v262
  %2240 = vmatpush.msra.mxu0 %v259
  %2241 = vmatpush.msra.mxu0 %v256
  %2242 = vmatpush.msra.mxu0 %v253
  %2243 = vmatpush.msra.mxu0 %v250
  %2244 = vmatpush.msra.mxu0 %v247
  %2245 = vmatpush.msra.mxu0 %v244
  %2246 = vmatmul.f32.gmra.mxu0 %v2018
  %v2247 = vpop.f32.mrf.mxu0
  %v2248 = vadd.f32 0.0, %v2247
  %2249 = vdwg.mxu0
  %2250 = vmatpush.msra.mxu0 %v290
  %2251 = vmatpush.msra.mxu0 %v287
  %2252 = vmatpush.msra.mxu0 %v284
  %2253 = vmatpush.msra.mxu0 %v281
  %2254 = vmatpush.msra.mxu0 %v278
  %2255 = vmatpush.msra.mxu0 %v275
  %2256 = vmatpush.msra.mxu0 %v272
  %2257 = vmatpush.msra.mxu0 %v269
  %2258 = vmatpush.msra.mxu0 %v266
  %2259 = vmatpush.msra.mxu0 %v263
  %2260 = vmatpush.msra.mxu0 %v260
  %2261 = vmatpush.msra.mxu0 %v257
  %2262 = vmatpush.msra.mxu0 %v254
  %2263 = vmatpush.msra.mxu0 %v251
  %2264 = vmatpush.msra.mxu0 %v248
  %2265 = vmatpush.msra.mxu0 %v245
  %2266 = vmatmul.f32.gmra.mxu0 %v2018
  %v2267 = vpop.f32.mrf.mxu0
  %v2268 = vadd.f32 0.0, %v2267
  %2269 = vdwg.mxu0
  %v2270 = vadd.f32 %v2207, %v2228
  %v2271 = vxor.u32 %v2270, 2147483648
  %v2272 = vmul.f32 %v2271, 1.442695
  %v2273 = vpow.pop %v2272
  %v2274 = vadd.f32 %v2273, 1.0
  %v2275 = vrcp.pop %v2274
  %v2276 = vmul.f32 %v2274, %v2275
  %v2277 = vsub.f32 1.0, %v2276
  %v2278 = vmul.f32 %v2275, %v2277
  %v2279 = vadd.f32 %v2275, %v2278
  %vm2280 = vweird.f32 %v2274
  %vm2281 = vweird.f32 %v2275
  %vm2282 = vmor %vm2280, %vm2281
  %v2283 = vsel %vm2282, %v2275, %v2279
  %v2284 = vand.u32 2147483647, %v2274
  %vm2285 = vcmp.eq.f32.partialorder %v2284, 8.507059e+37
  %v2286 = vand.u32 %v2274, 2147483648
  %v2287 = vor.u32 1.1754944e-38, %v2286
  %v2288 = vsel %vm2285, %v2287, %v2283
  %v2289 = vmul.f32 1.0, %v2288
  %v2290 = vadd.f32 %v2208, %v2248
  %v2291 = vxor.u32 %v2290, 2147483648
  %v2292 = vmul.f32 %v2291, 1.442695
  %v2293 = vpow.pop %v2292
  %v2294 = vadd.f32 %v2293, 1.0
  %v2295 = vrcp.pop %v2294
  %v2296 = vmul.f32 %v2294, %v2295
  %v2297 = vsub.f32 1.0, %v2296
  %v2298 = vmul.f32 %v2295, %v2297
  %v2299 = vadd.f32 %v2295, %v2298
  %vm2300 = vweird.f32 %v2294
  %vm2301 = vweird.f32 %v2295
  %vm2302 = vmor %vm2300, %vm2301
  %v2303 = vsel %vm2302, %v2295, %v2299
  %v2304 = vand.u32 2147483647, %v2294
  %vm2305 = vcmp.eq.f32.partialorder %v2304, 8.507059e+37
  %v2306 = vand.u32 %v2294, 2147483648
  %v2307 = vor.u32 1.1754944e-38, %v2306
  %v2308 = vsel %vm2305, %v2307, %v2303
  %v2309 = vmul.f32 1.0, %v2308
  %v2310 = vadd.f32 %v2268, %v392
  %v2311 = vmul.f32 %v2289, %v2310
  %v2312 = vadd.f32 %v2209, %v2311
  %v2313 = vtanh.pop %v2312
  %v2314 = vsub.f32 1.0, %v2309
  %v2315 = vmul.f32 %v2314, %v2313
  %v2316 = vmul.f32 %v2309, %v2018
  %v2317 = vadd.f32 %v2315, %v2316
  %2318 = vmatpush.msra.mxu0 %v447
  %2319 = vmatpush.msra.mxu0 %v444
  %2320 = vmatpush.msra.mxu0 %v441
  %2321 = vmatpush.msra.mxu0 %v438
  %2322 = vmatpush.msra.mxu0 %v435
  %2323 = vmatpush.msra.mxu0 %v432
  %2324 = vmatpush.msra.mxu0 %v429
  %2325 = vmatpush.msra.mxu0 %v426
  %2326 = vmatpush.msra.mxu0 %v423
  %2327 = vmatpush.msra.mxu0 %v420
  %2328 = vmatpush.msra.mxu0 %v417
  %2329 = vmatpush.msra.mxu0 %v414
  %2330 = vmatpush.msra.mxu0 %v411
  %2331 = vmatpush.msra.mxu0 %v408
  %2332 = vmatpush.msra.mxu0 %v405
  %2333 = vmatpush.msra.mxu0 %v402
  %2334 = vmatmul.f32.gmra.mxu0 %v2317
  %v2335 = vpop.f32.mrf.mxu0
  %v2336 = vadd.f32 %v499, %v2335
  %2337 = vdwg.mxu0
  %2338 = vmatpush.msra.mxu0 %v495
  %2339 = vmatpush.msra.mxu0 %v492
  %2340 = vmatpush.msra.mxu0 %v489
  %2341 = vmatpush.msra.mxu0 %v486
  %2342 = vmatpush.msra.mxu0 %v483
  %2343 = vmatpush.msra.mxu0 %v480
  %2344 = vmatpush.msra.mxu0 %v477
  %2345 = vmatpush.msra.mxu0 %v474
  %2346 = vmatpush.msra.mxu0 %v471
  %2347 = vmatpush.msra.mxu0 %v468
  %2348 = vmatpush.msra.mxu0 %v465
  %2349 = vmatpush.msra.mxu0 %v462
  %2350 = vmatpush.msra.mxu0 %v459
  %2351 = vmatpush.msra.mxu0 %v456
  %2352 = vmatpush.msra.mxu0 %v453
  %2353 = vmatpush.msra.mxu0 %v450
  %2354 = vmatmul.f32.gmra.mxu0 %v2203
  %v2355 = vpop.f32.mrf.mxu0
  %v2356 = vadd.f32 %v2336, %v2355
  %2357 = vdwg.mxu0
  %2358 = vmatpush.msra.mxu0 %v448
  %2359 = vmatpush.msra.mxu0 %v445
  %2360 = vmatpush.msra.mxu0 %v442
  %2361 = vmatpush.msra.mxu0 %v439
  %2362 = vmatpush.msra.mxu0 %v436
  %2363 = vmatpush.msra.mxu0 %v433
  %2364 = vmatpush.msra.mxu0 %v430
  %2365 = vmatpush.msra.mxu0 %v427
  %2366 = vmatpush.msra.mxu0 %v424
  %2367 = vmatpush.msra.mxu0 %v421
  %2368 = vmatpush.msra.mxu0 %v418
  %2369 = vmatpush.msra.mxu0 %v415
  %2370 = vmatpush.msra.mxu0 %v412
  %2371 = vmatpush.msra.mxu0 %v409
  %2372 = vmatpush.msra.mxu0 %v406
  %2373 = vmatpush.msra.mxu0 %v403
  %2374 = vmatmul.f32.gmra.mxu0 %v2317
  %v2375 = vpop.f32.mrf.mxu0
  %v2376 = vadd.f32 %v500, %v2375
  %2377 = vdwg.mxu0
  %2378 = vmatpush.msra.mxu0 %v496
  %2379 = vmatpush.msra.mxu0 %v493
  %2380 = vmatpush.msra.mxu0 %v490
  %2381 = vmatpush.msra.mxu0 %v487
  %2382 = vmatpush.msra.mxu0 %v484
  %2383 = vmatpush.msra.mxu0 %v481
  %2384 = vmatpush.msra.mxu0 %v478
  %2385 = vmatpush.msra.mxu0 %v475
  %2386 = vmatpush.msra.mxu0 %v472
  %2387 = vmatpush.msra.mxu0 %v469
  %2388 = vmatpush.msra.mxu0 %v466
  %2389 = vmatpush.msra.mxu0 %v463
  %2390 = vmatpush.msra.mxu0 %v460
  %2391 = vmatpush.msra.mxu0 %v457
  %2392 = vmatpush.msra.mxu0 %v454
  %2393 = vmatpush.msra.mxu0 %v451
  %2394 = vmatmul.f32.gmra.mxu0 %v2203
  %v2395 = vpop.f32.mrf.mxu0
  %v2396 = vadd.f32 %v2376, %v2395
  %2397 = vdwg.mxu0
  %2398 = vmatpush.msra.mxu0 %v449
  %2399 = vmatpush.msra.mxu0 %v446
  %2400 = vmatpush.msra.mxu0 %v443
  %2401 = vmatpush.msra.mxu0 %v440
  %2402 = vmatpush.msra.mxu0 %v437
  %2403 = vmatpush.msra.mxu0 %v434
  %2404 = vmatpush.msra.mxu0 %v431
  %2405 = vmatpush.msra.mxu0 %v428
  %2406 = vmatpush.msra.mxu0 %v425
  %2407 = vmatpush.msra.mxu0 %v422
  %2408 = vmatpush.msra.mxu0 %v419
  %2409 = vmatpush.msra.mxu0 %v416
  %2410 = vmatpush.msra.mxu0 %v413
  %2411 = vmatpush.msra.mxu0 %v410
  %2412 = vmatpush.msra.mxu0 %v407
  %2413 = vmatpush.msra.mxu0 %v404
  %2414 = vmatmul.f32.gmra.mxu0 %v2317
  %v2415 = vpop.f32.mrf.mxu0
  %v2416 = vadd.f32 %v501, %v2415
  %2417 = vdwg.mxu0
  %2418 = vmatpush.msra.mxu0 %v497
  %2419 = vmatpush.msra.mxu0 %v494
  %2420 = vmatpush.msra.mxu0 %v491
  %2421 = vmatpush.msra.mxu0 %v488
  %2422 = vmatpush.msra.mxu0 %v485
  %2423 = vmatpush.msra.mxu0 %v482
  %2424 = vmatpush.msra.mxu0 %v479
  %2425 = vmatpush.msra.mxu0 %v476
  %2426 = vmatpush.msra.mxu0 %v473
  %2427 = vmatpush.msra.mxu0 %v470
  %2428 = vmatpush.msra.mxu0 %v467
  %2429 = vmatpush.msra.mxu0 %v464
  %2430 = vmatpush.msra.mxu0 %v461
  %2431 = vmatpush.msra.mxu0 %v458
  %2432 = vmatpush.msra.mxu0 %v455
  %2433 = vmatpush.msra.mxu0 %v452
  %2434 = vmatmul.f32.gmra.mxu0 %v2203
  %v2435 = vpop.f32.mrf.mxu0
  %v2436 = vadd.f32 %v2416, %v2435
  %2437 = vdwg.mxu0
  %v2438 = vxor.u32 %v2356, 2147483648
  %v2439 = vmul.f32 %v2438, 1.442695
  %v2440 = vpow.pop %v2439
  %v2441 = vadd.f32 %v2440, 1.0
  %v2442 = vrcp.pop %v2441
  %v2443 = vmul.f32 %v2441, %v2442
  %v2444 = vsub.f32 1.0, %v2443
  %v2445 = vmul.f32 %v2442, %v2444
  %v2446 = vadd.f32 %v2442, %v2445
  %vm2447 = vweird.f32 %v2441
  %vm2448 = vweird.f32 %v2442
  %vm2449 = vmor %vm2447, %vm2448
  %v2450 = vsel %vm2449, %v2442, %v2446
  %v2451 = vand.u32 2147483647, %v2441
  %vm2452 = vcmp.eq.f32.partialorder %v2451, 8.507059e+37
  %v2453 = vand.u32 %v2441, 2147483648
  %v2454 = vor.u32 1.1754944e-38, %v2453
  %v2455 = vsel %vm2452, %v2454, %v2450
  %v2456 = vmul.f32 1.0, %v2455
  %v2457 = vxor.u32 %v2396, 2147483648
  %v2458 = vmul.f32 %v2457, 1.442695
  %v2459 = vpow.pop %v2458
  %v2460 = vadd.f32 %v2459, 1.0
  %v2461 = vrcp.pop %v2460
  %v2462 = vmul.f32 %v2460, %v2461
  %v2463 = vsub.f32 1.0, %v2462
  %v2464 = vmul.f32 %v2461, %v2463
  %v2465 = vadd.f32 %v2461, %v2464
  %vm2466 = vweird.f32 %v2460
  %vm2467 = vweird.f32 %v2461
  %vm2468 = vmor %vm2466, %vm2467
  %v2469 = vsel %vm2468, %v2461, %v2465
  %v2470 = vand.u32 2147483647, %v2460
  %vm2471 = vcmp.eq.f32.partialorder %v2470, 8.507059e+37
  %v2472 = vand.u32 %v2460, 2147483648
  %v2473 = vor.u32 1.1754944e-38, %v2472
  %v2474 = vsel %vm2471, %v2473, %v2469
  %v2475 = vmul.f32 1.0, %v2474
  %2476 = vmatpush.msra.mxu0 %v640
  %2477 = vmatpush.msra.mxu0 %v639
  %2478 = vmatpush.msra.mxu0 %v638
  %2479 = vmatpush.msra.mxu0 %v637
  %2480 = vmatpush.msra.mxu0 %v636
  %2481 = vmatpush.msra.mxu0 %v635
  %2482 = vmatpush.msra.mxu0 %v634
  %2483 = vmatpush.msra.mxu0 %v633
  %2484 = vmatpush.msra.mxu0 %v632
  %2485 = vmatpush.msra.mxu0 %v631
  %2486 = vmatpush.msra.mxu0 %v630
  %2487 = vmatpush.msra.mxu0 %v629
  %2488 = vmatpush.msra.mxu0 %v628
  %2489 = vmatpush.msra.mxu0 %v627
  %2490 = vmatpush.msra.mxu0 %v626
  %2491 = vmatpush.msra.mxu0 %v625
  %2492 = vmatmul.f32.gmra.mxu0 %v2203
  %v2493 = vpop.f32.mrf.mxu0
  %v2494 = vadd.f32 %v680, %v2493
  %2495 = vdwg.mxu0
  %v2496 = vmul.f32 %v2456, %v2494
  %v2497 = vadd.f32 %v2436, %v2496
  %v2498 = vtanh.pop %v2497
  %v2499 = vsub.f32 1.0, %v2475
  %v2500 = vmul.f32 %v2499, %v2498
  %v2501 = vmul.f32 %v2475, %v2203
  %v2502 = vadd.f32 %v2500, %v2501
  %s2503 = smul.u32 7, 3
  %s2504 = smul.addr %s2503, 8
  %s2505 = scalar_lea.vmem [#allocation2], %s2504
  %v2506 = vld [vmem:[%s2505] sm:$0xff]
  %v2507 = vld [vmem:[%s2505 + $0x8] sm:$0xff]
  %v2508 = vld [vmem:[%s2505 + $0x10] sm:$0xff]
  %2509 = vmatpush.msra.mxu0 %v288
  %2510 = vmatpush.msra.mxu0 %v285
  %2511 = vmatpush.msra.mxu0 %v282
  %2512 = vmatpush.msra.mxu0 %v279
  %2513 = vmatpush.msra.mxu0 %v276
  %2514 = vmatpush.msra.mxu0 %v273
  %2515 = vmatpush.msra.mxu0 %v270
  %2516 = vmatpush.msra.mxu0 %v267
  %2517 = vmatpush.msra.mxu0 %v264
  %2518 = vmatpush.msra.mxu0 %v261
  %2519 = vmatpush.msra.mxu0 %v258
  %2520 = vmatpush.msra.mxu0 %v255
  %2521 = vmatpush.msra.mxu0 %v252
  %2522 = vmatpush.msra.mxu0 %v249
  %2523 = vmatpush.msra.mxu0 %v246
  %2524 = vmatpush.msra.mxu0 %v243
  %2525 = vmatmul.f32.gmra.mxu0 %v2317
  %v2526 = vpop.f32.mrf.mxu0
  %v2527 = vadd.f32 0.0, %v2526
  %2528 = vdwg.mxu0
  %2529 = vmatpush.msra.mxu0 %v289
  %2530 = vmatpush.msra.mxu0 %v286
  %2531 = vmatpush.msra.mxu0 %v283
  %2532 = vmatpush.msra.mxu0 %v280
  %2533 = vmatpush.msra.mxu0 %v277
  %2534 = vmatpush.msra.mxu0 %v274
  %2535 = vmatpush.msra.mxu0 %v271
  %2536 = vmatpush.msra.mxu0 %v268
  %2537 = vmatpush.msra.mxu0 %v265
  %2538 = vmatpush.msra.mxu0 %v262
  %2539 = vmatpush.msra.mxu0 %v259
  %2540 = vmatpush.msra.mxu0 %v256
  %2541 = vmatpush.msra.mxu0 %v253
  %2542 = vmatpush.msra.mxu0 %v250
  %2543 = vmatpush.msra.mxu0 %v247
  %2544 = vmatpush.msra.mxu0 %v244
  %2545 = vmatmul.f32.gmra.mxu0 %v2317
  %v2546 = vpop.f32.mrf.mxu0
  %v2547 = vadd.f32 0.0, %v2546
  %2548 = vdwg.mxu0
  %2549 = vmatpush.msra.mxu0 %v290
  %2550 = vmatpush.msra.mxu0 %v287
  %2551 = vmatpush.msra.mxu0 %v284
  %2552 = vmatpush.msra.mxu0 %v281
  %2553 = vmatpush.msra.mxu0 %v278
  %2554 = vmatpush.msra.mxu0 %v275
  %2555 = vmatpush.msra.mxu0 %v272
  %2556 = vmatpush.msra.mxu0 %v269
  %2557 = vmatpush.msra.mxu0 %v266
  %2558 = vmatpush.msra.mxu0 %v263
  %2559 = vmatpush.msra.mxu0 %v260
  %2560 = vmatpush.msra.mxu0 %v257
  %2561 = vmatpush.msra.mxu0 %v254
  %2562 = vmatpush.msra.mxu0 %v251
  %2563 = vmatpush.msra.mxu0 %v248
  %2564 = vmatpush.msra.mxu0 %v245
  %2565 = vmatmul.f32.gmra.mxu0 %v2317
  %v2566 = vpop.f32.mrf.mxu0
  %v2567 = vadd.f32 0.0, %v2566
  %2568 = vdwg.mxu0
  %v2569 = vadd.f32 %v2506, %v2527
  %v2570 = vxor.u32 %v2569, 2147483648
  %v2571 = vmul.f32 %v2570, 1.442695
  %v2572 = vpow.pop %v2571
  %v2573 = vadd.f32 %v2572, 1.0
  %v2574 = vrcp.pop %v2573
  %v2575 = vmul.f32 %v2573, %v2574
  %v2576 = vsub.f32 1.0, %v2575
  %v2577 = vmul.f32 %v2574, %v2576
  %v2578 = vadd.f32 %v2574, %v2577
  %vm2579 = vweird.f32 %v2573
  %vm2580 = vweird.f32 %v2574
  %vm2581 = vmor %vm2579, %vm2580
  %v2582 = vsel %vm2581, %v2574, %v2578
  %v2583 = vand.u32 2147483647, %v2573
  %vm2584 = vcmp.eq.f32.partialorder %v2583, 8.507059e+37
  %v2585 = vand.u32 %v2573, 2147483648
  %v2586 = vor.u32 1.1754944e-38, %v2585
  %v2587 = vsel %vm2584, %v2586, %v2582
  %v2588 = vmul.f32 1.0, %v2587
  %v2589 = vadd.f32 %v2507, %v2547
  %v2590 = vxor.u32 %v2589, 2147483648
  %v2591 = vmul.f32 %v2590, 1.442695
  %v2592 = vpow.pop %v2591
  %v2593 = vadd.f32 %v2592, 1.0
  %v2594 = vrcp.pop %v2593
  %v2595 = vmul.f32 %v2593, %v2594
  %v2596 = vsub.f32 1.0, %v2595
  %v2597 = vmul.f32 %v2594, %v2596
  %v2598 = vadd.f32 %v2594, %v2597
  %vm2599 = vweird.f32 %v2593
  %vm2600 = vweird.f32 %v2594
  %vm2601 = vmor %vm2599, %vm2600
  %v2602 = vsel %vm2601, %v2594, %v2598
  %v2603 = vand.u32 2147483647, %v2593
  %vm2604 = vcmp.eq.f32.partialorder %v2603, 8.507059e+37
  %v2605 = vand.u32 %v2593, 2147483648
  %v2606 = vor.u32 1.1754944e-38, %v2605
  %v2607 = vsel %vm2604, %v2606, %v2602
  %v2608 = vmul.f32 1.0, %v2607
  %v2609 = vadd.f32 %v2567, %v392
  %v2610 = vmul.f32 %v2588, %v2609
  %v2611 = vadd.f32 %v2508, %v2610
  %v2612 = vtanh.pop %v2611
  %v2613 = vsub.f32 1.0, %v2608
  %v2614 = vmul.f32 %v2613, %v2612
  %v2615 = vmul.f32 %v2608, %v2317
  %v2616 = vadd.f32 %v2614, %v2615
  %2617 = vmatpush.msra.mxu0 %v447
  %2618 = vmatpush.msra.mxu0 %v444
  %2619 = vmatpush.msra.mxu0 %v441
  %2620 = vmatpush.msra.mxu0 %v438
  %2621 = vmatpush.msra.mxu0 %v435
  %2622 = vmatpush.msra.mxu0 %v432
  %2623 = vmatpush.msra.mxu0 %v429
  %2624 = vmatpush.msra.mxu0 %v426
  %2625 = vmatpush.msra.mxu0 %v423
  %2626 = vmatpush.msra.mxu0 %v420
  %2627 = vmatpush.msra.mxu0 %v417
  %2628 = vmatpush.msra.mxu0 %v414
  %2629 = vmatpush.msra.mxu0 %v411
  %2630 = vmatpush.msra.mxu0 %v408
  %2631 = vmatpush.msra.mxu0 %v405
  %2632 = vmatpush.msra.mxu0 %v402
  %2633 = vmatmul.f32.gmra.mxu0 %v2616
  %v2634 = vpop.f32.mrf.mxu0
  %v2635 = vadd.f32 %v499, %v2634
  %2636 = vdwg.mxu0
  %2637 = vmatpush.msra.mxu0 %v495
  %2638 = vmatpush.msra.mxu0 %v492
  %2639 = vmatpush.msra.mxu0 %v489
  %2640 = vmatpush.msra.mxu0 %v486
  %2641 = vmatpush.msra.mxu0 %v483
  %2642 = vmatpush.msra.mxu0 %v480
  %2643 = vmatpush.msra.mxu0 %v477
  %2644 = vmatpush.msra.mxu0 %v474
  %2645 = vmatpush.msra.mxu0 %v471
  %2646 = vmatpush.msra.mxu0 %v468
  %2647 = vmatpush.msra.mxu0 %v465
  %2648 = vmatpush.msra.mxu0 %v462
  %2649 = vmatpush.msra.mxu0 %v459
  %2650 = vmatpush.msra.mxu0 %v456
  %2651 = vmatpush.msra.mxu0 %v453
  %2652 = vmatpush.msra.mxu0 %v450
  %2653 = vmatmul.f32.gmra.mxu0 %v2502
  %v2654 = vpop.f32.mrf.mxu0
  %v2655 = vadd.f32 %v2635, %v2654
  %2656 = vdwg.mxu0
  %2657 = vmatpush.msra.mxu0 %v448
  %2658 = vmatpush.msra.mxu0 %v445
  %2659 = vmatpush.msra.mxu0 %v442
  %2660 = vmatpush.msra.mxu0 %v439
  %2661 = vmatpush.msra.mxu0 %v436
  %2662 = vmatpush.msra.mxu0 %v433
  %2663 = vmatpush.msra.mxu0 %v430
  %2664 = vmatpush.msra.mxu0 %v427
  %2665 = vmatpush.msra.mxu0 %v424
  %2666 = vmatpush.msra.mxu0 %v421
  %2667 = vmatpush.msra.mxu0 %v418
  %2668 = vmatpush.msra.mxu0 %v415
  %2669 = vmatpush.msra.mxu0 %v412
  %2670 = vmatpush.msra.mxu0 %v409
  %2671 = vmatpush.msra.mxu0 %v406
  %2672 = vmatpush.msra.mxu0 %v403
  %2673 = vmatmul.f32.gmra.mxu0 %v2616
  %v2674 = vpop.f32.mrf.mxu0
  %v2675 = vadd.f32 %v500, %v2674
  %2676 = vdwg.mxu0
  %2677 = vmatpush.msra.mxu0 %v496
  %2678 = vmatpush.msra.mxu0 %v493
  %2679 = vmatpush.msra.mxu0 %v490
  %2680 = vmatpush.msra.mxu0 %v487
  %2681 = vmatpush.msra.mxu0 %v484
  %2682 = vmatpush.msra.mxu0 %v481
  %2683 = vmatpush.msra.mxu0 %v478
  %2684 = vmatpush.msra.mxu0 %v475
  %2685 = vmatpush.msra.mxu0 %v472
  %2686 = vmatpush.msra.mxu0 %v469
  %2687 = vmatpush.msra.mxu0 %v466
  %2688 = vmatpush.msra.mxu0 %v463
  %2689 = vmatpush.msra.mxu0 %v460
  %2690 = vmatpush.msra.mxu0 %v457
  %2691 = vmatpush.msra.mxu0 %v454
  %2692 = vmatpush.msra.mxu0 %v451
  %2693 = vmatmul.f32.gmra.mxu0 %v2502
  %v2694 = vpop.f32.mrf.mxu0
  %v2695 = vadd.f32 %v2675, %v2694
  %2696 = vdwg.mxu0
  %2697 = vmatpush.msra.mxu0 %v449
  %2698 = vmatpush.msra.mxu0 %v446
  %2699 = vmatpush.msra.mxu0 %v443
  %2700 = vmatpush.msra.mxu0 %v440
  %2701 = vmatpush.msra.mxu0 %v437
  %2702 = vmatpush.msra.mxu0 %v434
  %2703 = vmatpush.msra.mxu0 %v431
  %2704 = vmatpush.msra.mxu0 %v428
  %2705 = vmatpush.msra.mxu0 %v425
  %2706 = vmatpush.msra.mxu0 %v422
  %2707 = vmatpush.msra.mxu0 %v419
  %2708 = vmatpush.msra.mxu0 %v416
  %2709 = vmatpush.msra.mxu0 %v413
  %2710 = vmatpush.msra.mxu0 %v410
  %2711 = vmatpush.msra.mxu0 %v407
  %2712 = vmatpush.msra.mxu0 %v404
  %2713 = vmatmul.f32.gmra.mxu0 %v2616
  %v2714 = vpop.f32.mrf.mxu0
  %v2715 = vadd.f32 %v501, %v2714
  %2716 = vdwg.mxu0
  %2717 = vmatpush.msra.mxu0 %v497
  %2718 = vmatpush.msra.mxu0 %v494
  %2719 = vmatpush.msra.mxu0 %v491
  %2720 = vmatpush.msra.mxu0 %v488
  %2721 = vmatpush.msra.mxu0 %v485
  %2722 = vmatpush.msra.mxu0 %v482
  %2723 = vmatpush.msra.mxu0 %v479
  %2724 = vmatpush.msra.mxu0 %v476
  %2725 = vmatpush.msra.mxu0 %v473
  %2726 = vmatpush.msra.mxu0 %v470
  %2727 = vmatpush.msra.mxu0 %v467
  %2728 = vmatpush.msra.mxu0 %v464
  %2729 = vmatpush.msra.mxu0 %v461
  %2730 = vmatpush.msra.mxu0 %v458
  %2731 = vmatpush.msra.mxu0 %v455
  %2732 = vmatpush.msra.mxu0 %v452
  %2733 = vmatmul.f32.gmra.mxu0 %v2502
  %v2734 = vpop.f32.mrf.mxu0
  %v2735 = vadd.f32 %v2715, %v2734
  %2736 = vdwg.mxu0
  %v2737 = vxor.u32 %v2655, 2147483648
  %v2738 = vmul.f32 %v2737, 1.442695
  %v2739 = vpow.pop %v2738
  %v2740 = vadd.f32 %v2739, 1.0
  %v2741 = vrcp.pop %v2740
  %v2742 = vmul.f32 %v2740, %v2741
  %v2743 = vsub.f32 1.0, %v2742
  %v2744 = vmul.f32 %v2741, %v2743
  %v2745 = vadd.f32 %v2741, %v2744
  %vm2746 = vweird.f32 %v2740
  %vm2747 = vweird.f32 %v2741
  %vm2748 = vmor %vm2746, %vm2747
  %v2749 = vsel %vm2748, %v2741, %v2745
  %v2750 = vand.u32 2147483647, %v2740
  %vm2751 = vcmp.eq.f32.partialorder %v2750, 8.507059e+37
  %v2752 = vand.u32 %v2740, 2147483648
  %v2753 = vor.u32 1.1754944e-38, %v2752
  %v2754 = vsel %vm2751, %v2753, %v2749
  %v2755 = vmul.f32 1.0, %v2754
  %v2756 = vxor.u32 %v2695, 2147483648
  %v2757 = vmul.f32 %v2756, 1.442695
  %v2758 = vpow.pop %v2757
  %v2759 = vadd.f32 %v2758, 1.0
  %v2760 = vrcp.pop %v2759
  %v2761 = vmul.f32 %v2759, %v2760
  %v2762 = vsub.f32 1.0, %v2761
  %v2763 = vmul.f32 %v2760, %v2762
  %v2764 = vadd.f32 %v2760, %v2763
  %vm2765 = vweird.f32 %v2759
  %vm2766 = vweird.f32 %v2760
  %vm2767 = vmor %vm2765, %vm2766
  %v2768 = vsel %vm2767, %v2760, %v2764
  %v2769 = vand.u32 2147483647, %v2759
  %vm2770 = vcmp.eq.f32.partialorder %v2769, 8.507059e+37
  %v2771 = vand.u32 %v2759, 2147483648
  %v2772 = vor.u32 1.1754944e-38, %v2771
  %v2773 = vsel %vm2770, %v2772, %v2768
  %v2774 = vmul.f32 1.0, %v2773
  %2775 = vmatpush.msra.mxu0 %v640
  %2776 = vmatpush.msra.mxu0 %v639
  %2777 = vmatpush.msra.mxu0 %v638
  %2778 = vmatpush.msra.mxu0 %v637
  %2779 = vmatpush.msra.mxu0 %v636
  %2780 = vmatpush.msra.mxu0 %v635
  %2781 = vmatpush.msra.mxu0 %v634
  %2782 = vmatpush.msra.mxu0 %v633
  %2783 = vmatpush.msra.mxu0 %v632
  %2784 = vmatpush.msra.mxu0 %v631
  %2785 = vmatpush.msra.mxu0 %v630
  %2786 = vmatpush.msra.mxu0 %v629
  %2787 = vmatpush.msra.mxu0 %v628
  %2788 = vmatpush.msra.mxu0 %v627
  %2789 = vmatpush.msra.mxu0 %v626
  %2790 = vmatpush.msra.mxu0 %v625
  %2791 = vmatmul.f32.gmra.mxu0 %v2502
  %v2792 = vpop.f32.mrf.mxu0
  %v2793 = vadd.f32 %v680, %v2792
  %2794 = vdwg.mxu0
  %v2795 = vmul.f32 %v2755, %v2793
  %v2796 = vadd.f32 %v2735, %v2795
  %v2797 = vtanh.pop %v2796
  %v2798 = vsub.f32 1.0, %v2774
  %v2799 = vmul.f32 %v2798, %v2797
  %v2800 = vmul.f32 %v2774, %v2502
  %v2801 = vadd.f32 %v2799, %v2800
  %v2802 = vld [vmem:[%s9] sm:$0x1]
  %v2804 = vperm.slane %v2802, 0
  %v2806 = vmul.f32 %v2801, %v2804
  %2807 = vadd.xlane.f32.xlu0 %v2806
  %v2808 = vpop.xlane.xlu0 %2807
  %v2809 = vld [vmem:[#allocation3] sm:$0x1]
  %v2811 = vperm.slane %v2809, 0
  %v2813 = vadd.f32 %v2808, %v2811
  %vm2814 = vcmask 7168
  %2815 = vst.msk [vmem:[%s11] sm:$0xff] %vm2814, %v2813
  // Predicated region
  $region46: #{gru_regression_forward.1} parent=0 // pred_check
    _
  $region47: #{gru_regression_forward.1} parent=0 // pred_check_branch
    %2817 = sbr.rel (0) target = $region49
  $region48: #{gru_regression_forward.1} parent=0 // pred_region
    _
  $region49: #{gru_regression_forward.1} parent=0 // pred_fallthru
    _
  // Predicated region
  $region50: #{gru_regression_forward.1} parent=0 // pred_check
    _
  $region51: #{gru_regression_forward.1} parent=0 // pred_check_branch
    %2819 = sbr.rel (0) target = $region53
  $region52: #{gru_regression_forward.1} parent=0 // pred_region
    _
  $region53: #{gru_regression_forward.1} parent=0 // pred_fallthru
    _

</llo_original>
